<compile_context>
chip_gen: v6e
topology: v6e:2x2x1
jax: 0.10.0
libtpu: 0.0.40
codegen_flags: <defaults>
</compile_context>

<pallas_src>
import jax
import jax.numpy as jnp
from jax.experimental import pallas as pl
from jax.experimental.pallas import tpu as pltpu


def _lstm_ae_kernel(x_ref, w_ih_e_ref, w_hh_e_ref, b_e_ref,
                    w_ih_d_ref, w_hh_d_ref, b_d_ref,
                    w_out_ref, b_out_ref, out_ref):
    """Whole forward pass for one (padded) batch, everything resident in VMEM."""
    B, T, D = x_ref.shape
    H = w_hh_e_ref.shape[0]

    # Hoist weight loads out of the recurrent loops.
    w_hh_e = w_hh_e_ref[...]   # (H, 4H)
    w_hh_d = w_hh_d_ref[...]   # (H, 4H)

    def gates_to_hc(gates, c):
        # PyTorch gate order: i, f, g, o
        i = jax.nn.sigmoid(gates[:, 0 * H:1 * H])
        f = jax.nn.sigmoid(gates[:, 1 * H:2 * H])
        g = jnp.tanh(gates[:, 2 * H:3 * H])
        o = jax.nn.sigmoid(gates[:, 3 * H:4 * H])
        c_new = f * c + i * g
        h_new = o * jnp.tanh(c_new)
        return h_new, c_new

    # ---- Encoder input projections: one batched MXU matmul over all (B*T) rows ----
    x = x_ref[...].astype(jnp.float32)                                   # (B, T, D)
    xg = (jnp.dot(x.reshape(B * T, D), w_ih_e_ref[...],
                  preferred_element_type=jnp.float32)
          + b_e_ref[...])                                                # (B*T, 4H), bias folded in
    xg = xg.reshape(B, T, 4 * H)

    h = jnp.zeros((B, H), jnp.float32)
    c = jnp.zeros((B, H), jnp.float32)
    pooled = jnp.full((B, H), -jnp.inf, jnp.float32)

    # ---- Encoder recurrence + running max-pool (pooling_type='max'); fully unrolled ----
    for t in range(T):
        gates = xg[:, t, :] + jnp.dot(h, w_hh_e, preferred_element_type=jnp.float32)
        h, c = gates_to_hc(gates, c)
        pooled = jnp.maximum(pooled, h)

    # ---- Decoder: loop-invariant input projection of the pooled vector, computed once ----
    dec_in = (jnp.dot(pooled, w_ih_d_ref[...], preferred_element_type=jnp.float32)
              + b_d_ref[...])                                            # (B, 4H)

    h = jnp.zeros((B, H), jnp.float32)
    c = jnp.zeros((B, H), jnp.float32)
    dec_hs = []
    for _ in range(T):
        gates = dec_in + jnp.dot(h, w_hh_d, preferred_element_type=jnp.float32)
        h, c = gates_to_hc(gates, c)
        dec_hs.append(h)

    # ---- Output projection: one (B*T, H) @ (H, D) matmul + single full-block store ----
    hs = jnp.stack(dec_hs, axis=1)                                       # (B, T, H)
    y = (jnp.dot(hs.reshape(B * T, H), w_out_ref[...],
                 preferred_element_type=jnp.float32)
         + b_out_ref[...])                                               # (B*T, D)
    out_ref[...] = y.reshape(B, T, D).astype(out_ref.dtype)


def lstm_autoencoder_forward(x, params):
    """x: (B, T, D) batch-first, like the PyTorch module (batch_first=True)."""
    B, T, D = x.shape
    # Pad batch to a multiple of 8 (f32 sublane) so vector/MXU rows are not mostly padding.
    Bp = max(8, ((B + 7) // 8) * 8)
    if Bp != B:
        x = jnp.pad(x, ((0, Bp - B), (0, 0), (0, 0)))

    vmem = pl.BlockSpec(memory_space=pltpu.MemorySpace.VMEM)
    out = pl.pallas_call(
        _lstm_ae_kernel,
        out_shape=jax.ShapeDtypeStruct((Bp, T, D), x.dtype),
        in_specs=[vmem] * 9,
        out_specs=vmem,
    )(
        x,
        params["w_ih_e"], params["w_hh_e"], params["b_e"],
        params["w_ih_d"], params["w_hh_d"], params["b_d"],
        params["w_out"], params["b_out"],
    )
    return out[:B]


def init_params(key, input_dim, hidden_dim):
    """Deterministic params matching torch.nn.LSTM / Linear shapes (stored pre-transposed)."""
    H, D = hidden_dim, input_dim
    k_lstm = 1.0 / jnp.sqrt(jnp.float32(H))
    k_lin = 1.0 / jnp.sqrt(jnp.float32(H))
    ks = jax.random.split(key, 10)
    u = lambda k, shape, lim: jax.random.uniform(k, shape, jnp.float32, -lim, lim)
    # encoder LSTM: W_ih (4H, D), W_hh (4H, H), b_ih (4H), b_hh (4H)
    w_ih_e = u(ks[0], (4 * H, D), k_lstm)
    w_hh_e = u(ks[1], (4 * H, H), k_lstm)
    b_e = u(ks[2], (4 * H,), k_lstm) + u(ks[3], (4 * H,), k_lstm)
    # decoder LSTM: W_ih (4H, H), W_hh (4H, H)
    w_ih_d = u(ks[4], (4 * H, H), k_lstm)
    w_hh_d = u(ks[5], (4 * H, H), k_lstm)
    b_d = u(ks[6], (4 * H,), k_lstm) + u(ks[7], (4 * H,), k_lstm)
    # output Linear: weight (D, H), bias (D)
    w_out = u(ks[8], (D, H), k_lin)
    b_out = u(ks[9], (D,), k_lin)
    return {
        "w_ih_e": w_ih_e.T, "w_hh_e": w_hh_e.T, "b_e": b_e[None, :],
        "w_ih_d": w_ih_d.T, "w_hh_d": w_hh_d.T, "b_d": b_d[None, :],
        "w_out": w_out.T, "b_out": b_out[None, :],
    }


def reference_forward(x, params):
    """Pure-JAX reference with identical semantics, for a correctness check."""
    B, T, D = x.shape
    H = params["w_hh_e"].shape[0]

    def step(x_t, h, c, w_ih, w_hh, b):
        g = x_t @ w_ih + h @ w_hh + b
        i, f, gg, o = (jax.nn.sigmoid(g[:, :H]), jax.nn.sigmoid(g[:, H:2 * H]),
                       jnp.tanh(g[:, 2 * H:3 * H]), jax.nn.sigmoid(g[:, 3 * H:]))
        c = f * c + i * gg
        return o * jnp.tanh(c), c

    h = c = jnp.zeros((B, H), jnp.float32)
    enc = []
    for t in range(T):
        h, c = step(x[:, t, :], h, c, params["w_ih_e"], params["w_hh_e"], params["b_e"])
        enc.append(h)
    pooled = jnp.max(jnp.stack(enc, axis=1), axis=1)
    h = c = jnp.zeros((B, H), jnp.float32)
    outs = []
    for t in range(T):
        h, c = step(pooled, h, c, params["w_ih_d"], params["w_hh_d"], params["b_d"])
        outs.append(h @ params["w_out"] + params["b_out"])
    return jnp.stack(outs, axis=1)


if __name__ == "__main__":
    B, T, D, H = 2, 8, 16, 64  # batch, seq_len, input_dim (sequences.shape[2]), hidden_dim

    key = jax.random.PRNGKey(0)
    k_x, k_p = jax.random.split(key)
    x = jax.random.normal(k_x, (B, T, D), jnp.float32)
    params = init_params(k_p, D, H)

    out = jax.block_until_ready(lstm_autoencoder_forward(x, params))
    assert out.shape == (B, T, D), out.shape

    ref = jax.block_until_ready(reference_forward(x, params))
    assert jnp.allclose(out, ref, rtol=1e-4, atol=1e-4), "kernel mismatch vs reference"

    print("KERNEL_OK")
</pallas_src>

<mosaic_0001>
module attributes {stable_mosaic.version = 11 : i64} {
  func.func @_lstm_ae_kernel(%arg0: memref<8x8x16xf32, #tpu.memory_space<vmem>>, %arg1: memref<16x256xf32, #tpu.memory_space<vmem>>, %arg2: memref<64x256xf32, #tpu.memory_space<vmem>>, %arg3: memref<1x256xf32, #tpu.memory_space<vmem>>, %arg4: memref<64x256xf32, #tpu.memory_space<vmem>>, %arg5: memref<64x256xf32, #tpu.memory_space<vmem>>, %arg6: memref<1x256xf32, #tpu.memory_space<vmem>>, %arg7: memref<64x16xf32, #tpu.memory_space<vmem>>, %arg8: memref<1x16xf32, #tpu.memory_space<vmem>>, %arg9: memref<8x8x16xf32, #tpu.memory_space<vmem>>) attributes {dimension_semantics = [], scalar_prefetch = 0 : i64, scratch_operands = 0 : i64, tpu.core_type = #tpu.core_type<tc>} {
    %c0 = arith.constant 0 : index
    %c0_0 = arith.constant 0 : index
    %0 = vector.load %arg2[%c0, %c0_0] : memref<64x256xf32, #tpu.memory_space<vmem>>, vector<64x256xf32>
    %c0_1 = arith.constant 0 : index
    %c0_2 = arith.constant 0 : index
    %1 = vector.load %arg5[%c0_1, %c0_2] : memref<64x256xf32, #tpu.memory_space<vmem>>, vector<64x256xf32>
    %c0_3 = arith.constant 0 : index
    %c0_4 = arith.constant 0 : index
    %c0_5 = arith.constant 0 : index
    %2 = vector.load %arg0[%c0_3, %c0_4, %c0_5] : memref<8x8x16xf32, #tpu.memory_space<vmem>>, vector<8x8x16xf32>
    %3 = vector.shape_cast %2 : vector<8x8x16xf32> to vector<64x16xf32>
    %c0_6 = arith.constant 0 : index
    %c0_7 = arith.constant 0 : index
    %4 = vector.load %arg1[%c0_6, %c0_7] : memref<16x256xf32, #tpu.memory_space<vmem>>, vector<16x256xf32>
    %cst = arith.constant dense<0.000000e+00> : vector<64x256xf32>
    %5 = tpu.matmul %3, %4, %cst {dimension_numbers = #tpu.dot_dimension_numbers<[1], [0], [0], [1], [0, 0, 1, 1], [], []>} : vector<64x16xf32>, vector<16x256xf32>, vector<64x256xf32> -> vector<64x256xf32>
    %c0_8 = arith.constant 0 : index
    %c0_9 = arith.constant 0 : index
    %6 = vector.load %arg3[%c0_8, %c0_9] : memref<1x256xf32, #tpu.memory_space<vmem>>, vector<1x256xf32>
    %7 = vector.broadcast %6 : vector<1x256xf32> to vector<64x256xf32>
    %8 = arith.addf %5, %7 : vector<64x256xf32>
    %9 = vector.shape_cast %8 : vector<64x256xf32> to vector<8x8x256xf32>
    %cst_10 = arith.constant 0.000000e+00 : f32
    %10 = vector.broadcast %cst_10 : f32 to vector<8x64xf32>
    %cst_11 = arith.constant 0.000000e+00 : f32
    %11 = vector.broadcast %cst_11 : f32 to vector<8x64xf32>
    %cst_12 = arith.constant 0xFF800000 : f32
    %12 = vector.broadcast %cst_12 : f32 to vector<8x64xf32>
    %13 = vector.extract_strided_slice %9 {offsets = [0, 0, 0], sizes = [8, 1, 256], strides = [1, 1, 1]} : vector<8x8x256xf32> to vector<8x1x256xf32>
    %14 = vector.shape_cast %13 : vector<8x1x256xf32> to vector<8x256xf32>
    %cst_13 = arith.constant dense<0.000000e+00> : vector<8x256xf32>
    %15 = tpu.matmul %10, %0, %cst_13 {dimension_numbers = #tpu.dot_dimension_numbers<[1], [0], [0], [1], [0, 0, 1, 1], [], []>} : vector<8x64xf32>, vector<64x256xf32>, vector<8x256xf32> -> vector<8x256xf32>
    %16 = arith.addf %14, %15 : vector<8x256xf32>
    %17 = vector.extract_strided_slice %16 {offsets = [0, 0], sizes = [8, 64], strides = [1, 1]} : vector<8x256xf32> to vector<8x64xf32>
    %18 = arith.negf %17 : vector<8x64xf32>
    %19 = math.exp %18 : vector<8x64xf32>
    %cst_14 = arith.constant 1.000000e+00 : f32
    %20 = vector.broadcast %cst_14 : f32 to vector<8x64xf32>
    %21 = arith.addf %20, %19 : vector<8x64xf32>
    %22 = arith.divf %20, %21 : vector<8x64xf32>
    %23 = vector.extract_strided_slice %16 {offsets = [0, 64], sizes = [8, 64], strides = [1, 1]} : vector<8x256xf32> to vector<8x64xf32>
    %24 = arith.negf %23 : vector<8x64xf32>
    %25 = math.exp %24 : vector<8x64xf32>
    %cst_15 = arith.constant 1.000000e+00 : f32
    %26 = vector.broadcast %cst_15 : f32 to vector<8x64xf32>
    %27 = arith.addf %26, %25 : vector<8x64xf32>
    %28 = arith.divf %26, %27 : vector<8x64xf32>
    %29 = vector.extract_strided_slice %16 {offsets = [0, 128], sizes = [8, 64], strides = [1, 1]} : vector<8x256xf32> to vector<8x64xf32>
    %30 = math.tanh %29 : vector<8x64xf32>
    %31 = vector.extract_strided_slice %16 {offsets = [0, 192], sizes = [8, 64], strides = [1, 1]} : vector<8x256xf32> to vector<8x64xf32>
    %32 = arith.negf %31 : vector<8x64xf32>
    %33 = math.exp %32 : vector<8x64xf32>
    %cst_16 = arith.constant 1.000000e+00 : f32
    %34 = vector.broadcast %cst_16 : f32 to vector<8x64xf32>
    %35 = arith.addf %34, %33 : vector<8x64xf32>
    %36 = arith.divf %34, %35 : vector<8x64xf32>
    %37 = arith.mulf %28, %11 : vector<8x64xf32>
    %38 = arith.mulf %22, %30 : vector<8x64xf32>
    %39 = arith.addf %37, %38 : vector<8x64xf32>
    %40 = math.tanh %39 : vector<8x64xf32>
    %41 = arith.mulf %36, %40 : vector<8x64xf32>
    %42 = arith.maximumf %12, %41 : vector<8x64xf32>
    %43 = vector.extract_strided_slice %9 {offsets = [0, 1, 0], sizes = [8, 1, 256], strides = [1, 1, 1]} : vector<8x8x256xf32> to vector<8x1x256xf32>
    %44 = vector.shape_cast %43 : vector<8x1x256xf32> to vector<8x256xf32>
    %cst_17 = arith.constant dense<0.000000e+00> : vector<8x256xf32>
    %45 = tpu.matmul %41, %0, %cst_17 {dimension_numbers = #tpu.dot_dimension_numbers<[1], [0], [0], [1], [0, 0, 1, 1], [], []>} : vector<8x64xf32>, vector<64x256xf32>, vector<8x256xf32> -> vector<8x256xf32>
    %46 = arith.addf %44, %45 : vector<8x256xf32>
    %47 = vector.extract_strided_slice %46 {offsets = [0, 0], sizes = [8, 64], strides = [1, 1]} : vector<8x256xf32> to vector<8x64xf32>
    %48 = arith.negf %47 : vector<8x64xf32>
    %49 = math.exp %48 : vector<8x64xf32>
    %cst_18 = arith.constant 1.000000e+00 : f32
    %50 = vector.broadcast %cst_18 : f32 to vector<8x64xf32>
    %51 = arith.addf %50, %49 : vector<8x64xf32>
    %52 = arith.divf %50, %51 : vector<8x64xf32>
    %53 = vector.extract_strided_slice %46 {offsets = [0, 64], sizes = [8, 64], strides = [1, 1]} : vector<8x256xf32> to vector<8x64xf32>
    %54 = arith.negf %53 : vector<8x64xf32>
    %55 = math.exp %54 : vector<8x64xf32>
    %cst_19 = arith.constant 1.000000e+00 : f32
    %56 = vector.broadcast %cst_19 : f32 to vector<8x64xf32>
    %57 = arith.addf %56, %55 : vector<8x64xf32>
    %58 = arith.divf %56, %57 : vector<8x64xf32>
    %59 = vector.extract_strided_slice %46 {offsets = [0, 128], sizes = [8, 64], strides = [1, 1]} : vector<8x256xf32> to vector<8x64xf32>
    %60 = math.tanh %59 : vector<8x64xf32>
    %61 = vector.extract_strided_slice %46 {offsets = [0, 192], sizes = [8, 64], strides = [1, 1]} : vector<8x256xf32> to vector<8x64xf32>
    %62 = arith.negf %61 : vector<8x64xf32>
    %63 = math.exp %62 : vector<8x64xf32>
    %cst_20 = arith.constant 1.000000e+00 : f32
    %64 = vector.broadcast %cst_20 : f32 to vector<8x64xf32>
    %65 = arith.addf %64, %63 : vector<8x64xf32>
    %66 = arith.divf %64, %65 : vector<8x64xf32>
    %67 = arith.mulf %58, %39 : vector<8x64xf32>
    %68 = arith.mulf %52, %60 : vector<8x64xf32>
    %69 = arith.addf %67, %68 : vector<8x64xf32>
    %70 = math.tanh %69 : vector<8x64xf32>
    %71 = arith.mulf %66, %70 : vector<8x64xf32>
    %72 = arith.maximumf %42, %71 : vector<8x64xf32>
    %73 = vector.extract_strided_slice %9 {offsets = [0, 2, 0], sizes = [8, 1, 256], strides = [1, 1, 1]} : vector<8x8x256xf32> to vector<8x1x256xf32>
    %74 = vector.shape_cast %73 : vector<8x1x256xf32> to vector<8x256xf32>
    %cst_21 = arith.constant dense<0.000000e+00> : vector<8x256xf32>
    %75 = tpu.matmul %71, %0, %cst_21 {dimension_numbers = #tpu.dot_dimension_numbers<[1], [0], [0], [1], [0, 0, 1, 1], [], []>} : vector<8x64xf32>, vector<64x256xf32>, vector<8x256xf32> -> vector<8x256xf32>
    %76 = arith.addf %74, %75 : vector<8x256xf32>
    %77 = vector.extract_strided_slice %76 {offsets = [0, 0], sizes = [8, 64], strides = [1, 1]} : vector<8x256xf32> to vector<8x64xf32>
    %78 = arith.negf %77 : vector<8x64xf32>
    %79 = math.exp %78 : vector<8x64xf32>
    %cst_22 = arith.constant 1.000000e+00 : f32
    %80 = vector.broadcast %cst_22 : f32 to vector<8x64xf32>
    %81 = arith.addf %80, %79 : vector<8x64xf32>
    %82 = arith.divf %80, %81 : vector<8x64xf32>
    %83 = vector.extract_strided_slice %76 {offsets = [0, 64], sizes = [8, 64], strides = [1, 1]} : vector<8x256xf32> to vector<8x64xf32>
    %84 = arith.negf %83 : vector<8x64xf32>
    %85 = math.exp %84 : vector<8x64xf32>
    %cst_23 = arith.constant 1.000000e+00 : f32
    %86 = vector.broadcast %cst_23 : f32 to vector<8x64xf32>
    %87 = arith.addf %86, %85 : vector<8x64xf32>
    %88 = arith.divf %86, %87 : vector<8x64xf32>
    %89 = vector.extract_strided_slice %76 {offsets = [0, 128], sizes = [8, 64], strides = [1, 1]} : vector<8x256xf32> to vector<8x64xf32>
    %90 = math.tanh %89 : vector<8x64xf32>
    %91 = vector.extract_strided_slice %76 {offsets = [0, 192], sizes = [8, 64], strides = [1, 1]} : vector<8x256xf32> to vector<8x64xf32>
    %92 = arith.negf %91 : vector<8x64xf32>
    %93 = math.exp %92 : vector<8x64xf32>
    %cst_24 = arith.constant 1.000000e+00 : f32
    %94 = vector.broadcast %cst_24 : f32 to vector<8x64xf32>
    %95 = arith.addf %94, %93 : vector<8x64xf32>
    %96 = arith.divf %94, %95 : vector<8x64xf32>
    %97 = arith.mulf %88, %69 : vector<8x64xf32>
    %98 = arith.mulf %82, %90 : vector<8x64xf32>
    %99 = arith.addf %97, %98 : vector<8x64xf32>
    %100 = math.tanh %99 : vector<8x64xf32>
    %101 = arith.mulf %96, %100 : vector<8x64xf32>
    %102 = arith.maximumf %72, %101 : vector<8x64xf32>
    %103 = vector.extract_strided_slice %9 {offsets = [0, 3, 0], sizes = [8, 1, 256], strides = [1, 1, 1]} : vector<8x8x256xf32> to vector<8x1x256xf32>
    %104 = vector.shape_cast %103 : vector<8x1x256xf32> to vector<8x256xf32>
    %cst_25 = arith.constant dense<0.000000e+00> : vector<8x256xf32>
    %105 = tpu.matmul %101, %0, %cst_25 {dimension_numbers = #tpu.dot_dimension_numbers<[1], [0], [0], [1], [0, 0, 1, 1], [], []>} : vector<8x64xf32>, vector<64x256xf32>, vector<8x256xf32> -> vector<8x256xf32>
    %106 = arith.addf %104, %105 : vector<8x256xf32>
    %107 = vector.extract_strided_slice %106 {offsets = [0, 0], sizes = [8, 64], strides = [1, 1]} : vector<8x256xf32> to vector<8x64xf32>
    %108 = arith.negf %107 : vector<8x64xf32>
    %109 = math.exp %108 : vector<8x64xf32>
    %cst_26 = arith.constant 1.000000e+00 : f32
    %110 = vector.broadcast %cst_26 : f32 to vector<8x64xf32>
    %111 = arith.addf %110, %109 : vector<8x64xf32>
    %112 = arith.divf %110, %111 : vector<8x64xf32>
    %113 = vector.extract_strided_slice %106 {offsets = [0, 64], sizes = [8, 64], strides = [1, 1]} : vector<8x256xf32> to vector<8x64xf32>
    %114 = arith.negf %113 : vector<8x64xf32>
    %115 = math.exp %114 : vector<8x64xf32>
    %cst_27 = arith.constant 1.000000e+00 : f32
    %116 = vector.broadcast %cst_27 : f32 to vector<8x64xf32>
    %117 = arith.addf %116, %115 : vector<8x64xf32>
    %118 = arith.divf %116, %117 : vector<8x64xf32>
    %119 = vector.extract_strided_slice %106 {offsets = [0, 128], sizes = [8, 64], strides = [1, 1]} : vector<8x256xf32> to vector<8x64xf32>
    %120 = math.tanh %119 : vector<8x64xf32>
    %121 = vector.extract_strided_slice %106 {offsets = [0, 192], sizes = [8, 64], strides = [1, 1]} : vector<8x256xf32> to vector<8x64xf32>
    %122 = arith.negf %121 : vector<8x64xf32>
    %123 = math.exp %122 : vector<8x64xf32>
    %cst_28 = arith.constant 1.000000e+00 : f32
    %124 = vector.broadcast %cst_28 : f32 to vector<8x64xf32>
    %125 = arith.addf %124, %123 : vector<8x64xf32>
    %126 = arith.divf %124, %125 : vector<8x64xf32>
    %127 = arith.mulf %118, %99 : vector<8x64xf32>
    %128 = arith.mulf %112, %120 : vector<8x64xf32>
    %129 = arith.addf %127, %128 : vector<8x64xf32>
    %130 = math.tanh %129 : vector<8x64xf32>
    %131 = arith.mulf %126, %130 : vector<8x64xf32>
    %132 = arith.maximumf %102, %131 : vector<8x64xf32>
    %133 = vector.extract_strided_slice %9 {offsets = [0, 4, 0], sizes = [8, 1, 256], strides = [1, 1, 1]} : vector<8x8x256xf32> to vector<8x1x256xf32>
    %134 = vector.shape_cast %133 : vector<8x1x256xf32> to vector<8x256xf32>
    %cst_29 = arith.constant dense<0.000000e+00> : vector<8x256xf32>
    %135 = tpu.matmul %131, %0, %cst_29 {dimension_numbers = #tpu.dot_dimension_numbers<[1], [0], [0], [1], [0, 0, 1, 1], [], []>} : vector<8x64xf32>, vector<64x256xf32>, vector<8x256xf32> -> vector<8x256xf32>
    %136 = arith.addf %134, %135 : vector<8x256xf32>
    %137 = vector.extract_strided_slice %136 {offsets = [0, 0], sizes = [8, 64], strides = [1, 1]} : vector<8x256xf32> to vector<8x64xf32>
    %138 = arith.negf %137 : vector<8x64xf32>
    %139 = math.exp %138 : vector<8x64xf32>
    %cst_30 = arith.constant 1.000000e+00 : f32
    %140 = vector.broadcast %cst_30 : f32 to vector<8x64xf32>
    %141 = arith.addf %140, %139 : vector<8x64xf32>
    %142 = arith.divf %140, %141 : vector<8x64xf32>
    %143 = vector.extract_strided_slice %136 {offsets = [0, 64], sizes = [8, 64], strides = [1, 1]} : vector<8x256xf32> to vector<8x64xf32>
    %144 = arith.negf %143 : vector<8x64xf32>
    %145 = math.exp %144 : vector<8x64xf32>
    %cst_31 = arith.constant 1.000000e+00 : f32
    %146 = vector.broadcast %cst_31 : f32 to vector<8x64xf32>
    %147 = arith.addf %146, %145 : vector<8x64xf32>
    %148 = arith.divf %146, %147 : vector<8x64xf32>
    %149 = vector.extract_strided_slice %136 {offsets = [0, 128], sizes = [8, 64], strides = [1, 1]} : vector<8x256xf32> to vector<8x64xf32>
    %150 = math.tanh %149 : vector<8x64xf32>
    %151 = vector.extract_strided_slice %136 {offsets = [0, 192], sizes = [8, 64], strides = [1, 1]} : vector<8x256xf32> to vector<8x64xf32>
    %152 = arith.negf %151 : vector<8x64xf32>
    %153 = math.exp %152 : vector<8x64xf32>
    %cst_32 = arith.constant 1.000000e+00 : f32
    %154 = vector.broadcast %cst_32 : f32 to vector<8x64xf32>
    %155 = arith.addf %154, %153 : vector<8x64xf32>
    %156 = arith.divf %154, %155 : vector<8x64xf32>
    %157 = arith.mulf %148, %129 : vector<8x64xf32>
    %158 = arith.mulf %142, %150 : vector<8x64xf32>
    %159 = arith.addf %157, %158 : vector<8x64xf32>
    %160 = math.tanh %159 : vector<8x64xf32>
    %161 = arith.mulf %156, %160 : vector<8x64xf32>
    %162 = arith.maximumf %132, %161 : vector<8x64xf32>
    %163 = vector.extract_strided_slice %9 {offsets = [0, 5, 0], sizes = [8, 1, 256], strides = [1, 1, 1]} : vector<8x8x256xf32> to vector<8x1x256xf32>
    %164 = vector.shape_cast %163 : vector<8x1x256xf32> to vector<8x256xf32>
    %cst_33 = arith.constant dense<0.000000e+00> : vector<8x256xf32>
    %165 = tpu.matmul %161, %0, %cst_33 {dimension_numbers = #tpu.dot_dimension_numbers<[1], [0], [0], [1], [0, 0, 1, 1], [], []>} : vector<8x64xf32>, vector<64x256xf32>, vector<8x256xf32> -> vector<8x256xf32>
    %166 = arith.addf %164, %165 : vector<8x256xf32>
    %167 = vector.extract_strided_slice %166 {offsets = [0, 0], sizes = [8, 64], strides = [1, 1]} : vector<8x256xf32> to vector<8x64xf32>
    %168 = arith.negf %167 : vector<8x64xf32>
    %169 = math.exp %168 : vector<8x64xf32>
    %cst_34 = arith.constant 1.000000e+00 : f32
    %170 = vector.broadcast %cst_34 : f32 to vector<8x64xf32>
    %171 = arith.addf %170, %169 : vector<8x64xf32>
    %172 = arith.divf %170, %171 : vector<8x64xf32>
    %173 = vector.extract_strided_slice %166 {offsets = [0, 64], sizes = [8, 64], strides = [1, 1]} : vector<8x256xf32> to vector<8x64xf32>
    %174 = arith.negf %173 : vector<8x64xf32>
    %175 = math.exp %174 : vector<8x64xf32>
    %cst_35 = arith.constant 1.000000e+00 : f32
    %176 = vector.broadcast %cst_35 : f32 to vector<8x64xf32>
    %177 = arith.addf %176, %175 : vector<8x64xf32>
    %178 = arith.divf %176, %177 : vector<8x64xf32>
    %179 = vector.extract_strided_slice %166 {offsets = [0, 128], sizes = [8, 64], strides = [1, 1]} : vector<8x256xf32> to vector<8x64xf32>
    %180 = math.tanh %179 : vector<8x64xf32>
    %181 = vector.extract_strided_slice %166 {offsets = [0, 192], sizes = [8, 64], strides = [1, 1]} : vector<8x256xf32> to vector<8x64xf32>
    %182 = arith.negf %181 : vector<8x64xf32>
    %183 = math.exp %182 : vector<8x64xf32>
    %cst_36 = arith.constant 1.000000e+00 : f32
    %184 = vector.broadcast %cst_36 : f32 to vector<8x64xf32>
    %185 = arith.addf %184, %183 : vector<8x64xf32>
    %186 = arith.divf %184, %185 : vector<8x64xf32>
    %187 = arith.mulf %178, %159 : vector<8x64xf32>
    %188 = arith.mulf %172, %180 : vector<8x64xf32>
    %189 = arith.addf %187, %188 : vector<8x64xf32>
    %190 = math.tanh %189 : vector<8x64xf32>
    %191 = arith.mulf %186, %190 : vector<8x64xf32>
    %192 = arith.maximumf %162, %191 : vector<8x64xf32>
    %193 = vector.extract_strided_slice %9 {offsets = [0, 6, 0], sizes = [8, 1, 256], strides = [1, 1, 1]} : vector<8x8x256xf32> to vector<8x1x256xf32>
    %194 = vector.shape_cast %193 : vector<8x1x256xf32> to vector<8x256xf32>
    %cst_37 = arith.constant dense<0.000000e+00> : vector<8x256xf32>
    %195 = tpu.matmul %191, %0, %cst_37 {dimension_numbers = #tpu.dot_dimension_numbers<[1], [0], [0], [1], [0, 0, 1, 1], [], []>} : vector<8x64xf32>, vector<64x256xf32>, vector<8x256xf32> -> vector<8x256xf32>
    %196 = arith.addf %194, %195 : vector<8x256xf32>
    %197 = vector.extract_strided_slice %196 {offsets = [0, 0], sizes = [8, 64], strides = [1, 1]} : vector<8x256xf32> to vector<8x64xf32>
    %198 = arith.negf %197 : vector<8x64xf32>
    %199 = math.exp %198 : vector<8x64xf32>
    %cst_38 = arith.constant 1.000000e+00 : f32
    %200 = vector.broadcast %cst_38 : f32 to vector<8x64xf32>
    %201 = arith.addf %200, %199 : vector<8x64xf32>
    %202 = arith.divf %200, %201 : vector<8x64xf32>
    %203 = vector.extract_strided_slice %196 {offsets = [0, 64], sizes = [8, 64], strides = [1, 1]} : vector<8x256xf32> to vector<8x64xf32>
    %204 = arith.negf %203 : vector<8x64xf32>
    %205 = math.exp %204 : vector<8x64xf32>
    %cst_39 = arith.constant 1.000000e+00 : f32
    %206 = vector.broadcast %cst_39 : f32 to vector<8x64xf32>
    %207 = arith.addf %206, %205 : vector<8x64xf32>
    %208 = arith.divf %206, %207 : vector<8x64xf32>
    %209 = vector.extract_strided_slice %196 {offsets = [0, 128], sizes = [8, 64], strides = [1, 1]} : vector<8x256xf32> to vector<8x64xf32>
    %210 = math.tanh %209 : vector<8x64xf32>
    %211 = vector.extract_strided_slice %196 {offsets = [0, 192], sizes = [8, 64], strides = [1, 1]} : vector<8x256xf32> to vector<8x64xf32>
    %212 = arith.negf %211 : vector<8x64xf32>
    %213 = math.exp %212 : vector<8x64xf32>
    %cst_40 = arith.constant 1.000000e+00 : f32
    %214 = vector.broadcast %cst_40 : f32 to vector<8x64xf32>
    %215 = arith.addf %214, %213 : vector<8x64xf32>
    %216 = arith.divf %214, %215 : vector<8x64xf32>
    %217 = arith.mulf %208, %189 : vector<8x64xf32>
    %218 = arith.mulf %202, %210 : vector<8x64xf32>
    %219 = arith.addf %217, %218 : vector<8x64xf32>
    %220 = math.tanh %219 : vector<8x64xf32>
    %221 = arith.mulf %216, %220 : vector<8x64xf32>
    %222 = arith.maximumf %192, %221 : vector<8x64xf32>
    %223 = vector.extract_strided_slice %9 {offsets = [0, 7, 0], sizes = [8, 1, 256], strides = [1, 1, 1]} : vector<8x8x256xf32> to vector<8x1x256xf32>
    %224 = vector.shape_cast %223 : vector<8x1x256xf32> to vector<8x256xf32>
    %cst_41 = arith.constant dense<0.000000e+00> : vector<8x256xf32>
    %225 = tpu.matmul %221, %0, %cst_41 {dimension_numbers = #tpu.dot_dimension_numbers<[1], [0], [0], [1], [0, 0, 1, 1], [], []>} : vector<8x64xf32>, vector<64x256xf32>, vector<8x256xf32> -> vector<8x256xf32>
    %226 = arith.addf %224, %225 : vector<8x256xf32>
    %227 = vector.extract_strided_slice %226 {offsets = [0, 0], sizes = [8, 64], strides = [1, 1]} : vector<8x256xf32> to vector<8x64xf32>
    %228 = arith.negf %227 : vector<8x64xf32>
    %229 = math.exp %228 : vector<8x64xf32>
    %cst_42 = arith.constant 1.000000e+00 : f32
    %230 = vector.broadcast %cst_42 : f32 to vector<8x64xf32>
    %231 = arith.addf %230, %229 : vector<8x64xf32>
    %232 = arith.divf %230, %231 : vector<8x64xf32>
    %233 = vector.extract_strided_slice %226 {offsets = [0, 64], sizes = [8, 64], strides = [1, 1]} : vector<8x256xf32> to vector<8x64xf32>
    %234 = arith.negf %233 : vector<8x64xf32>
    %235 = math.exp %234 : vector<8x64xf32>
    %cst_43 = arith.constant 1.000000e+00 : f32
    %236 = vector.broadcast %cst_43 : f32 to vector<8x64xf32>
    %237 = arith.addf %236, %235 : vector<8x64xf32>
    %238 = arith.divf %236, %237 : vector<8x64xf32>
    %239 = vector.extract_strided_slice %226 {offsets = [0, 128], sizes = [8, 64], strides = [1, 1]} : vector<8x256xf32> to vector<8x64xf32>
    %240 = math.tanh %239 : vector<8x64xf32>
    %241 = vector.extract_strided_slice %226 {offsets = [0, 192], sizes = [8, 64], strides = [1, 1]} : vector<8x256xf32> to vector<8x64xf32>
    %242 = arith.negf %241 : vector<8x64xf32>
    %243 = math.exp %242 : vector<8x64xf32>
    %cst_44 = arith.constant 1.000000e+00 : f32
    %244 = vector.broadcast %cst_44 : f32 to vector<8x64xf32>
    %245 = arith.addf %244, %243 : vector<8x64xf32>
    %246 = arith.divf %244, %245 : vector<8x64xf32>
    %247 = arith.mulf %238, %219 : vector<8x64xf32>
    %248 = arith.mulf %232, %240 : vector<8x64xf32>
    %249 = arith.addf %247, %248 : vector<8x64xf32>
    %250 = math.tanh %249 : vector<8x64xf32>
    %251 = arith.mulf %246, %250 : vector<8x64xf32>
    %252 = arith.maximumf %222, %251 : vector<8x64xf32>
    %c0_45 = arith.constant 0 : index
    %c0_46 = arith.constant 0 : index
    %253 = vector.load %arg4[%c0_45, %c0_46] : memref<64x256xf32, #tpu.memory_space<vmem>>, vector<64x256xf32>
    %cst_47 = arith.constant dense<0.000000e+00> : vector<8x256xf32>
    %254 = tpu.matmul %252, %253, %cst_47 {dimension_numbers = #tpu.dot_dimension_numbers<[1], [0], [0], [1], [0, 0, 1, 1], [], []>} : vector<8x64xf32>, vector<64x256xf32>, vector<8x256xf32> -> vector<8x256xf32>
    %c0_48 = arith.constant 0 : index
    %c0_49 = arith.constant 0 : index
    %255 = vector.load %arg6[%c0_48, %c0_49] : memref<1x256xf32, #tpu.memory_space<vmem>>, vector<1x256xf32>
    %256 = vector.broadcast %255 : vector<1x256xf32> to vector<8x256xf32>
    %257 = arith.addf %254, %256 : vector<8x256xf32>
    %cst_50 = arith.constant 0.000000e+00 : f32
    %258 = vector.broadcast %cst_50 : f32 to vector<8x64xf32>
    %cst_51 = arith.constant 0.000000e+00 : f32
    %259 = vector.broadcast %cst_51 : f32 to vector<8x64xf32>
    %cst_52 = arith.constant dense<0.000000e+00> : vector<8x256xf32>
    %260 = tpu.matmul %258, %1, %cst_52 {dimension_numbers = #tpu.dot_dimension_numbers<[1], [0], [0], [1], [0, 0, 1, 1], [], []>} : vector<8x64xf32>, vector<64x256xf32>, vector<8x256xf32> -> vector<8x256xf32>
    %261 = arith.addf %257, %260 : vector<8x256xf32>
    %262 = vector.extract_strided_slice %261 {offsets = [0, 0], sizes = [8, 64], strides = [1, 1]} : vector<8x256xf32> to vector<8x64xf32>
    %263 = arith.negf %262 : vector<8x64xf32>
    %264 = math.exp %263 : vector<8x64xf32>
    %cst_53 = arith.constant 1.000000e+00 : f32
    %265 = vector.broadcast %cst_53 : f32 to vector<8x64xf32>
    %266 = arith.addf %265, %264 : vector<8x64xf32>
    %267 = arith.divf %265, %266 : vector<8x64xf32>
    %268 = vector.extract_strided_slice %261 {offsets = [0, 64], sizes = [8, 64], strides = [1, 1]} : vector<8x256xf32> to vector<8x64xf32>
    %269 = arith.negf %268 : vector<8x64xf32>
    %270 = math.exp %269 : vector<8x64xf32>
    %cst_54 = arith.constant 1.000000e+00 : f32
    %271 = vector.broadcast %cst_54 : f32 to vector<8x64xf32>
    %272 = arith.addf %271, %270 : vector<8x64xf32>
    %273 = arith.divf %271, %272 : vector<8x64xf32>
    %274 = vector.extract_strided_slice %261 {offsets = [0, 128], sizes = [8, 64], strides = [1, 1]} : vector<8x256xf32> to vector<8x64xf32>
    %275 = math.tanh %274 : vector<8x64xf32>
    %276 = vector.extract_strided_slice %261 {offsets = [0, 192], sizes = [8, 64], strides = [1, 1]} : vector<8x256xf32> to vector<8x64xf32>
    %277 = arith.negf %276 : vector<8x64xf32>
    %278 = math.exp %277 : vector<8x64xf32>
    %cst_55 = arith.constant 1.000000e+00 : f32
    %279 = vector.broadcast %cst_55 : f32 to vector<8x64xf32>
    %280 = arith.addf %279, %278 : vector<8x64xf32>
    %281 = arith.divf %279, %280 : vector<8x64xf32>
    %282 = arith.mulf %273, %259 : vector<8x64xf32>
    %283 = arith.mulf %267, %275 : vector<8x64xf32>
    %284 = arith.addf %282, %283 : vector<8x64xf32>
    %285 = math.tanh %284 : vector<8x64xf32>
    %286 = arith.mulf %281, %285 : vector<8x64xf32>
    %cst_56 = arith.constant dense<0.000000e+00> : vector<8x256xf32>
    %287 = tpu.matmul %286, %1, %cst_56 {dimension_numbers = #tpu.dot_dimension_numbers<[1], [0], [0], [1], [0, 0, 1, 1], [], []>} : vector<8x64xf32>, vector<64x256xf32>, vector<8x256xf32> -> vector<8x256xf32>
    %288 = arith.addf %257, %287 : vector<8x256xf32>
    %289 = vector.extract_strided_slice %288 {offsets = [0, 0], sizes = [8, 64], strides = [1, 1]} : vector<8x256xf32> to vector<8x64xf32>
    %290 = arith.negf %289 : vector<8x64xf32>
    %291 = math.exp %290 : vector<8x64xf32>
    %cst_57 = arith.constant 1.000000e+00 : f32
    %292 = vector.broadcast %cst_57 : f32 to vector<8x64xf32>
    %293 = arith.addf %292, %291 : vector<8x64xf32>
    %294 = arith.divf %292, %293 : vector<8x64xf32>
    %295 = vector.extract_strided_slice %288 {offsets = [0, 64], sizes = [8, 64], strides = [1, 1]} : vector<8x256xf32> to vector<8x64xf32>
    %296 = arith.negf %295 : vector<8x64xf32>
    %297 = math.exp %296 : vector<8x64xf32>
    %cst_58 = arith.constant 1.000000e+00 : f32
    %298 = vector.broadcast %cst_58 : f32 to vector<8x64xf32>
    %299 = arith.addf %298, %297 : vector<8x64xf32>
    %300 = arith.divf %298, %299 : vector<8x64xf32>
    %301 = vector.extract_strided_slice %288 {offsets = [0, 128], sizes = [8, 64], strides = [1, 1]} : vector<8x256xf32> to vector<8x64xf32>
    %302 = math.tanh %301 : vector<8x64xf32>
    %303 = vector.extract_strided_slice %288 {offsets = [0, 192], sizes = [8, 64], strides = [1, 1]} : vector<8x256xf32> to vector<8x64xf32>
    %304 = arith.negf %303 : vector<8x64xf32>
    %305 = math.exp %304 : vector<8x64xf32>
    %cst_59 = arith.constant 1.000000e+00 : f32
    %306 = vector.broadcast %cst_59 : f32 to vector<8x64xf32>
    %307 = arith.addf %306, %305 : vector<8x64xf32>
    %308 = arith.divf %306, %307 : vector<8x64xf32>
    %309 = arith.mulf %300, %284 : vector<8x64xf32>
    %310 = arith.mulf %294, %302 : vector<8x64xf32>
    %311 = arith.addf %309, %310 : vector<8x64xf32>
    %312 = math.tanh %311 : vector<8x64xf32>
    %313 = arith.mulf %308, %312 : vector<8x64xf32>
    %cst_60 = arith.constant dense<0.000000e+00> : vector<8x256xf32>
    %314 = tpu.matmul %313, %1, %cst_60 {dimension_numbers = #tpu.dot_dimension_numbers<[1], [0], [0], [1], [0, 0, 1, 1], [], []>} : vector<8x64xf32>, vector<64x256xf32>, vector<8x256xf32> -> vector<8x256xf32>
    %315 = arith.addf %257, %314 : vector<8x256xf32>
    %316 = vector.extract_strided_slice %315 {offsets = [0, 0], sizes = [8, 64], strides = [1, 1]} : vector<8x256xf32> to vector<8x64xf32>
    %317 = arith.negf %316 : vector<8x64xf32>
    %318 = math.exp %317 : vector<8x64xf32>
    %cst_61 = arith.constant 1.000000e+00 : f32
    %319 = vector.broadcast %cst_61 : f32 to vector<8x64xf32>
    %320 = arith.addf %319, %318 : vector<8x64xf32>
    %321 = arith.divf %319, %320 : vector<8x64xf32>
    %322 = vector.extract_strided_slice %315 {offsets = [0, 64], sizes = [8, 64], strides = [1, 1]} : vector<8x256xf32> to vector<8x64xf32>
    %323 = arith.negf %322 : vector<8x64xf32>
    %324 = math.exp %323 : vector<8x64xf32>
    %cst_62 = arith.constant 1.000000e+00 : f32
    %325 = vector.broadcast %cst_62 : f32 to vector<8x64xf32>
    %326 = arith.addf %325, %324 : vector<8x64xf32>
    %327 = arith.divf %325, %326 : vector<8x64xf32>
    %328 = vector.extract_strided_slice %315 {offsets = [0, 128], sizes = [8, 64], strides = [1, 1]} : vector<8x256xf32> to vector<8x64xf32>
    %329 = math.tanh %328 : vector<8x64xf32>
    %330 = vector.extract_strided_slice %315 {offsets = [0, 192], sizes = [8, 64], strides = [1, 1]} : vector<8x256xf32> to vector<8x64xf32>
    %331 = arith.negf %330 : vector<8x64xf32>
    %332 = math.exp %331 : vector<8x64xf32>
    %cst_63 = arith.constant 1.000000e+00 : f32
    %333 = vector.broadcast %cst_63 : f32 to vector<8x64xf32>
    %334 = arith.addf %333, %332 : vector<8x64xf32>
    %335 = arith.divf %333, %334 : vector<8x64xf32>
    %336 = arith.mulf %327, %311 : vector<8x64xf32>
    %337 = arith.mulf %321, %329 : vector<8x64xf32>
    %338 = arith.addf %336, %337 : vector<8x64xf32>
    %339 = math.tanh %338 : vector<8x64xf32>
    %340 = arith.mulf %335, %339 : vector<8x64xf32>
    %cst_64 = arith.constant dense<0.000000e+00> : vector<8x256xf32>
    %341 = tpu.matmul %340, %1, %cst_64 {dimension_numbers = #tpu.dot_dimension_numbers<[1], [0], [0], [1], [0, 0, 1, 1], [], []>} : vector<8x64xf32>, vector<64x256xf32>, vector<8x256xf32> -> vector<8x256xf32>
    %342 = arith.addf %257, %341 : vector<8x256xf32>
    %343 = vector.extract_strided_slice %342 {offsets = [0, 0], sizes = [8, 64], strides = [1, 1]} : vector<8x256xf32> to vector<8x64xf32>
    %344 = arith.negf %343 : vector<8x64xf32>
    %345 = math.exp %344 : vector<8x64xf32>
    %cst_65 = arith.constant 1.000000e+00 : f32
    %346 = vector.broadcast %cst_65 : f32 to vector<8x64xf32>
    %347 = arith.addf %346, %345 : vector<8x64xf32>
    %348 = arith.divf %346, %347 : vector<8x64xf32>
    %349 = vector.extract_strided_slice %342 {offsets = [0, 64], sizes = [8, 64], strides = [1, 1]} : vector<8x256xf32> to vector<8x64xf32>
    %350 = arith.negf %349 : vector<8x64xf32>
    %351 = math.exp %350 : vector<8x64xf32>
    %cst_66 = arith.constant 1.000000e+00 : f32
    %352 = vector.broadcast %cst_66 : f32 to vector<8x64xf32>
    %353 = arith.addf %352, %351 : vector<8x64xf32>
    %354 = arith.divf %352, %353 : vector<8x64xf32>
    %355 = vector.extract_strided_slice %342 {offsets = [0, 128], sizes = [8, 64], strides = [1, 1]} : vector<8x256xf32> to vector<8x64xf32>
    %356 = math.tanh %355 : vector<8x64xf32>
    %357 = vector.extract_strided_slice %342 {offsets = [0, 192], sizes = [8, 64], strides = [1, 1]} : vector<8x256xf32> to vector<8x64xf32>
    %358 = arith.negf %357 : vector<8x64xf32>
    %359 = math.exp %358 : vector<8x64xf32>
    %cst_67 = arith.constant 1.000000e+00 : f32
    %360 = vector.broadcast %cst_67 : f32 to vector<8x64xf32>
    %361 = arith.addf %360, %359 : vector<8x64xf32>
    %362 = arith.divf %360, %361 : vector<8x64xf32>
    %363 = arith.mulf %354, %338 : vector<8x64xf32>
    %364 = arith.mulf %348, %356 : vector<8x64xf32>
    %365 = arith.addf %363, %364 : vector<8x64xf32>
    %366 = math.tanh %365 : vector<8x64xf32>
    %367 = arith.mulf %362, %366 : vector<8x64xf32>
    %cst_68 = arith.constant dense<0.000000e+00> : vector<8x256xf32>
    %368 = tpu.matmul %367, %1, %cst_68 {dimension_numbers = #tpu.dot_dimension_numbers<[1], [0], [0], [1], [0, 0, 1, 1], [], []>} : vector<8x64xf32>, vector<64x256xf32>, vector<8x256xf32> -> vector<8x256xf32>
    %369 = arith.addf %257, %368 : vector<8x256xf32>
    %370 = vector.extract_strided_slice %369 {offsets = [0, 0], sizes = [8, 64], strides = [1, 1]} : vector<8x256xf32> to vector<8x64xf32>
    %371 = arith.negf %370 : vector<8x64xf32>
    %372 = math.exp %371 : vector<8x64xf32>
    %cst_69 = arith.constant 1.000000e+00 : f32
    %373 = vector.broadcast %cst_69 : f32 to vector<8x64xf32>
    %374 = arith.addf %373, %372 : vector<8x64xf32>
    %375 = arith.divf %373, %374 : vector<8x64xf32>
    %376 = vector.extract_strided_slice %369 {offsets = [0, 64], sizes = [8, 64], strides = [1, 1]} : vector<8x256xf32> to vector<8x64xf32>
    %377 = arith.negf %376 : vector<8x64xf32>
    %378 = math.exp %377 : vector<8x64xf32>
    %cst_70 = arith.constant 1.000000e+00 : f32
    %379 = vector.broadcast %cst_70 : f32 to vector<8x64xf32>
    %380 = arith.addf %379, %378 : vector<8x64xf32>
    %381 = arith.divf %379, %380 : vector<8x64xf32>
    %382 = vector.extract_strided_slice %369 {offsets = [0, 128], sizes = [8, 64], strides = [1, 1]} : vector<8x256xf32> to vector<8x64xf32>
    %383 = math.tanh %382 : vector<8x64xf32>
    %384 = vector.extract_strided_slice %369 {offsets = [0, 192], sizes = [8, 64], strides = [1, 1]} : vector<8x256xf32> to vector<8x64xf32>
    %385 = arith.negf %384 : vector<8x64xf32>
    %386 = math.exp %385 : vector<8x64xf32>
    %cst_71 = arith.constant 1.000000e+00 : f32
    %387 = vector.broadcast %cst_71 : f32 to vector<8x64xf32>
    %388 = arith.addf %387, %386 : vector<8x64xf32>
    %389 = arith.divf %387, %388 : vector<8x64xf32>
    %390 = arith.mulf %381, %365 : vector<8x64xf32>
    %391 = arith.mulf %375, %383 : vector<8x64xf32>
    %392 = arith.addf %390, %391 : vector<8x64xf32>
    %393 = math.tanh %392 : vector<8x64xf32>
    %394 = arith.mulf %389, %393 : vector<8x64xf32>
    %cst_72 = arith.constant dense<0.000000e+00> : vector<8x256xf32>
    %395 = tpu.matmul %394, %1, %cst_72 {dimension_numbers = #tpu.dot_dimension_numbers<[1], [0], [0], [1], [0, 0, 1, 1], [], []>} : vector<8x64xf32>, vector<64x256xf32>, vector<8x256xf32> -> vector<8x256xf32>
    %396 = arith.addf %257, %395 : vector<8x256xf32>
    %397 = vector.extract_strided_slice %396 {offsets = [0, 0], sizes = [8, 64], strides = [1, 1]} : vector<8x256xf32> to vector<8x64xf32>
    %398 = arith.negf %397 : vector<8x64xf32>
    %399 = math.exp %398 : vector<8x64xf32>
    %cst_73 = arith.constant 1.000000e+00 : f32
    %400 = vector.broadcast %cst_73 : f32 to vector<8x64xf32>
    %401 = arith.addf %400, %399 : vector<8x64xf32>
    %402 = arith.divf %400, %401 : vector<8x64xf32>
    %403 = vector.extract_strided_slice %396 {offsets = [0, 64], sizes = [8, 64], strides = [1, 1]} : vector<8x256xf32> to vector<8x64xf32>
    %404 = arith.negf %403 : vector<8x64xf32>
    %405 = math.exp %404 : vector<8x64xf32>
    %cst_74 = arith.constant 1.000000e+00 : f32
    %406 = vector.broadcast %cst_74 : f32 to vector<8x64xf32>
    %407 = arith.addf %406, %405 : vector<8x64xf32>
    %408 = arith.divf %406, %407 : vector<8x64xf32>
    %409 = vector.extract_strided_slice %396 {offsets = [0, 128], sizes = [8, 64], strides = [1, 1]} : vector<8x256xf32> to vector<8x64xf32>
    %410 = math.tanh %409 : vector<8x64xf32>
    %411 = vector.extract_strided_slice %396 {offsets = [0, 192], sizes = [8, 64], strides = [1, 1]} : vector<8x256xf32> to vector<8x64xf32>
    %412 = arith.negf %411 : vector<8x64xf32>
    %413 = math.exp %412 : vector<8x64xf32>
    %cst_75 = arith.constant 1.000000e+00 : f32
    %414 = vector.broadcast %cst_75 : f32 to vector<8x64xf32>
    %415 = arith.addf %414, %413 : vector<8x64xf32>
    %416 = arith.divf %414, %415 : vector<8x64xf32>
    %417 = arith.mulf %408, %392 : vector<8x64xf32>
    %418 = arith.mulf %402, %410 : vector<8x64xf32>
    %419 = arith.addf %417, %418 : vector<8x64xf32>
    %420 = math.tanh %419 : vector<8x64xf32>
    %421 = arith.mulf %416, %420 : vector<8x64xf32>
    %cst_76 = arith.constant dense<0.000000e+00> : vector<8x256xf32>
    %422 = tpu.matmul %421, %1, %cst_76 {dimension_numbers = #tpu.dot_dimension_numbers<[1], [0], [0], [1], [0, 0, 1, 1], [], []>} : vector<8x64xf32>, vector<64x256xf32>, vector<8x256xf32> -> vector<8x256xf32>
    %423 = arith.addf %257, %422 : vector<8x256xf32>
    %424 = vector.extract_strided_slice %423 {offsets = [0, 0], sizes = [8, 64], strides = [1, 1]} : vector<8x256xf32> to vector<8x64xf32>
    %425 = arith.negf %424 : vector<8x64xf32>
    %426 = math.exp %425 : vector<8x64xf32>
    %cst_77 = arith.constant 1.000000e+00 : f32
    %427 = vector.broadcast %cst_77 : f32 to vector<8x64xf32>
    %428 = arith.addf %427, %426 : vector<8x64xf32>
    %429 = arith.divf %427, %428 : vector<8x64xf32>
    %430 = vector.extract_strided_slice %423 {offsets = [0, 64], sizes = [8, 64], strides = [1, 1]} : vector<8x256xf32> to vector<8x64xf32>
    %431 = arith.negf %430 : vector<8x64xf32>
    %432 = math.exp %431 : vector<8x64xf32>
    %cst_78 = arith.constant 1.000000e+00 : f32
    %433 = vector.broadcast %cst_78 : f32 to vector<8x64xf32>
    %434 = arith.addf %433, %432 : vector<8x64xf32>
    %435 = arith.divf %433, %434 : vector<8x64xf32>
    %436 = vector.extract_strided_slice %423 {offsets = [0, 128], sizes = [8, 64], strides = [1, 1]} : vector<8x256xf32> to vector<8x64xf32>
    %437 = math.tanh %436 : vector<8x64xf32>
    %438 = vector.extract_strided_slice %423 {offsets = [0, 192], sizes = [8, 64], strides = [1, 1]} : vector<8x256xf32> to vector<8x64xf32>
    %439 = arith.negf %438 : vector<8x64xf32>
    %440 = math.exp %439 : vector<8x64xf32>
    %cst_79 = arith.constant 1.000000e+00 : f32
    %441 = vector.broadcast %cst_79 : f32 to vector<8x64xf32>
    %442 = arith.addf %441, %440 : vector<8x64xf32>
    %443 = arith.divf %441, %442 : vector<8x64xf32>
    %444 = arith.mulf %435, %419 : vector<8x64xf32>
    %445 = arith.mulf %429, %437 : vector<8x64xf32>
    %446 = arith.addf %444, %445 : vector<8x64xf32>
    %447 = math.tanh %446 : vector<8x64xf32>
    %448 = arith.mulf %443, %447 : vector<8x64xf32>
    %cst_80 = arith.constant dense<0.000000e+00> : vector<8x256xf32>
    %449 = tpu.matmul %448, %1, %cst_80 {dimension_numbers = #tpu.dot_dimension_numbers<[1], [0], [0], [1], [0, 0, 1, 1], [], []>} : vector<8x64xf32>, vector<64x256xf32>, vector<8x256xf32> -> vector<8x256xf32>
    %450 = arith.addf %257, %449 : vector<8x256xf32>
    %451 = vector.extract_strided_slice %450 {offsets = [0, 0], sizes = [8, 64], strides = [1, 1]} : vector<8x256xf32> to vector<8x64xf32>
    %452 = arith.negf %451 : vector<8x64xf32>
    %453 = math.exp %452 : vector<8x64xf32>
    %cst_81 = arith.constant 1.000000e+00 : f32
    %454 = vector.broadcast %cst_81 : f32 to vector<8x64xf32>
    %455 = arith.addf %454, %453 : vector<8x64xf32>
    %456 = arith.divf %454, %455 : vector<8x64xf32>
    %457 = vector.extract_strided_slice %450 {offsets = [0, 64], sizes = [8, 64], strides = [1, 1]} : vector<8x256xf32> to vector<8x64xf32>
    %458 = arith.negf %457 : vector<8x64xf32>
    %459 = math.exp %458 : vector<8x64xf32>
    %cst_82 = arith.constant 1.000000e+00 : f32
    %460 = vector.broadcast %cst_82 : f32 to vector<8x64xf32>
    %461 = arith.addf %460, %459 : vector<8x64xf32>
    %462 = arith.divf %460, %461 : vector<8x64xf32>
    %463 = vector.extract_strided_slice %450 {offsets = [0, 128], sizes = [8, 64], strides = [1, 1]} : vector<8x256xf32> to vector<8x64xf32>
    %464 = math.tanh %463 : vector<8x64xf32>
    %465 = vector.extract_strided_slice %450 {offsets = [0, 192], sizes = [8, 64], strides = [1, 1]} : vector<8x256xf32> to vector<8x64xf32>
    %466 = arith.negf %465 : vector<8x64xf32>
    %467 = math.exp %466 : vector<8x64xf32>
    %cst_83 = arith.constant 1.000000e+00 : f32
    %468 = vector.broadcast %cst_83 : f32 to vector<8x64xf32>
    %469 = arith.addf %468, %467 : vector<8x64xf32>
    %470 = arith.divf %468, %469 : vector<8x64xf32>
    %471 = arith.mulf %462, %446 : vector<8x64xf32>
    %472 = arith.mulf %456, %464 : vector<8x64xf32>
    %473 = arith.addf %471, %472 : vector<8x64xf32>
    %474 = math.tanh %473 : vector<8x64xf32>
    %475 = arith.mulf %470, %474 : vector<8x64xf32>
    %476 = vector.shape_cast %286 : vector<8x64xf32> to vector<8x1x64xf32>
    %477 = vector.shape_cast %313 : vector<8x64xf32> to vector<8x1x64xf32>
    %478 = vector.shape_cast %340 : vector<8x64xf32> to vector<8x1x64xf32>
    %479 = vector.shape_cast %367 : vector<8x64xf32> to vector<8x1x64xf32>
    %480 = vector.shape_cast %394 : vector<8x64xf32> to vector<8x1x64xf32>
    %481 = vector.shape_cast %421 : vector<8x64xf32> to vector<8x1x64xf32>
    %482 = vector.shape_cast %448 : vector<8x64xf32> to vector<8x1x64xf32>
    %483 = vector.shape_cast %475 : vector<8x64xf32> to vector<8x1x64xf32>
    %484 = tpu.concatenate %476, %477, %478, %479, %480, %481, %482, %483 in 1 : vector<8x1x64xf32>, vector<8x1x64xf32>, vector<8x1x64xf32>, vector<8x1x64xf32>, vector<8x1x64xf32>, vector<8x1x64xf32>, vector<8x1x64xf32>, vector<8x1x64xf32> -> vector<8x8x64xf32>
    %485 = vector.shape_cast %484 : vector<8x8x64xf32> to vector<64x64xf32>
    %c0_84 = arith.constant 0 : index
    %c0_85 = arith.constant 0 : index
    %486 = vector.load %arg7[%c0_84, %c0_85] : memref<64x16xf32, #tpu.memory_space<vmem>>, vector<64x16xf32>
    %cst_86 = arith.constant dense<0.000000e+00> : vector<64x16xf32>
    %487 = tpu.matmul %485, %486, %cst_86 {dimension_numbers = #tpu.dot_dimension_numbers<[1], [0], [0], [1], [0, 0, 1, 1], [], []>} : vector<64x64xf32>, vector<64x16xf32>, vector<64x16xf32> -> vector<64x16xf32>
    %c0_87 = arith.constant 0 : index
    %c0_88 = arith.constant 0 : index
    %488 = vector.load %arg8[%c0_87, %c0_88] : memref<1x16xf32, #tpu.memory_space<vmem>>, vector<1x16xf32>
    %489 = vector.broadcast %488 : vector<1x16xf32> to vector<64x16xf32>
    %490 = arith.addf %487, %489 : vector<64x16xf32>
    %491 = vector.shape_cast %490 : vector<64x16xf32> to vector<8x8x16xf32>
    %c0_89 = arith.constant 0 : index
    %c0_90 = arith.constant 0 : index
    %c0_91 = arith.constant 0 : index
    %492 = vector.load %arg9[%c0_89, %c0_90, %c0_91] : memref<8x8x16xf32, #tpu.memory_space<vmem>>, vector<8x8x16xf32>
    tpu.vector_store %arg9[%c0_89, %c0_90, %c0_91], %491 {strides = array<i32>} : memref<8x8x16xf32, #tpu.memory_space<vmem>>, vector<8x8x16xf32>,
    return
  }
}

</mosaic_0001>

<llo_original>
// kernel: tpu_custom_call.1
$region0: #{tpu_custom_call.1}
  #allocation0 [shape = 'u32[]', space=smem, size = 0x4, offset = 0x4, fixed_abs, tag = 'smem constant byte address 0x4 - core index']
  #allocation1 [shape = 'u32[144,128]{1,0:T(1,128)}', space=vmem, size = 0x12000, scoped, tag = 'internal scratch']
  %s0 = inlined_call_operand.vmem [shape: f32[8,8,16], index: 0, kind: input, shape index: {}]
  %s1 = inlined_call_operand.hbm [shape: f32[16,256], index: 1, kind: input, shape index: {}]
  %s2 = inlined_call_operand.hbm [shape: f32[64,256], index: 2, kind: input, shape index: {}]
  %s3 = inlined_call_operand.vmem [shape: f32[1,256], index: 3, kind: input, shape index: {}]
  %s4 = inlined_call_operand.hbm [shape: f32[64,256], index: 4, kind: input, shape index: {}]
  %s5 = inlined_call_operand.hbm [shape: f32[64,256], index: 5, kind: input, shape index: {}]
  %s6 = inlined_call_operand.vmem [shape: f32[1,256], index: 6, kind: input, shape index: {}]
  %s7 = inlined_call_operand.vmem [shape: f32[64,16], index: 7, kind: input, shape index: {}]
  %s8 = inlined_call_operand.vmem [shape: f32[1,16], index: 8, kind: input, shape index: {}]
  %s9 = inlined_call_operand.hbm [shape: f32[8,8,16], index: 9, kind: output, shape index: {}]
  %s10 = sld [smem:[#allocation0]]
  $region62: #{tpu_custom_call.1} parent=0
    _
  %s12 = ssub.s32 1, %s10
  %s13 = scalar_select 0, %s12, %s10
  $region1: #{tpu_custom_call.1} parent=0
    #allocation2 [shape = 'u8[16384]{0}', space=vmem, size = 0x4000, scoped, tag = 'input window, operand 1, single buffered']
    #allocation3 [shape = 's32[1]{0}', space=sflag, size = 0x4, scoped, tag = 'scoped memory for tpu_custom_call.1']
    #allocation4 [shape = 's32[1]{0}', space=sflag, size = 0x4, scoped, tag = 'scoped memory for tpu_custom_call.1']
    #allocation5 [shape = 'u8[65536]{0}', space=vmem, size = 0x10000, scoped, tag = 'input window, operand 2, single buffered']
    #allocation6 [shape = 's32[1]{0}', space=sflag, size = 0x4, scoped, tag = 'scoped memory for tpu_custom_call.1']
    #allocation7 [shape = 'u8[65536]{0}', space=vmem, size = 0x10000, scoped, tag = 'input window, operand 4, single buffered']
    #allocation8 [shape = 'u8[65536]{0}', space=vmem, size = 0x10000, scoped, tag = 'input window, operand 5, single buffered']
    #allocation9 [shape = 's32[1]{0}', space=sflag, size = 0x4, scoped, tag = 'scoped memory for tpu_custom_call.1']
    #allocation10 [shape = 'u8[32768]{0}', space=vmem, size = 0x8000, scoped, tag = 'output window, operand 0, single buffered']
    %14 = vsyncpa [#allocation3], 0
    %15 = vsyncpa [#allocation6], 0
    %16 = vsyncpa [#allocation9], 0
    %17 = vsyncpa [#allocation4], 0
    // Predicated region
    $region2: #{tpu_custom_call.1} parent=1 // pred_check
      _
    $region3: #{tpu_custom_call.1} parent=1 // pred_check_branch
      %19 = sbr.rel (0) target = $region5
    $region4: #{tpu_custom_call.1} parent=1 // pred_region
      _
    $region5: #{tpu_custom_call.1} parent=1 // pred_fallthru
      _
    // Predicated region
    $region6: #{tpu_custom_call.1} parent=1 // pred_check
      _
    $region7: #{tpu_custom_call.1} parent=1 // pred_check_branch
      %21 = sbr.rel (0) target = $region9
    $region8: #{tpu_custom_call.1} parent=1 // pred_region
      %s23 = ssub.s32 512, 512
      %24 = vsyncadd [#allocation3], %s23
      %s25 = sshll.u32 [#allocation2], 4
      %s26 = int_to_ptr.vmem [resolvable:$true] %s25
      %31 = dma.hbm_to_vmem [thread:$0]  %s1, 512, %s26, [#allocation3], 256, 256, 16
    $region9: #{tpu_custom_call.1} parent=1 // pred_fallthru
      _
    // Predicated region
    $region10: #{tpu_custom_call.1} parent=1 // pred_check
      _
    $region11: #{tpu_custom_call.1} parent=1 // pred_check_branch
      %33 = sbr.rel (0) target = $region13
    $region12: #{tpu_custom_call.1} parent=1 // pred_region
      %s35 = ssub.s32 2048, 2048
      %36 = vsyncadd [#allocation6], %s35
      %s37 = sshll.u32 [#allocation5], 4
      %s38 = int_to_ptr.vmem [resolvable:$true] %s37
      %43 = dma.hbm_to_vmem [thread:$0]  %s2, 2048, %s38, [#allocation6], 256, 256, 16
    $region13: #{tpu_custom_call.1} parent=1 // pred_fallthru
      _
    // Predicated region
    $region14: #{tpu_custom_call.1} parent=1 // pred_check
      _
    $region15: #{tpu_custom_call.1} parent=1 // pred_check_branch
      %45 = sbr.rel (0) target = $region17
    $region16: #{tpu_custom_call.1} parent=1 // pred_region
      _
    $region17: #{tpu_custom_call.1} parent=1 // pred_fallthru
      _
    // Predicated region
    $region18: #{tpu_custom_call.1} parent=1 // pred_check
      _
    $region19: #{tpu_custom_call.1} parent=1 // pred_check_branch
      %47 = sbr.rel (0) target = $region21
    $region20: #{tpu_custom_call.1} parent=1 // pred_region
      %s49 = ssub.s32 2048, 2048
      %50 = vsyncadd [#allocation6], %s49
      %s51 = sshll.u32 [#allocation7], 4
      %s52 = int_to_ptr.vmem [resolvable:$true] %s51
      %57 = dma.hbm_to_vmem [thread:$0]  %s4, 2048, %s52, [#allocation6], 256, 256, 16
    $region21: #{tpu_custom_call.1} parent=1 // pred_fallthru
      _
    // Predicated region
    $region22: #{tpu_custom_call.1} parent=1 // pred_check
      _
    $region23: #{tpu_custom_call.1} parent=1 // pred_check_branch
      %59 = sbr.rel (0) target = $region25
    $region24: #{tpu_custom_call.1} parent=1 // pred_region
      %s61 = ssub.s32 2048, 2048
      %62 = vsyncadd [#allocation9], %s61
      %s63 = sshll.u32 [#allocation8], 4
      %s64 = int_to_ptr.vmem [resolvable:$true] %s63
      %69 = dma.hbm_to_vmem [thread:$0]  %s5, 2048, %s64, [#allocation9], 256, 256, 16
    $region25: #{tpu_custom_call.1} parent=1 // pred_fallthru
      _
    // Predicated region
    $region26: #{tpu_custom_call.1} parent=1 // pred_check
      _
    $region27: #{tpu_custom_call.1} parent=1 // pred_check_branch
      %71 = sbr.rel (0) target = $region29
    $region28: #{tpu_custom_call.1} parent=1 // pred_region
      _
    $region29: #{tpu_custom_call.1} parent=1 // pred_fallthru
      _
    // Predicated region
    $region30: #{tpu_custom_call.1} parent=1 // pred_check
      _
    $region31: #{tpu_custom_call.1} parent=1 // pred_check_branch
      %73 = sbr.rel (0) target = $region33
    $region32: #{tpu_custom_call.1} parent=1 // pred_region
      _
    $region33: #{tpu_custom_call.1} parent=1 // pred_fallthru
      _
    // Predicated region
    $region34: #{tpu_custom_call.1} parent=1 // pred_check
      _
    $region35: #{tpu_custom_call.1} parent=1 // pred_check_branch
      %75 = sbr.rel (0) target = $region37
    $region36: #{tpu_custom_call.1} parent=1 // pred_region
      _
    $region37: #{tpu_custom_call.1} parent=1 // pred_fallthru
      _
    // Predicated region
    $region38: #{tpu_custom_call.1} parent=1 // pred_check
      _
    $region39: #{tpu_custom_call.1} parent=1 // pred_check_branch
      %77 = sbr.rel (0) target = $region41
    $region40: #{tpu_custom_call.1} parent=1 // pred_region
      %78 = dma.done [#allocation3], 512
    $region41: #{tpu_custom_call.1} parent=1 // pred_fallthru
      _
    // Predicated region
    $region42: #{tpu_custom_call.1} parent=1 // pred_check
      _
    $region43: #{tpu_custom_call.1} parent=1 // pred_check_branch
      %80 = sbr.rel (0) target = $region45
    $region44: #{tpu_custom_call.1} parent=1 // pred_region
      %81 = dma.done [#allocation6], 2048
    $region45: #{tpu_custom_call.1} parent=1 // pred_fallthru
      _
    // Predicated region
    $region46: #{tpu_custom_call.1} parent=1 // pred_check
      _
    $region47: #{tpu_custom_call.1} parent=1 // pred_check_branch
      %83 = sbr.rel (0) target = $region49
    $region48: #{tpu_custom_call.1} parent=1 // pred_region
      %84 = dma.done [#allocation6], 2048
    $region49: #{tpu_custom_call.1} parent=1 // pred_fallthru
      _
    // Predicated region
    $region50: #{tpu_custom_call.1} parent=1 // pred_check
      _
    $region51: #{tpu_custom_call.1} parent=1 // pred_check_branch
      %86 = sbr.rel (0) target = $region53
    $region52: #{tpu_custom_call.1} parent=1 // pred_region
      %87 = dma.done [#allocation9], 2048
    $region53: #{tpu_custom_call.1} parent=1 // pred_fallthru
      _
    %v88 = vld [vmem:[#allocation5] sm:$0xff]
    %v89 = vld [vmem:[#allocation5 + $0x8] sm:$0xff]
    %v90 = vld [vmem:[#allocation5 + $0x10] sm:$0xff]
    %v91 = vld [vmem:[#allocation5 + $0x18] sm:$0xff]
    %v92 = vld [vmem:[#allocation5 + $0x20] sm:$0xff]
    %v93 = vld [vmem:[#allocation5 + $0x28] sm:$0xff]
    %v94 = vld [vmem:[#allocation5 + $0x30] sm:$0xff]
    %v95 = vld [vmem:[#allocation5 + $0x38] sm:$0xff]
    %v96 = vld [vmem:[#allocation5 + $0x40] sm:$0xff]
    %v97 = vld [vmem:[#allocation5 + $0x48] sm:$0xff]
    %v98 = vld [vmem:[#allocation5 + $0x50] sm:$0xff]
    %v99 = vld [vmem:[#allocation5 + $0x58] sm:$0xff]
    %v100 = vld [vmem:[#allocation5 + $0x60] sm:$0xff]
    %v101 = vld [vmem:[#allocation5 + $0x68] sm:$0xff]
    %v102 = vld [vmem:[#allocation5 + $0x70] sm:$0xff]
    %v103 = vld [vmem:[#allocation5 + $0x78] sm:$0xff]
    %v104 = vld [vmem:[#allocation8] sm:$0xff]
    %v105 = vld [vmem:[#allocation8 + $0x8] sm:$0xff]
    %v106 = vld [vmem:[#allocation8 + $0x10] sm:$0xff]
    %v107 = vld [vmem:[#allocation8 + $0x18] sm:$0xff]
    %v108 = vld [vmem:[#allocation8 + $0x20] sm:$0xff]
    %v109 = vld [vmem:[#allocation8 + $0x28] sm:$0xff]
    %v110 = vld [vmem:[#allocation8 + $0x30] sm:$0xff]
    %v111 = vld [vmem:[#allocation8 + $0x38] sm:$0xff]
    %v112 = vld [vmem:[#allocation8 + $0x40] sm:$0xff]
    %v113 = vld [vmem:[#allocation8 + $0x48] sm:$0xff]
    %v114 = vld [vmem:[#allocation8 + $0x50] sm:$0xff]
    %v115 = vld [vmem:[#allocation8 + $0x58] sm:$0xff]
    %v116 = vld [vmem:[#allocation8 + $0x60] sm:$0xff]
    %v117 = vld [vmem:[#allocation8 + $0x68] sm:$0xff]
    %v118 = vld [vmem:[#allocation8 + $0x70] sm:$0xff]
    %v119 = vld [vmem:[#allocation8 + $0x78] sm:$0xff]
    %v120 = vld [vmem:[%s0] sm:$0xff]
    %v121 = vld [vmem:[%s0 + $0x8] sm:$0xff]
    %v122 = vld [vmem:[%s0 + $0x10] sm:$0xff]
    %v123 = vld [vmem:[%s0 + $0x18] sm:$0xff]
    %v124 = vld [vmem:[%s0 + $0x20] sm:$0xff]
    %v125 = vld [vmem:[%s0 + $0x28] sm:$0xff]
    %v126 = vld [vmem:[%s0 + $0x30] sm:$0xff]
    %v127 = vld [vmem:[%s0 + $0x38] sm:$0xff]
    %v128 = vld [vmem:[#allocation2] sm:$0xff]
    %v129 = vld [vmem:[#allocation2 + $0x8] sm:$0xff]
    %v130 = vld [vmem:[#allocation2 + $0x10] sm:$0xff]
    %v131 = vld [vmem:[#allocation2 + $0x18] sm:$0xff]
    %v132 = vld [vmem:[%s3] sm:$0x3]
    %v134 = vlaneseq
    %v135 = vshrl.u32 %v134, 7
    %v136 = vsub.s32 0, %v135
    %v137 = vrot.slane %v132, %v136
    %v138 = vlaneseq
    %v139 = vshrl.u32 %v138, 7
    %v140 = vsub.s32 1, %v139
    %v141 = vrot.slane %v132, %v140
    %vm144 = vcmask 130048
    %v146 = vsel %vm144, %v120, 0
    %v149 = vsel %vm144, %v121, 0
    %v152 = vsel %vm144, %v122, 0
    %v155 = vsel %vm144, %v123, 0
    %v158 = vsel %vm144, %v124, 0
    %v161 = vsel %vm144, %v125, 0
    %v164 = vsel %vm144, %v126, 0
    %v167 = vsel %vm144, %v127, 0
    %169 = vmatprep.subr.mxu0 0.0
    %170 = vmatpush1.msra.mxu0 0.0
    %171 = vmatprep.subr.mxu0 0.0
    %172 = vmatpush1.msra.mxu0 0.0
    %173 = vmatprep.subr.mxu0 0.0
    %174 = vmatpush1.msra.mxu0 0.0
    %175 = vmatprep.subr.mxu0 0.0
    %176 = vmatpush1.msra.mxu0 0.0
    %177 = vmatprep.subr.mxu0 0.0
    %178 = vmatpush1.msra.mxu0 0.0
    %179 = vmatprep.subr.mxu0 0.0
    %180 = vmatpush1.msra.mxu0 0.0
    %181 = vmatprep.subr.mxu0 0.0
    %182 = vmatpush1.msra.mxu0 0.0
    %183 = vmatprep.subr.mxu0 0.0
    %184 = vmatpush1.msra.mxu0 0.0
    %185 = vmatprep.subr.mxu0 0.0
    %186 = vmatpush1.msra.mxu0 0.0
    %187 = vmatprep.subr.mxu0 0.0
    %188 = vmatpush1.msra.mxu0 0.0
    %189 = vmatprep.subr.mxu0 0.0
    %190 = vmatpush1.msra.mxu0 0.0
    %191 = vmatprep.subr.mxu0 0.0
    %192 = vmatpush1.msra.mxu0 0.0
    %193 = vmatprep.subr.mxu0 0.0
    %194 = vmatpush1.msra.mxu0 0.0
    %195 = vmatprep.subr.mxu0 0.0
    %196 = vmatpush1.msra.mxu0 0.0
    %197 = vmatprep.subr.mxu0 %v131
    %198 = vmatpush1.msra.mxu0 %v130
    %199 = vmatprep.subr.mxu0 %v129
    %200 = vmatpush1.msra.mxu0 %v128
    %201 = vmatprep.subr.mxu0 0.0
    %202 = vmatpush2.msra.mxu0 0.0
    %203 = vmatprep.subr.mxu0 0.0
    %204 = vmatpush2.msra.mxu0 0.0
    %205 = vmatprep.subr.mxu0 0.0
    %206 = vmatpush2.msra.mxu0 0.0
    %207 = vmatprep.subr.mxu0 0.0
    %208 = vmatpush2.msra.mxu0 0.0
    %209 = vmatprep.subr.mxu0 0.0
    %210 = vmatpush2.msra.mxu0 0.0
    %211 = vmatprep.subr.mxu0 0.0
    %212 = vmatpush2.msra.mxu0 0.0
    %213 = vmatprep.subr.mxu0 0.0
    %214 = vmatpush2.msra.mxu0 0.0
    %215 = vmatprep.subr.mxu0 0.0
    %216 = vmatpush2.msra.mxu0 0.0
    %217 = vmatprep.subr.mxu0 0.0
    %218 = vmatpush2.msra.mxu0 0.0
    %219 = vmatprep.subr.mxu0 0.0
    %220 = vmatpush2.msra.mxu0 0.0
    %221 = vmatprep.subr.mxu0 0.0
    %222 = vmatpush2.msra.mxu0 0.0
    %223 = vmatprep.subr.mxu0 0.0
    %224 = vmatpush2.msra.mxu0 0.0
    %225 = vmatprep.subr.mxu0 0.0
    %226 = vmatpush2.msra.mxu0 0.0
    %227 = vmatprep.subr.mxu0 0.0
    %228 = vmatpush2.msra.mxu0 0.0
    %229 = vmatprep.subr.mxu0 0.0
    %230 = vmatpush2.msra.mxu0 0.0
    %231 = vmatprep.subr.mxu0 0.0
    %232 = vmatpush2.msra.mxu0 0.0
    %233 = vmatprep.mubr.f32.mxu0 0.0
    %234 = vmatmul.mubr.f32.gmra.mxu0 %v146
    %v235 = vpop.f32.mrf.mxu0
    %v236 = vadd.f32 %v137, %v235
    %v237 = vpop.f32.mrf.mxu0
    %v238 = vadd.f32 %v141, %v237
    %239 = vmatprep.mubr.f32.mxu0 0.0
    %240 = vmatmul.mubr.f32.gmra.mxu0 %v149
    %v241 = vpop.f32.mrf.mxu0
    %v242 = vadd.f32 %v137, %v241
    %v243 = vpop.f32.mrf.mxu0
    %v244 = vadd.f32 %v141, %v243
    %245 = vmatprep.mubr.f32.mxu0 0.0
    %246 = vmatmul.mubr.f32.gmra.mxu0 %v152
    %v247 = vpop.f32.mrf.mxu0
    %v248 = vadd.f32 %v137, %v247
    %v249 = vpop.f32.mrf.mxu0
    %v250 = vadd.f32 %v141, %v249
    %251 = vmatprep.mubr.f32.mxu0 0.0
    %252 = vmatmul.mubr.f32.gmra.mxu0 %v155
    %v253 = vpop.f32.mrf.mxu0
    %v254 = vadd.f32 %v137, %v253
    %v255 = vpop.f32.mrf.mxu0
    %v256 = vadd.f32 %v141, %v255
    %257 = vmatprep.mubr.f32.mxu0 0.0
    %258 = vmatmul.mubr.f32.gmra.mxu0 %v158
    %v259 = vpop.f32.mrf.mxu0
    %v260 = vadd.f32 %v137, %v259
    %v261 = vpop.f32.mrf.mxu0
    %v262 = vadd.f32 %v141, %v261
    %263 = vmatprep.mubr.f32.mxu0 0.0
    %264 = vmatmul.mubr.f32.gmra.mxu0 %v161
    %v265 = vpop.f32.mrf.mxu0
    %v266 = vadd.f32 %v137, %v265
    %v267 = vpop.f32.mrf.mxu0
    %v268 = vadd.f32 %v141, %v267
    %269 = vmatprep.mubr.f32.mxu0 0.0
    %270 = vmatmul.mubr.f32.gmra.mxu0 %v164
    %v271 = vpop.f32.mrf.mxu0
    %v272 = vadd.f32 %v137, %v271
    %v273 = vpop.f32.mrf.mxu0
    %v274 = vadd.f32 %v141, %v273
    %275 = vmatprep.mubr.f32.mxu0 0.0
    %276 = vmatmul.mubr.f32.gmra.mxu0 %v167
    %v277 = vpop.f32.mrf.mxu0
    %v278 = vadd.f32 %v137, %v277
    %v279 = vpop.f32.mrf.mxu0
    %v280 = vadd.f32 %v141, %v279
    %281 = vdwg.mxu0
    %vm282 = vcmask 523264
    %v284 = vsel %vm282, 0.0, 0
    %286 = vmatprep.subr.mxu0 0.0
    %287 = vmatpush1.msra.mxu0 0.0
    %288 = vmatprep.subr.mxu0 0.0
    %289 = vmatpush1.msra.mxu0 0.0
    %290 = vmatprep.subr.mxu0 0.0
    %291 = vmatpush1.msra.mxu0 0.0
    %292 = vmatprep.subr.mxu0 0.0
    %293 = vmatpush1.msra.mxu0 0.0
    %294 = vmatprep.subr.mxu0 0.0
    %295 = vmatpush1.msra.mxu0 0.0
    %296 = vmatprep.subr.mxu0 0.0
    %297 = vmatpush1.msra.mxu0 0.0
    %298 = vmatprep.subr.mxu0 0.0
    %299 = vmatpush1.msra.mxu0 0.0
    %300 = vmatprep.subr.mxu0 0.0
    %301 = vmatpush1.msra.mxu0 0.0
    %302 = vmatprep.subr.mxu0 %v103
    %303 = vmatpush1.msra.mxu0 %v102
    %304 = vmatprep.subr.mxu0 %v101
    %305 = vmatpush1.msra.mxu0 %v100
    %306 = vmatprep.subr.mxu0 %v99
    %307 = vmatpush1.msra.mxu0 %v98
    %308 = vmatprep.subr.mxu0 %v97
    %309 = vmatpush1.msra.mxu0 %v96
    %310 = vmatprep.subr.mxu0 %v95
    %311 = vmatpush1.msra.mxu0 %v94
    %312 = vmatprep.subr.mxu0 %v93
    %313 = vmatpush1.msra.mxu0 %v92
    %314 = vmatprep.subr.mxu0 %v91
    %315 = vmatpush1.msra.mxu0 %v90
    %316 = vmatprep.subr.mxu0 %v89
    %317 = vmatpush1.msra.mxu0 %v88
    %318 = vmatprep.subr.mxu0 0.0
    %319 = vmatpush2.msra.mxu0 0.0
    %320 = vmatprep.subr.mxu0 0.0
    %321 = vmatpush2.msra.mxu0 0.0
    %322 = vmatprep.subr.mxu0 0.0
    %323 = vmatpush2.msra.mxu0 0.0
    %324 = vmatprep.subr.mxu0 0.0
    %325 = vmatpush2.msra.mxu0 0.0
    %326 = vmatprep.subr.mxu0 0.0
    %327 = vmatpush2.msra.mxu0 0.0
    %328 = vmatprep.subr.mxu0 0.0
    %329 = vmatpush2.msra.mxu0 0.0
    %330 = vmatprep.subr.mxu0 0.0
    %331 = vmatpush2.msra.mxu0 0.0
    %332 = vmatprep.subr.mxu0 0.0
    %333 = vmatpush2.msra.mxu0 0.0
    %334 = vmatprep.subr.mxu0 0.0
    %335 = vmatpush2.msra.mxu0 0.0
    %336 = vmatprep.subr.mxu0 0.0
    %337 = vmatpush2.msra.mxu0 0.0
    %338 = vmatprep.subr.mxu0 0.0
    %339 = vmatpush2.msra.mxu0 0.0
    %340 = vmatprep.subr.mxu0 0.0
    %341 = vmatpush2.msra.mxu0 0.0
    %342 = vmatprep.subr.mxu0 0.0
    %343 = vmatpush2.msra.mxu0 0.0
    %344 = vmatprep.subr.mxu0 0.0
    %345 = vmatpush2.msra.mxu0 0.0
    %346 = vmatprep.subr.mxu0 0.0
    %347 = vmatpush2.msra.mxu0 0.0
    %348 = vmatprep.subr.mxu0 0.0
    %349 = vmatpush2.msra.mxu0 0.0
    %350 = vmatprep.mubr.f32.mxu0 0.0
    %351 = vmatmul.mubr.f32.gmra.mxu0 %v284
    %v352 = vpop.f32.mrf.mxu0
    %v353 = vadd.f32 0.0, %v352
    %v354 = vpop.f32.mrf.mxu0
    %v355 = vadd.f32 0.0, %v354
    %356 = vdwg.mxu0
    %v359 = vrot.slane %v353, 1
    %v360 = vrot.slane %v355, 1
    %v361 = vrot.slane %v353, 2
    %v362 = vrot.slane %v355, 2
    %v363 = vrot.slane %v353, 3
    %v364 = vrot.slane %v355, 3
    %v365 = vrot.slane %v353, 4
    %v366 = vrot.slane %v355, 4
    %v367 = vrot.slane %v353, 5
    %v368 = vrot.slane %v355, 5
    %v369 = vrot.slane %v353, 6
    %v370 = vrot.slane %v355, 6
    %v371 = vrot.slane %v353, 7
    %v372 = vrot.slane %v355, 7
    %v389 = vadd.f32 %v236, %v353
    %v390 = vadd.f32 %v238, %v355
    %v391 = vadd.f32 %v242, %v359
    %v392 = vadd.f32 %v244, %v360
    %v393 = vadd.f32 %v248, %v361
    %v394 = vadd.f32 %v250, %v362
    %v395 = vadd.f32 %v254, %v363
    %v396 = vadd.f32 %v256, %v364
    %v397 = vadd.f32 %v260, %v365
    %v398 = vadd.f32 %v262, %v366
    %v399 = vadd.f32 %v266, %v367
    %v400 = vadd.f32 %v268, %v368
    %v401 = vadd.f32 %v272, %v369
    %v402 = vadd.f32 %v274, %v370
    %v403 = vadd.f32 %v278, %v371
    %v404 = vadd.f32 %v280, %v372
    %v405 = vxor.u32 %v389, 2147483648
    %v406 = vxor.u32 %v391, 2147483648
    %v407 = vxor.u32 %v393, 2147483648
    %v408 = vxor.u32 %v395, 2147483648
    %v409 = vxor.u32 %v397, 2147483648
    %v410 = vxor.u32 %v399, 2147483648
    %v411 = vxor.u32 %v401, 2147483648
    %v412 = vxor.u32 %v403, 2147483648
    %v413 = vmul.f32 %v405, 1.442695
    %v414 = vpow.pop %v413
    %v415 = vmul.f32 %v406, 1.442695
    %v416 = vpow.pop %v415
    %v417 = vmul.f32 %v407, 1.442695
    %v418 = vpow.pop %v417
    %v419 = vmul.f32 %v408, 1.442695
    %v420 = vpow.pop %v419
    %v421 = vmul.f32 %v409, 1.442695
    %v422 = vpow.pop %v421
    %v423 = vmul.f32 %v410, 1.442695
    %v424 = vpow.pop %v423
    %v425 = vmul.f32 %v411, 1.442695
    %v426 = vpow.pop %v425
    %v427 = vmul.f32 %v412, 1.442695
    %v428 = vpow.pop %v427
    %v429 = vadd.f32 %v414, 1.0
    %v430 = vadd.f32 %v416, 1.0
    %v431 = vadd.f32 %v418, 1.0
    %v432 = vadd.f32 %v420, 1.0
    %v433 = vadd.f32 %v422, 1.0
    %v434 = vadd.f32 %v424, 1.0
    %v435 = vadd.f32 %v426, 1.0
    %v436 = vadd.f32 %v428, 1.0
    %v437 = vrcp.pop %v429
    %v438 = vmul.f32 1.0, %v437
    %v439 = vrcp.pop %v430
    %v440 = vmul.f32 1.0, %v439
    %v441 = vrcp.pop %v431
    %v442 = vmul.f32 1.0, %v441
    %v443 = vrcp.pop %v432
    %v444 = vmul.f32 1.0, %v443
    %v445 = vrcp.pop %v433
    %v446 = vmul.f32 1.0, %v445
    %v447 = vrcp.pop %v434
    %v448 = vmul.f32 1.0, %v447
    %v449 = vrcp.pop %v435
    %v450 = vmul.f32 1.0, %v449
    %v451 = vrcp.pop %v436
    %v452 = vmul.f32 1.0, %v451
    %v453 = vtanh.pop %v390
    %v454 = vtanh.pop %v392
    %v455 = vtanh.pop %v394
    %v456 = vtanh.pop %v396
    %v457 = vtanh.pop %v398
    %v458 = vtanh.pop %v400
    %v459 = vtanh.pop %v402
    %v460 = vtanh.pop %v404
    %v461 = vxor.u32 %v390, 2147483648
    %v462 = vxor.u32 %v392, 2147483648
    %v463 = vxor.u32 %v394, 2147483648
    %v464 = vxor.u32 %v396, 2147483648
    %v465 = vxor.u32 %v398, 2147483648
    %v466 = vxor.u32 %v400, 2147483648
    %v467 = vxor.u32 %v402, 2147483648
    %v468 = vxor.u32 %v404, 2147483648
    %v469 = vmul.f32 %v461, 1.442695
    %v470 = vpow.pop %v469
    %v471 = vmul.f32 %v462, 1.442695
    %v472 = vpow.pop %v471
    %v473 = vmul.f32 %v463, 1.442695
    %v474 = vpow.pop %v473
    %v475 = vmul.f32 %v464, 1.442695
    %v476 = vpow.pop %v475
    %v477 = vmul.f32 %v465, 1.442695
    %v478 = vpow.pop %v477
    %v479 = vmul.f32 %v466, 1.442695
    %v480 = vpow.pop %v479
    %v481 = vmul.f32 %v467, 1.442695
    %v482 = vpow.pop %v481
    %v483 = vmul.f32 %v468, 1.442695
    %v484 = vpow.pop %v483
    %v485 = vadd.f32 %v470, 1.0
    %v486 = vadd.f32 %v472, 1.0
    %v487 = vadd.f32 %v474, 1.0
    %v488 = vadd.f32 %v476, 1.0
    %v489 = vadd.f32 %v478, 1.0
    %v490 = vadd.f32 %v480, 1.0
    %v491 = vadd.f32 %v482, 1.0
    %v492 = vadd.f32 %v484, 1.0
    %v493 = vrcp.pop %v485
    %v494 = vmul.f32 1.0, %v493
    %v495 = vrcp.pop %v486
    %v496 = vmul.f32 1.0, %v495
    %v497 = vrcp.pop %v487
    %v498 = vmul.f32 1.0, %v497
    %v499 = vrcp.pop %v488
    %v500 = vmul.f32 1.0, %v499
    %v501 = vrcp.pop %v489
    %v502 = vmul.f32 1.0, %v501
    %v503 = vrcp.pop %v490
    %v504 = vmul.f32 1.0, %v503
    %v505 = vrcp.pop %v491
    %v506 = vmul.f32 1.0, %v505
    %v507 = vrcp.pop %v492
    %v508 = vmul.f32 1.0, %v507
    %v509 = vmul.f32 %v438, 0.0
    %v510 = vmul.f32 %v440, 0.0
    %v511 = vmul.f32 %v442, 0.0
    %v512 = vmul.f32 %v444, 0.0
    %v513 = vmul.f32 %v446, 0.0
    %v514 = vmul.f32 %v448, 0.0
    %v515 = vmul.f32 %v450, 0.0
    %v516 = vmul.f32 %v452, 0.0
    %v517 = vmul.f32 %v438, %v453
    %v518 = vmul.f32 %v440, %v454
    %v519 = vmul.f32 %v442, %v455
    %v520 = vmul.f32 %v444, %v456
    %v521 = vmul.f32 %v446, %v457
    %v522 = vmul.f32 %v448, %v458
    %v523 = vmul.f32 %v450, %v459
    %v524 = vmul.f32 %v452, %v460
    %533 = vrot.lane.b32.xlu0 %v517, 64
    %v534 = vpop.permute.xlu0 %533
    %535 = vrot.lane.b32.xlu0 %v518, 64
    %v536 = vpop.permute.xlu0 %535
    %537 = vrot.lane.b32.xlu0 %v519, 64
    %v538 = vpop.permute.xlu0 %537
    %539 = vrot.lane.b32.xlu0 %v520, 64
    %v540 = vpop.permute.xlu0 %539
    %541 = vrot.lane.b32.xlu0 %v521, 64
    %v542 = vpop.permute.xlu0 %541
    %543 = vrot.lane.b32.xlu0 %v522, 64
    %v544 = vpop.permute.xlu0 %543
    %545 = vrot.lane.b32.xlu0 %v523, 64
    %v546 = vpop.permute.xlu0 %545
    %547 = vrot.lane.b32.xlu0 %v524, 64
    %v548 = vpop.permute.xlu0 %547
    %v557 = vadd.f32 %v509, %v534
    %v558 = vadd.f32 %v510, %v536
    %v559 = vadd.f32 %v511, %v538
    %v560 = vadd.f32 %v512, %v540
    %v561 = vadd.f32 %v513, %v542
    %v562 = vadd.f32 %v514, %v544
    %v563 = vadd.f32 %v515, %v546
    %v564 = vadd.f32 %v516, %v548
    %v565 = vtanh.pop %v557
    %v566 = vtanh.pop %v558
    %v567 = vtanh.pop %v559
    %v568 = vtanh.pop %v560
    %v569 = vtanh.pop %v561
    %v570 = vtanh.pop %v562
    %v571 = vtanh.pop %v563
    %v572 = vtanh.pop %v564
    %v573 = vmul.f32 %v494, %v565
    %v574 = vmul.f32 %v496, %v566
    %v575 = vmul.f32 %v498, %v567
    %v576 = vmul.f32 %v500, %v568
    %v577 = vmul.f32 %v502, %v569
    %v578 = vmul.f32 %v504, %v570
    %v579 = vmul.f32 %v506, %v571
    %v580 = vmul.f32 %v508, %v572
    %v589 = vrot.slane %v574, 7
    %vm590 = vcmask 1041409
    %v591 = vsel %vm590, %v589, %v573
    %v592 = vrot.slane %v575, 6
    %vm593 = vcmask 1042434
    %v594 = vsel %vm593, %v592, %v591
    %v595 = vrot.slane %v576, 5
    %vm596 = vcmask 1043459
    %v597 = vsel %vm596, %v595, %v594
    %v598 = vrot.slane %v577, 4
    %vm599 = vcmask 1044484
    %v600 = vsel %vm599, %v598, %v597
    %v601 = vrot.slane %v578, 3
    %vm602 = vcmask 1045509
    %v603 = vsel %vm602, %v601, %v600
    %v604 = vrot.slane %v579, 2
    %vm605 = vcmask 1046534
    %v606 = vsel %vm605, %v604, %v603
    %v607 = vrot.slane %v580, 1
    %vm608 = vcmask 1047559
    %v609 = vsel %vm608, %v607, %v606
    %610 = vrot.lane.b32.xlu0 %v609, 64
    %v611 = vpop.permute.xlu0 %610
    %v612 = vsel %vm282, %v611, 0
    %614 = vmatprep.subr.mxu0 0.0
    %615 = vmatpush1.msra.mxu0 0.0
    %616 = vmatprep.subr.mxu0 0.0
    %617 = vmatpush1.msra.mxu0 0.0
    %618 = vmatprep.subr.mxu0 0.0
    %619 = vmatpush1.msra.mxu0 0.0
    %620 = vmatprep.subr.mxu0 0.0
    %621 = vmatpush1.msra.mxu0 0.0
    %622 = vmatprep.subr.mxu0 0.0
    %623 = vmatpush1.msra.mxu0 0.0
    %624 = vmatprep.subr.mxu0 0.0
    %625 = vmatpush1.msra.mxu0 0.0
    %626 = vmatprep.subr.mxu0 0.0
    %627 = vmatpush1.msra.mxu0 0.0
    %628 = vmatprep.subr.mxu0 0.0
    %629 = vmatpush1.msra.mxu0 0.0
    %630 = vmatprep.subr.mxu0 %v103
    %631 = vmatpush1.msra.mxu0 %v102
    %632 = vmatprep.subr.mxu0 %v101
    %633 = vmatpush1.msra.mxu0 %v100
    %634 = vmatprep.subr.mxu0 %v99
    %635 = vmatpush1.msra.mxu0 %v98
    %636 = vmatprep.subr.mxu0 %v97
    %637 = vmatpush1.msra.mxu0 %v96
    %638 = vmatprep.subr.mxu0 %v95
    %639 = vmatpush1.msra.mxu0 %v94
    %640 = vmatprep.subr.mxu0 %v93
    %641 = vmatpush1.msra.mxu0 %v92
    %642 = vmatprep.subr.mxu0 %v91
    %643 = vmatpush1.msra.mxu0 %v90
    %644 = vmatprep.subr.mxu0 %v89
    %645 = vmatpush1.msra.mxu0 %v88
    %646 = vmatprep.subr.mxu0 0.0
    %647 = vmatpush2.msra.mxu0 0.0
    %648 = vmatprep.subr.mxu0 0.0
    %649 = vmatpush2.msra.mxu0 0.0
    %650 = vmatprep.subr.mxu0 0.0
    %651 = vmatpush2.msra.mxu0 0.0
    %652 = vmatprep.subr.mxu0 0.0
    %653 = vmatpush2.msra.mxu0 0.0
    %654 = vmatprep.subr.mxu0 0.0
    %655 = vmatpush2.msra.mxu0 0.0
    %656 = vmatprep.subr.mxu0 0.0
    %657 = vmatpush2.msra.mxu0 0.0
    %658 = vmatprep.subr.mxu0 0.0
    %659 = vmatpush2.msra.mxu0 0.0
    %660 = vmatprep.subr.mxu0 0.0
    %661 = vmatpush2.msra.mxu0 0.0
    %662 = vmatprep.subr.mxu0 0.0
    %663 = vmatpush2.msra.mxu0 0.0
    %664 = vmatprep.subr.mxu0 0.0
    %665 = vmatpush2.msra.mxu0 0.0
    %666 = vmatprep.subr.mxu0 0.0
    %667 = vmatpush2.msra.mxu0 0.0
    %668 = vmatprep.subr.mxu0 0.0
    %669 = vmatpush2.msra.mxu0 0.0
    %670 = vmatprep.subr.mxu0 0.0
    %671 = vmatpush2.msra.mxu0 0.0
    %672 = vmatprep.subr.mxu0 0.0
    %673 = vmatpush2.msra.mxu0 0.0
    %674 = vmatprep.subr.mxu0 0.0
    %675 = vmatpush2.msra.mxu0 0.0
    %676 = vmatprep.subr.mxu0 0.0
    %677 = vmatpush2.msra.mxu0 0.0
    %678 = vmatprep.mubr.f32.mxu0 0.0
    %679 = vmatmul.mubr.f32.gmra.mxu0 %v612
    %v680 = vpop.f32.mrf.mxu0
    %v681 = vadd.f32 0.0, %v680
    %v682 = vpop.f32.mrf.mxu0
    %v683 = vadd.f32 0.0, %v682
    %684 = vdwg.mxu0
    %v687 = vrot.slane %v681, 7
    %v688 = vrot.slane %v683, 7
    %v689 = vrot.slane %v681, 1
    %v690 = vrot.slane %v683, 1
    %v691 = vrot.slane %v681, 2
    %v692 = vrot.slane %v683, 2
    %v693 = vrot.slane %v681, 3
    %v694 = vrot.slane %v683, 3
    %v695 = vrot.slane %v681, 4
    %v696 = vrot.slane %v683, 4
    %v697 = vrot.slane %v681, 5
    %v698 = vrot.slane %v683, 5
    %v699 = vrot.slane %v681, 6
    %v700 = vrot.slane %v683, 6
    %v717 = vadd.f32 %v236, %v687
    %v718 = vadd.f32 %v238, %v688
    %v719 = vadd.f32 %v242, %v681
    %v720 = vadd.f32 %v244, %v683
    %v721 = vadd.f32 %v248, %v689
    %v722 = vadd.f32 %v250, %v690
    %v723 = vadd.f32 %v254, %v691
    %v724 = vadd.f32 %v256, %v692
    %v725 = vadd.f32 %v260, %v693
    %v726 = vadd.f32 %v262, %v694
    %v727 = vadd.f32 %v266, %v695
    %v728 = vadd.f32 %v268, %v696
    %v729 = vadd.f32 %v272, %v697
    %v730 = vadd.f32 %v274, %v698
    %v731 = vadd.f32 %v278, %v699
    %v732 = vadd.f32 %v280, %v700
    %v733 = vxor.u32 %v717, 2147483648
    %v734 = vxor.u32 %v719, 2147483648
    %v735 = vxor.u32 %v721, 2147483648
    %v736 = vxor.u32 %v723, 2147483648
    %v737 = vxor.u32 %v725, 2147483648
    %v738 = vxor.u32 %v727, 2147483648
    %v739 = vxor.u32 %v729, 2147483648
    %v740 = vxor.u32 %v731, 2147483648
    %v741 = vmul.f32 %v733, 1.442695
    %v742 = vpow.pop %v741
    %v743 = vmul.f32 %v734, 1.442695
    %v744 = vpow.pop %v743
    %v745 = vmul.f32 %v735, 1.442695
    %v746 = vpow.pop %v745
    %v747 = vmul.f32 %v736, 1.442695
    %v748 = vpow.pop %v747
    %v749 = vmul.f32 %v737, 1.442695
    %v750 = vpow.pop %v749
    %v751 = vmul.f32 %v738, 1.442695
    %v752 = vpow.pop %v751
    %v753 = vmul.f32 %v739, 1.442695
    %v754 = vpow.pop %v753
    %v755 = vmul.f32 %v740, 1.442695
    %v756 = vpow.pop %v755
    %v757 = vadd.f32 %v742, 1.0
    %v758 = vadd.f32 %v744, 1.0
    %v759 = vadd.f32 %v746, 1.0
    %v760 = vadd.f32 %v748, 1.0
    %v761 = vadd.f32 %v750, 1.0
    %v762 = vadd.f32 %v752, 1.0
    %v763 = vadd.f32 %v754, 1.0
    %v764 = vadd.f32 %v756, 1.0
    %v765 = vrcp.pop %v757
    %v766 = vmul.f32 1.0, %v765
    %v767 = vrcp.pop %v758
    %v768 = vmul.f32 1.0, %v767
    %v769 = vrcp.pop %v759
    %v770 = vmul.f32 1.0, %v769
    %v771 = vrcp.pop %v760
    %v772 = vmul.f32 1.0, %v771
    %v773 = vrcp.pop %v761
    %v774 = vmul.f32 1.0, %v773
    %v775 = vrcp.pop %v762
    %v776 = vmul.f32 1.0, %v775
    %v777 = vrcp.pop %v763
    %v778 = vmul.f32 1.0, %v777
    %v779 = vrcp.pop %v764
    %v780 = vmul.f32 1.0, %v779
    %v781 = vtanh.pop %v718
    %v782 = vtanh.pop %v720
    %v783 = vtanh.pop %v722
    %v784 = vtanh.pop %v724
    %v785 = vtanh.pop %v726
    %v786 = vtanh.pop %v728
    %v787 = vtanh.pop %v730
    %v788 = vtanh.pop %v732
    %v789 = vxor.u32 %v718, 2147483648
    %v790 = vxor.u32 %v720, 2147483648
    %v791 = vxor.u32 %v722, 2147483648
    %v792 = vxor.u32 %v724, 2147483648
    %v793 = vxor.u32 %v726, 2147483648
    %v794 = vxor.u32 %v728, 2147483648
    %v795 = vxor.u32 %v730, 2147483648
    %v796 = vxor.u32 %v732, 2147483648
    %v797 = vmul.f32 %v789, 1.442695
    %v798 = vpow.pop %v797
    %v799 = vmul.f32 %v790, 1.442695
    %v800 = vpow.pop %v799
    %v801 = vmul.f32 %v791, 1.442695
    %v802 = vpow.pop %v801
    %v803 = vmul.f32 %v792, 1.442695
    %v804 = vpow.pop %v803
    %v805 = vmul.f32 %v793, 1.442695
    %v806 = vpow.pop %v805
    %v807 = vmul.f32 %v794, 1.442695
    %v808 = vpow.pop %v807
    %v809 = vmul.f32 %v795, 1.442695
    %v810 = vpow.pop %v809
    %v811 = vmul.f32 %v796, 1.442695
    %v812 = vpow.pop %v811
    %v813 = vadd.f32 %v798, 1.0
    %v814 = vadd.f32 %v800, 1.0
    %v815 = vadd.f32 %v802, 1.0
    %v816 = vadd.f32 %v804, 1.0
    %v817 = vadd.f32 %v806, 1.0
    %v818 = vadd.f32 %v808, 1.0
    %v819 = vadd.f32 %v810, 1.0
    %v820 = vadd.f32 %v812, 1.0
    %v821 = vrcp.pop %v813
    %v822 = vmul.f32 1.0, %v821
    %v823 = vrcp.pop %v814
    %v824 = vmul.f32 1.0, %v823
    %v825 = vrcp.pop %v815
    %v826 = vmul.f32 1.0, %v825
    %v827 = vrcp.pop %v816
    %v828 = vmul.f32 1.0, %v827
    %v829 = vrcp.pop %v817
    %v830 = vmul.f32 1.0, %v829
    %v831 = vrcp.pop %v818
    %v832 = vmul.f32 1.0, %v831
    %v833 = vrcp.pop %v819
    %v834 = vmul.f32 1.0, %v833
    %v835 = vrcp.pop %v820
    %v836 = vmul.f32 1.0, %v835
    %v845 = vrot.slane %v557, 7
    %v846 = vrot.slane %v558, 7
    %v847 = vrot.slane %v559, 7
    %v848 = vrot.slane %v560, 7
    %v849 = vrot.slane %v561, 7
    %v850 = vrot.slane %v562, 7
    %v851 = vrot.slane %v563, 7
    %v852 = vrot.slane %v564, 7
    %v861 = vmul.f32 %v766, %v845
    %v862 = vmul.f32 %v768, %v846
    %v863 = vmul.f32 %v770, %v847
    %v864 = vmul.f32 %v772, %v848
    %v865 = vmul.f32 %v774, %v849
    %v866 = vmul.f32 %v776, %v850
    %v867 = vmul.f32 %v778, %v851
    %v868 = vmul.f32 %v780, %v852
    %v869 = vmul.f32 %v766, %v781
    %v870 = vmul.f32 %v768, %v782
    %v871 = vmul.f32 %v770, %v783
    %v872 = vmul.f32 %v772, %v784
    %v873 = vmul.f32 %v774, %v785
    %v874 = vmul.f32 %v776, %v786
    %v875 = vmul.f32 %v778, %v787
    %v876 = vmul.f32 %v780, %v788
    %885 = vrot.lane.b32.xlu0 %v869, 64
    %v886 = vpop.permute.xlu0 %885
    %887 = vrot.lane.b32.xlu0 %v870, 64
    %v888 = vpop.permute.xlu0 %887
    %889 = vrot.lane.b32.xlu0 %v871, 64
    %v890 = vpop.permute.xlu0 %889
    %891 = vrot.lane.b32.xlu0 %v872, 64
    %v892 = vpop.permute.xlu0 %891
    %893 = vrot.lane.b32.xlu0 %v873, 64
    %v894 = vpop.permute.xlu0 %893
    %895 = vrot.lane.b32.xlu0 %v874, 64
    %v896 = vpop.permute.xlu0 %895
    %897 = vrot.lane.b32.xlu0 %v875, 64
    %v898 = vpop.permute.xlu0 %897
    %899 = vrot.lane.b32.xlu0 %v876, 64
    %v900 = vpop.permute.xlu0 %899
    %v909 = vadd.f32 %v861, %v886
    %v910 = vadd.f32 %v862, %v888
    %v911 = vadd.f32 %v863, %v890
    %v912 = vadd.f32 %v864, %v892
    %v913 = vadd.f32 %v865, %v894
    %v914 = vadd.f32 %v866, %v896
    %v915 = vadd.f32 %v867, %v898
    %v916 = vadd.f32 %v868, %v900
    %v917 = vtanh.pop %v909
    %v918 = vtanh.pop %v910
    %v919 = vtanh.pop %v911
    %v920 = vtanh.pop %v912
    %v921 = vtanh.pop %v913
    %v922 = vtanh.pop %v914
    %v923 = vtanh.pop %v915
    %v924 = vtanh.pop %v916
    %v925 = vmul.f32 %v822, %v917
    %v926 = vmul.f32 %v824, %v918
    %v927 = vmul.f32 %v826, %v919
    %v928 = vmul.f32 %v828, %v920
    %v929 = vmul.f32 %v830, %v921
    %v930 = vmul.f32 %v832, %v922
    %v931 = vmul.f32 %v834, %v923
    %v932 = vmul.f32 %v836, %v924
    %v941 = vrot.slane %v925, 1
    %v942 = vrot.slane %v926, 1
    %v943 = vrot.slane %v927, 1
    %v944 = vrot.slane %v928, 1
    %v945 = vrot.slane %v929, 1
    %v946 = vrot.slane %v930, 1
    %v947 = vrot.slane %v931, 1
    %v948 = vrot.slane %v932, 1
    %v957 = vmax.f32 %v573, %v941
    %v958 = vmax.f32 %v574, %v942
    %v959 = vmax.f32 %v575, %v943
    %v960 = vmax.f32 %v576, %v944
    %v961 = vmax.f32 %v577, %v945
    %v962 = vmax.f32 %v578, %v946
    %v963 = vmax.f32 %v579, %v947
    %v964 = vmax.f32 %v580, %v948
    %v965 = vsel %vm590, %v926, %v941
    %v966 = vrot.slane %v927, 7
    %v967 = vsel %vm593, %v966, %v965
    %v968 = vrot.slane %v928, 6
    %v969 = vsel %vm596, %v968, %v967
    %v970 = vrot.slane %v929, 5
    %v971 = vsel %vm599, %v970, %v969
    %v972 = vrot.slane %v930, 4
    %v973 = vsel %vm602, %v972, %v971
    %v974 = vrot.slane %v931, 3
    %v975 = vsel %vm605, %v974, %v973
    %v976 = vrot.slane %v932, 2
    %v977 = vsel %vm608, %v976, %v975
    %978 = vrot.lane.b32.xlu0 %v977, 64
    %v979 = vpop.permute.xlu0 %978
    %v980 = vsel %vm282, %v979, 0
    %982 = vmatprep.subr.mxu0 0.0
    %983 = vmatpush1.msra.mxu0 0.0
    %984 = vmatprep.subr.mxu0 0.0
    %985 = vmatpush1.msra.mxu0 0.0
    %986 = vmatprep.subr.mxu0 0.0
    %987 = vmatpush1.msra.mxu0 0.0
    %988 = vmatprep.subr.mxu0 0.0
    %989 = vmatpush1.msra.mxu0 0.0
    %990 = vmatprep.subr.mxu0 0.0
    %991 = vmatpush1.msra.mxu0 0.0
    %992 = vmatprep.subr.mxu0 0.0
    %993 = vmatpush1.msra.mxu0 0.0
    %994 = vmatprep.subr.mxu0 0.0
    %995 = vmatpush1.msra.mxu0 0.0
    %996 = vmatprep.subr.mxu0 0.0
    %997 = vmatpush1.msra.mxu0 0.0
    %998 = vmatprep.subr.mxu0 %v103
    %999 = vmatpush1.msra.mxu0 %v102
    %1000 = vmatprep.subr.mxu0 %v101
    %1001 = vmatpush1.msra.mxu0 %v100
    %1002 = vmatprep.subr.mxu0 %v99
    %1003 = vmatpush1.msra.mxu0 %v98
    %1004 = vmatprep.subr.mxu0 %v97
    %1005 = vmatpush1.msra.mxu0 %v96
    %1006 = vmatprep.subr.mxu0 %v95
    %1007 = vmatpush1.msra.mxu0 %v94
    %1008 = vmatprep.subr.mxu0 %v93
    %1009 = vmatpush1.msra.mxu0 %v92
    %1010 = vmatprep.subr.mxu0 %v91
    %1011 = vmatpush1.msra.mxu0 %v90
    %1012 = vmatprep.subr.mxu0 %v89
    %1013 = vmatpush1.msra.mxu0 %v88
    %1014 = vmatprep.subr.mxu0 0.0
    %1015 = vmatpush2.msra.mxu0 0.0
    %1016 = vmatprep.subr.mxu0 0.0
    %1017 = vmatpush2.msra.mxu0 0.0
    %1018 = vmatprep.subr.mxu0 0.0
    %1019 = vmatpush2.msra.mxu0 0.0
    %1020 = vmatprep.subr.mxu0 0.0
    %1021 = vmatpush2.msra.mxu0 0.0
    %1022 = vmatprep.subr.mxu0 0.0
    %1023 = vmatpush2.msra.mxu0 0.0
    %1024 = vmatprep.subr.mxu0 0.0
    %1025 = vmatpush2.msra.mxu0 0.0
    %1026 = vmatprep.subr.mxu0 0.0
    %1027 = vmatpush2.msra.mxu0 0.0
    %1028 = vmatprep.subr.mxu0 0.0
    %1029 = vmatpush2.msra.mxu0 0.0
    %1030 = vmatprep.subr.mxu0 0.0
    %1031 = vmatpush2.msra.mxu0 0.0
    %1032 = vmatprep.subr.mxu0 0.0
    %1033 = vmatpush2.msra.mxu0 0.0
    %1034 = vmatprep.subr.mxu0 0.0
    %1035 = vmatpush2.msra.mxu0 0.0
    %1036 = vmatprep.subr.mxu0 0.0
    %1037 = vmatpush2.msra.mxu0 0.0
    %1038 = vmatprep.subr.mxu0 0.0
    %1039 = vmatpush2.msra.mxu0 0.0
    %1040 = vmatprep.subr.mxu0 0.0
    %1041 = vmatpush2.msra.mxu0 0.0
    %1042 = vmatprep.subr.mxu0 0.0
    %1043 = vmatpush2.msra.mxu0 0.0
    %1044 = vmatprep.subr.mxu0 0.0
    %1045 = vmatpush2.msra.mxu0 0.0
    %1046 = vmatprep.mubr.f32.mxu0 0.0
    %1047 = vmatmul.mubr.f32.gmra.mxu0 %v980
    %v1048 = vpop.f32.mrf.mxu0
    %v1049 = vadd.f32 0.0, %v1048
    %v1050 = vpop.f32.mrf.mxu0
    %v1051 = vadd.f32 0.0, %v1050
    %1052 = vdwg.mxu0
    %v1055 = vrot.slane %v1049, 6
    %v1056 = vrot.slane %v1051, 6
    %v1057 = vrot.slane %v1049, 7
    %v1058 = vrot.slane %v1051, 7
    %v1059 = vrot.slane %v1049, 1
    %v1060 = vrot.slane %v1051, 1
    %v1061 = vrot.slane %v1049, 2
    %v1062 = vrot.slane %v1051, 2
    %v1063 = vrot.slane %v1049, 3
    %v1064 = vrot.slane %v1051, 3
    %v1065 = vrot.slane %v1049, 4
    %v1066 = vrot.slane %v1051, 4
    %v1067 = vrot.slane %v1049, 5
    %v1068 = vrot.slane %v1051, 5
    %v1085 = vadd.f32 %v236, %v1055
    %v1086 = vadd.f32 %v238, %v1056
    %v1087 = vadd.f32 %v242, %v1057
    %v1088 = vadd.f32 %v244, %v1058
    %v1089 = vadd.f32 %v248, %v1049
    %v1090 = vadd.f32 %v250, %v1051
    %v1091 = vadd.f32 %v254, %v1059
    %v1092 = vadd.f32 %v256, %v1060
    %v1093 = vadd.f32 %v260, %v1061
    %v1094 = vadd.f32 %v262, %v1062
    %v1095 = vadd.f32 %v266, %v1063
    %v1096 = vadd.f32 %v268, %v1064
    %v1097 = vadd.f32 %v272, %v1065
    %v1098 = vadd.f32 %v274, %v1066
    %v1099 = vadd.f32 %v278, %v1067
    %v1100 = vadd.f32 %v280, %v1068
    %v1101 = vxor.u32 %v1085, 2147483648
    %v1102 = vxor.u32 %v1087, 2147483648
    %v1103 = vxor.u32 %v1089, 2147483648
    %v1104 = vxor.u32 %v1091, 2147483648
    %v1105 = vxor.u32 %v1093, 2147483648
    %v1106 = vxor.u32 %v1095, 2147483648
    %v1107 = vxor.u32 %v1097, 2147483648
    %v1108 = vxor.u32 %v1099, 2147483648
    %v1109 = vmul.f32 %v1101, 1.442695
    %v1110 = vpow.pop %v1109
    %v1111 = vmul.f32 %v1102, 1.442695
    %v1112 = vpow.pop %v1111
    %v1113 = vmul.f32 %v1103, 1.442695
    %v1114 = vpow.pop %v1113
    %v1115 = vmul.f32 %v1104, 1.442695
    %v1116 = vpow.pop %v1115
    %v1117 = vmul.f32 %v1105, 1.442695
    %v1118 = vpow.pop %v1117
    %v1119 = vmul.f32 %v1106, 1.442695
    %v1120 = vpow.pop %v1119
    %v1121 = vmul.f32 %v1107, 1.442695
    %v1122 = vpow.pop %v1121
    %v1123 = vmul.f32 %v1108, 1.442695
    %v1124 = vpow.pop %v1123
    %v1125 = vadd.f32 %v1110, 1.0
    %v1126 = vadd.f32 %v1112, 1.0
    %v1127 = vadd.f32 %v1114, 1.0
    %v1128 = vadd.f32 %v1116, 1.0
    %v1129 = vadd.f32 %v1118, 1.0
    %v1130 = vadd.f32 %v1120, 1.0
    %v1131 = vadd.f32 %v1122, 1.0
    %v1132 = vadd.f32 %v1124, 1.0
    %v1133 = vrcp.pop %v1125
    %v1134 = vmul.f32 1.0, %v1133
    %v1135 = vrcp.pop %v1126
    %v1136 = vmul.f32 1.0, %v1135
    %v1137 = vrcp.pop %v1127
    %v1138 = vmul.f32 1.0, %v1137
    %v1139 = vrcp.pop %v1128
    %v1140 = vmul.f32 1.0, %v1139
    %v1141 = vrcp.pop %v1129
    %v1142 = vmul.f32 1.0, %v1141
    %v1143 = vrcp.pop %v1130
    %v1144 = vmul.f32 1.0, %v1143
    %v1145 = vrcp.pop %v1131
    %v1146 = vmul.f32 1.0, %v1145
    %v1147 = vrcp.pop %v1132
    %v1148 = vmul.f32 1.0, %v1147
    %v1149 = vtanh.pop %v1086
    %v1150 = vtanh.pop %v1088
    %v1151 = vtanh.pop %v1090
    %v1152 = vtanh.pop %v1092
    %v1153 = vtanh.pop %v1094
    %v1154 = vtanh.pop %v1096
    %v1155 = vtanh.pop %v1098
    %v1156 = vtanh.pop %v1100
    %v1157 = vxor.u32 %v1086, 2147483648
    %v1158 = vxor.u32 %v1088, 2147483648
    %v1159 = vxor.u32 %v1090, 2147483648
    %v1160 = vxor.u32 %v1092, 2147483648
    %v1161 = vxor.u32 %v1094, 2147483648
    %v1162 = vxor.u32 %v1096, 2147483648
    %v1163 = vxor.u32 %v1098, 2147483648
    %v1164 = vxor.u32 %v1100, 2147483648
    %v1165 = vmul.f32 %v1157, 1.442695
    %v1166 = vpow.pop %v1165
    %v1167 = vmul.f32 %v1158, 1.442695
    %v1168 = vpow.pop %v1167
    %v1169 = vmul.f32 %v1159, 1.442695
    %v1170 = vpow.pop %v1169
    %v1171 = vmul.f32 %v1160, 1.442695
    %v1172 = vpow.pop %v1171
    %v1173 = vmul.f32 %v1161, 1.442695
    %v1174 = vpow.pop %v1173
    %v1175 = vmul.f32 %v1162, 1.442695
    %v1176 = vpow.pop %v1175
    %v1177 = vmul.f32 %v1163, 1.442695
    %v1178 = vpow.pop %v1177
    %v1179 = vmul.f32 %v1164, 1.442695
    %v1180 = vpow.pop %v1179
    %v1181 = vadd.f32 %v1166, 1.0
    %v1182 = vadd.f32 %v1168, 1.0
    %v1183 = vadd.f32 %v1170, 1.0
    %v1184 = vadd.f32 %v1172, 1.0
    %v1185 = vadd.f32 %v1174, 1.0
    %v1186 = vadd.f32 %v1176, 1.0
    %v1187 = vadd.f32 %v1178, 1.0
    %v1188 = vadd.f32 %v1180, 1.0
    %v1189 = vrcp.pop %v1181
    %v1190 = vmul.f32 1.0, %v1189
    %v1191 = vrcp.pop %v1182
    %v1192 = vmul.f32 1.0, %v1191
    %v1193 = vrcp.pop %v1183
    %v1194 = vmul.f32 1.0, %v1193
    %v1195 = vrcp.pop %v1184
    %v1196 = vmul.f32 1.0, %v1195
    %v1197 = vrcp.pop %v1185
    %v1198 = vmul.f32 1.0, %v1197
    %v1199 = vrcp.pop %v1186
    %v1200 = vmul.f32 1.0, %v1199
    %v1201 = vrcp.pop %v1187
    %v1202 = vmul.f32 1.0, %v1201
    %v1203 = vrcp.pop %v1188
    %v1204 = vmul.f32 1.0, %v1203
    %v1213 = vrot.slane %v909, 7
    %v1214 = vrot.slane %v910, 7
    %v1215 = vrot.slane %v911, 7
    %v1216 = vrot.slane %v912, 7
    %v1217 = vrot.slane %v913, 7
    %v1218 = vrot.slane %v914, 7
    %v1219 = vrot.slane %v915, 7
    %v1220 = vrot.slane %v916, 7
    %v1229 = vmul.f32 %v1134, %v1213
    %v1230 = vmul.f32 %v1136, %v1214
    %v1231 = vmul.f32 %v1138, %v1215
    %v1232 = vmul.f32 %v1140, %v1216
    %v1233 = vmul.f32 %v1142, %v1217
    %v1234 = vmul.f32 %v1144, %v1218
    %v1235 = vmul.f32 %v1146, %v1219
    %v1236 = vmul.f32 %v1148, %v1220
    %v1237 = vmul.f32 %v1134, %v1149
    %v1238 = vmul.f32 %v1136, %v1150
    %v1239 = vmul.f32 %v1138, %v1151
    %v1240 = vmul.f32 %v1140, %v1152
    %v1241 = vmul.f32 %v1142, %v1153
    %v1242 = vmul.f32 %v1144, %v1154
    %v1243 = vmul.f32 %v1146, %v1155
    %v1244 = vmul.f32 %v1148, %v1156
    %1253 = vrot.lane.b32.xlu0 %v1237, 64
    %v1254 = vpop.permute.xlu0 %1253
    %1255 = vrot.lane.b32.xlu0 %v1238, 64
    %v1256 = vpop.permute.xlu0 %1255
    %1257 = vrot.lane.b32.xlu0 %v1239, 64
    %v1258 = vpop.permute.xlu0 %1257
    %1259 = vrot.lane.b32.xlu0 %v1240, 64
    %v1260 = vpop.permute.xlu0 %1259
    %1261 = vrot.lane.b32.xlu0 %v1241, 64
    %v1262 = vpop.permute.xlu0 %1261
    %1263 = vrot.lane.b32.xlu0 %v1242, 64
    %v1264 = vpop.permute.xlu0 %1263
    %1265 = vrot.lane.b32.xlu0 %v1243, 64
    %v1266 = vpop.permute.xlu0 %1265
    %1267 = vrot.lane.b32.xlu0 %v1244, 64
    %v1268 = vpop.permute.xlu0 %1267
    %v1277 = vadd.f32 %v1229, %v1254
    %v1278 = vadd.f32 %v1230, %v1256
    %v1279 = vadd.f32 %v1231, %v1258
    %v1280 = vadd.f32 %v1232, %v1260
    %v1281 = vadd.f32 %v1233, %v1262
    %v1282 = vadd.f32 %v1234, %v1264
    %v1283 = vadd.f32 %v1235, %v1266
    %v1284 = vadd.f32 %v1236, %v1268
    %v1285 = vtanh.pop %v1277
    %v1286 = vtanh.pop %v1278
    %v1287 = vtanh.pop %v1279
    %v1288 = vtanh.pop %v1280
    %v1289 = vtanh.pop %v1281
    %v1290 = vtanh.pop %v1282
    %v1291 = vtanh.pop %v1283
    %v1292 = vtanh.pop %v1284
    %v1293 = vmul.f32 %v1190, %v1285
    %v1294 = vmul.f32 %v1192, %v1286
    %v1295 = vmul.f32 %v1194, %v1287
    %v1296 = vmul.f32 %v1196, %v1288
    %v1297 = vmul.f32 %v1198, %v1289
    %v1298 = vmul.f32 %v1200, %v1290
    %v1299 = vmul.f32 %v1202, %v1291
    %v1300 = vmul.f32 %v1204, %v1292
    %v1309 = vrot.slane %v1293, 2
    %v1310 = vrot.slane %v1294, 2
    %v1311 = vrot.slane %v1295, 2
    %v1312 = vrot.slane %v1296, 2
    %v1313 = vrot.slane %v1297, 2
    %v1314 = vrot.slane %v1298, 2
    %v1315 = vrot.slane %v1299, 2
    %v1316 = vrot.slane %v1300, 2
    %v1325 = vmax.f32 %v957, %v1309
    %v1326 = vmax.f32 %v958, %v1310
    %v1327 = vmax.f32 %v959, %v1311
    %v1328 = vmax.f32 %v960, %v1312
    %v1329 = vmax.f32 %v961, %v1313
    %v1330 = vmax.f32 %v962, %v1314
    %v1331 = vmax.f32 %v963, %v1315
    %v1332 = vmax.f32 %v964, %v1316
    %v1333 = vrot.slane %v1294, 1
    %v1334 = vsel %vm590, %v1333, %v1309
    %v1335 = vsel %vm593, %v1295, %v1334
    %v1336 = vrot.slane %v1296, 7
    %v1337 = vsel %vm596, %v1336, %v1335
    %v1338 = vrot.slane %v1297, 6
    %v1339 = vsel %vm599, %v1338, %v1337
    %v1340 = vrot.slane %v1298, 5
    %v1341 = vsel %vm602, %v1340, %v1339
    %v1342 = vrot.slane %v1299, 4
    %v1343 = vsel %vm605, %v1342, %v1341
    %v1344 = vrot.slane %v1300, 3
    %v1345 = vsel %vm608, %v1344, %v1343
    %1346 = vrot.lane.b32.xlu0 %v1345, 64
    %v1347 = vpop.permute.xlu0 %1346
    %v1348 = vsel %vm282, %v1347, 0
    %1350 = vmatprep.subr.mxu0 0.0
    %1351 = vmatpush1.msra.mxu0 0.0
    %1352 = vmatprep.subr.mxu0 0.0
    %1353 = vmatpush1.msra.mxu0 0.0
    %1354 = vmatprep.subr.mxu0 0.0
    %1355 = vmatpush1.msra.mxu0 0.0
    %1356 = vmatprep.subr.mxu0 0.0
    %1357 = vmatpush1.msra.mxu0 0.0
    %1358 = vmatprep.subr.mxu0 0.0
    %1359 = vmatpush1.msra.mxu0 0.0
    %1360 = vmatprep.subr.mxu0 0.0
    %1361 = vmatpush1.msra.mxu0 0.0
    %1362 = vmatprep.subr.mxu0 0.0
    %1363 = vmatpush1.msra.mxu0 0.0
    %1364 = vmatprep.subr.mxu0 0.0
    %1365 = vmatpush1.msra.mxu0 0.0
    %1366 = vmatprep.subr.mxu0 %v103
    %1367 = vmatpush1.msra.mxu0 %v102
    %1368 = vmatprep.subr.mxu0 %v101
    %1369 = vmatpush1.msra.mxu0 %v100
    %1370 = vmatprep.subr.mxu0 %v99
    %1371 = vmatpush1.msra.mxu0 %v98
    %1372 = vmatprep.subr.mxu0 %v97
    %1373 = vmatpush1.msra.mxu0 %v96
    %1374 = vmatprep.subr.mxu0 %v95
    %1375 = vmatpush1.msra.mxu0 %v94
    %1376 = vmatprep.subr.mxu0 %v93
    %1377 = vmatpush1.msra.mxu0 %v92
    %1378 = vmatprep.subr.mxu0 %v91
    %1379 = vmatpush1.msra.mxu0 %v90
    %1380 = vmatprep.subr.mxu0 %v89
    %1381 = vmatpush1.msra.mxu0 %v88
    %1382 = vmatprep.subr.mxu0 0.0
    %1383 = vmatpush2.msra.mxu0 0.0
    %1384 = vmatprep.subr.mxu0 0.0
    %1385 = vmatpush2.msra.mxu0 0.0
    %1386 = vmatprep.subr.mxu0 0.0
    %1387 = vmatpush2.msra.mxu0 0.0
    %1388 = vmatprep.subr.mxu0 0.0
    %1389 = vmatpush2.msra.mxu0 0.0
    %1390 = vmatprep.subr.mxu0 0.0
    %1391 = vmatpush2.msra.mxu0 0.0
    %1392 = vmatprep.subr.mxu0 0.0
    %1393 = vmatpush2.msra.mxu0 0.0
    %1394 = vmatprep.subr.mxu0 0.0
    %1395 = vmatpush2.msra.mxu0 0.0
    %1396 = vmatprep.subr.mxu0 0.0
    %1397 = vmatpush2.msra.mxu0 0.0
    %1398 = vmatprep.subr.mxu0 0.0
    %1399 = vmatpush2.msra.mxu0 0.0
    %1400 = vmatprep.subr.mxu0 0.0
    %1401 = vmatpush2.msra.mxu0 0.0
    %1402 = vmatprep.subr.mxu0 0.0
    %1403 = vmatpush2.msra.mxu0 0.0
    %1404 = vmatprep.subr.mxu0 0.0
    %1405 = vmatpush2.msra.mxu0 0.0
    %1406 = vmatprep.subr.mxu0 0.0
    %1407 = vmatpush2.msra.mxu0 0.0
    %1408 = vmatprep.subr.mxu0 0.0
    %1409 = vmatpush2.msra.mxu0 0.0
    %1410 = vmatprep.subr.mxu0 0.0
    %1411 = vmatpush2.msra.mxu0 0.0
    %1412 = vmatprep.subr.mxu0 0.0
    %1413 = vmatpush2.msra.mxu0 0.0
    %1414 = vmatprep.mubr.f32.mxu0 0.0
    %1415 = vmatmul.mubr.f32.gmra.mxu0 %v1348
    %v1416 = vpop.f32.mrf.mxu0
    %v1417 = vadd.f32 0.0, %v1416
    %v1418 = vpop.f32.mrf.mxu0
    %v1419 = vadd.f32 0.0, %v1418
    %1420 = vdwg.mxu0
    %v1423 = vrot.slane %v1417, 5
    %v1424 = vrot.slane %v1419, 5
    %v1425 = vrot.slane %v1417, 6
    %v1426 = vrot.slane %v1419, 6
    %v1427 = vrot.slane %v1417, 7
    %v1428 = vrot.slane %v1419, 7
    %v1429 = vrot.slane %v1417, 1
    %v1430 = vrot.slane %v1419, 1
    %v1431 = vrot.slane %v1417, 2
    %v1432 = vrot.slane %v1419, 2
    %v1433 = vrot.slane %v1417, 3
    %v1434 = vrot.slane %v1419, 3
    %v1435 = vrot.slane %v1417, 4
    %v1436 = vrot.slane %v1419, 4
    %v1453 = vadd.f32 %v236, %v1423
    %v1454 = vadd.f32 %v238, %v1424
    %v1455 = vadd.f32 %v242, %v1425
    %v1456 = vadd.f32 %v244, %v1426
    %v1457 = vadd.f32 %v248, %v1427
    %v1458 = vadd.f32 %v250, %v1428
    %v1459 = vadd.f32 %v254, %v1417
    %v1460 = vadd.f32 %v256, %v1419
    %v1461 = vadd.f32 %v260, %v1429
    %v1462 = vadd.f32 %v262, %v1430
    %v1463 = vadd.f32 %v266, %v1431
    %v1464 = vadd.f32 %v268, %v1432
    %v1465 = vadd.f32 %v272, %v1433
    %v1466 = vadd.f32 %v274, %v1434
    %v1467 = vadd.f32 %v278, %v1435
    %v1468 = vadd.f32 %v280, %v1436
    %v1469 = vxor.u32 %v1453, 2147483648
    %v1470 = vxor.u32 %v1455, 2147483648
    %v1471 = vxor.u32 %v1457, 2147483648
    %v1472 = vxor.u32 %v1459, 2147483648
    %v1473 = vxor.u32 %v1461, 2147483648
    %v1474 = vxor.u32 %v1463, 2147483648
    %v1475 = vxor.u32 %v1465, 2147483648
    %v1476 = vxor.u32 %v1467, 2147483648
    %v1477 = vmul.f32 %v1469, 1.442695
    %v1478 = vpow.pop %v1477
    %v1479 = vmul.f32 %v1470, 1.442695
    %v1480 = vpow.pop %v1479
    %v1481 = vmul.f32 %v1471, 1.442695
    %v1482 = vpow.pop %v1481
    %v1483 = vmul.f32 %v1472, 1.442695
    %v1484 = vpow.pop %v1483
    %v1485 = vmul.f32 %v1473, 1.442695
    %v1486 = vpow.pop %v1485
    %v1487 = vmul.f32 %v1474, 1.442695
    %v1488 = vpow.pop %v1487
    %v1489 = vmul.f32 %v1475, 1.442695
    %v1490 = vpow.pop %v1489
    %v1491 = vmul.f32 %v1476, 1.442695
    %v1492 = vpow.pop %v1491
    %v1493 = vadd.f32 %v1478, 1.0
    %v1494 = vadd.f32 %v1480, 1.0
    %v1495 = vadd.f32 %v1482, 1.0
    %v1496 = vadd.f32 %v1484, 1.0
    %v1497 = vadd.f32 %v1486, 1.0
    %v1498 = vadd.f32 %v1488, 1.0
    %v1499 = vadd.f32 %v1490, 1.0
    %v1500 = vadd.f32 %v1492, 1.0
    %v1501 = vrcp.pop %v1493
    %v1502 = vmul.f32 1.0, %v1501
    %v1503 = vrcp.pop %v1494
    %v1504 = vmul.f32 1.0, %v1503
    %v1505 = vrcp.pop %v1495
    %v1506 = vmul.f32 1.0, %v1505
    %v1507 = vrcp.pop %v1496
    %v1508 = vmul.f32 1.0, %v1507
    %v1509 = vrcp.pop %v1497
    %v1510 = vmul.f32 1.0, %v1509
    %v1511 = vrcp.pop %v1498
    %v1512 = vmul.f32 1.0, %v1511
    %v1513 = vrcp.pop %v1499
    %v1514 = vmul.f32 1.0, %v1513
    %v1515 = vrcp.pop %v1500
    %v1516 = vmul.f32 1.0, %v1515
    %v1517 = vtanh.pop %v1454
    %v1518 = vtanh.pop %v1456
    %v1519 = vtanh.pop %v1458
    %v1520 = vtanh.pop %v1460
    %v1521 = vtanh.pop %v1462
    %v1522 = vtanh.pop %v1464
    %v1523 = vtanh.pop %v1466
    %v1524 = vtanh.pop %v1468
    %v1525 = vxor.u32 %v1454, 2147483648
    %v1526 = vxor.u32 %v1456, 2147483648
    %v1527 = vxor.u32 %v1458, 2147483648
    %v1528 = vxor.u32 %v1460, 2147483648
    %v1529 = vxor.u32 %v1462, 2147483648
    %v1530 = vxor.u32 %v1464, 2147483648
    %v1531 = vxor.u32 %v1466, 2147483648
    %v1532 = vxor.u32 %v1468, 2147483648
    %v1533 = vmul.f32 %v1525, 1.442695
    %v1534 = vpow.pop %v1533
    %v1535 = vmul.f32 %v1526, 1.442695
    %v1536 = vpow.pop %v1535
    %v1537 = vmul.f32 %v1527, 1.442695
    %v1538 = vpow.pop %v1537
    %v1539 = vmul.f32 %v1528, 1.442695
    %v1540 = vpow.pop %v1539
    %v1541 = vmul.f32 %v1529, 1.442695
    %v1542 = vpow.pop %v1541
    %v1543 = vmul.f32 %v1530, 1.442695
    %v1544 = vpow.pop %v1543
    %v1545 = vmul.f32 %v1531, 1.442695
    %v1546 = vpow.pop %v1545
    %v1547 = vmul.f32 %v1532, 1.442695
    %v1548 = vpow.pop %v1547
    %v1549 = vadd.f32 %v1534, 1.0
    %v1550 = vadd.f32 %v1536, 1.0
    %v1551 = vadd.f32 %v1538, 1.0
    %v1552 = vadd.f32 %v1540, 1.0
    %v1553 = vadd.f32 %v1542, 1.0
    %v1554 = vadd.f32 %v1544, 1.0
    %v1555 = vadd.f32 %v1546, 1.0
    %v1556 = vadd.f32 %v1548, 1.0
    %v1557 = vrcp.pop %v1549
    %v1558 = vmul.f32 1.0, %v1557
    %v1559 = vrcp.pop %v1550
    %v1560 = vmul.f32 1.0, %v1559
    %v1561 = vrcp.pop %v1551
    %v1562 = vmul.f32 1.0, %v1561
    %v1563 = vrcp.pop %v1552
    %v1564 = vmul.f32 1.0, %v1563
    %v1565 = vrcp.pop %v1553
    %v1566 = vmul.f32 1.0, %v1565
    %v1567 = vrcp.pop %v1554
    %v1568 = vmul.f32 1.0, %v1567
    %v1569 = vrcp.pop %v1555
    %v1570 = vmul.f32 1.0, %v1569
    %v1571 = vrcp.pop %v1556
    %v1572 = vmul.f32 1.0, %v1571
    %v1581 = vrot.slane %v1277, 7
    %v1582 = vrot.slane %v1278, 7
    %v1583 = vrot.slane %v1279, 7
    %v1584 = vrot.slane %v1280, 7
    %v1585 = vrot.slane %v1281, 7
    %v1586 = vrot.slane %v1282, 7
    %v1587 = vrot.slane %v1283, 7
    %v1588 = vrot.slane %v1284, 7
    %v1597 = vmul.f32 %v1502, %v1581
    %v1598 = vmul.f32 %v1504, %v1582
    %v1599 = vmul.f32 %v1506, %v1583
    %v1600 = vmul.f32 %v1508, %v1584
    %v1601 = vmul.f32 %v1510, %v1585
    %v1602 = vmul.f32 %v1512, %v1586
    %v1603 = vmul.f32 %v1514, %v1587
    %v1604 = vmul.f32 %v1516, %v1588
    %v1605 = vmul.f32 %v1502, %v1517
    %v1606 = vmul.f32 %v1504, %v1518
    %v1607 = vmul.f32 %v1506, %v1519
    %v1608 = vmul.f32 %v1508, %v1520
    %v1609 = vmul.f32 %v1510, %v1521
    %v1610 = vmul.f32 %v1512, %v1522
    %v1611 = vmul.f32 %v1514, %v1523
    %v1612 = vmul.f32 %v1516, %v1524
    %1621 = vrot.lane.b32.xlu0 %v1605, 64
    %v1622 = vpop.permute.xlu0 %1621
    %1623 = vrot.lane.b32.xlu0 %v1606, 64
    %v1624 = vpop.permute.xlu0 %1623
    %1625 = vrot.lane.b32.xlu0 %v1607, 64
    %v1626 = vpop.permute.xlu0 %1625
    %1627 = vrot.lane.b32.xlu0 %v1608, 64
    %v1628 = vpop.permute.xlu0 %1627
    %1629 = vrot.lane.b32.xlu0 %v1609, 64
    %v1630 = vpop.permute.xlu0 %1629
    %1631 = vrot.lane.b32.xlu0 %v1610, 64
    %v1632 = vpop.permute.xlu0 %1631
    %1633 = vrot.lane.b32.xlu0 %v1611, 64
    %v1634 = vpop.permute.xlu0 %1633
    %1635 = vrot.lane.b32.xlu0 %v1612, 64
    %v1636 = vpop.permute.xlu0 %1635
    %v1645 = vadd.f32 %v1597, %v1622
    %v1646 = vadd.f32 %v1598, %v1624
    %v1647 = vadd.f32 %v1599, %v1626
    %v1648 = vadd.f32 %v1600, %v1628
    %v1649 = vadd.f32 %v1601, %v1630
    %v1650 = vadd.f32 %v1602, %v1632
    %v1651 = vadd.f32 %v1603, %v1634
    %v1652 = vadd.f32 %v1604, %v1636
    %v1653 = vtanh.pop %v1645
    %v1654 = vtanh.pop %v1646
    %v1655 = vtanh.pop %v1647
    %v1656 = vtanh.pop %v1648
    %v1657 = vtanh.pop %v1649
    %v1658 = vtanh.pop %v1650
    %v1659 = vtanh.pop %v1651
    %v1660 = vtanh.pop %v1652
    %v1661 = vmul.f32 %v1558, %v1653
    %v1662 = vmul.f32 %v1560, %v1654
    %v1663 = vmul.f32 %v1562, %v1655
    %v1664 = vmul.f32 %v1564, %v1656
    %v1665 = vmul.f32 %v1566, %v1657
    %v1666 = vmul.f32 %v1568, %v1658
    %v1667 = vmul.f32 %v1570, %v1659
    %v1668 = vmul.f32 %v1572, %v1660
    %v1677 = vrot.slane %v1661, 3
    %v1678 = vrot.slane %v1662, 3
    %v1679 = vrot.slane %v1663, 3
    %v1680 = vrot.slane %v1664, 3
    %v1681 = vrot.slane %v1665, 3
    %v1682 = vrot.slane %v1666, 3
    %v1683 = vrot.slane %v1667, 3
    %v1684 = vrot.slane %v1668, 3
    %v1693 = vmax.f32 %v1325, %v1677
    %v1694 = vmax.f32 %v1326, %v1678
    %v1695 = vmax.f32 %v1327, %v1679
    %v1696 = vmax.f32 %v1328, %v1680
    %v1697 = vmax.f32 %v1329, %v1681
    %v1698 = vmax.f32 %v1330, %v1682
    %v1699 = vmax.f32 %v1331, %v1683
    %v1700 = vmax.f32 %v1332, %v1684
    %v1701 = vrot.slane %v1662, 2
    %v1702 = vsel %vm590, %v1701, %v1677
    %v1703 = vrot.slane %v1663, 1
    %v1704 = vsel %vm593, %v1703, %v1702
    %v1705 = vsel %vm596, %v1664, %v1704
    %v1706 = vrot.slane %v1665, 7
    %v1707 = vsel %vm599, %v1706, %v1705
    %v1708 = vrot.slane %v1666, 6
    %v1709 = vsel %vm602, %v1708, %v1707
    %v1710 = vrot.slane %v1667, 5
    %v1711 = vsel %vm605, %v1710, %v1709
    %v1712 = vrot.slane %v1668, 4
    %v1713 = vsel %vm608, %v1712, %v1711
    %1714 = vrot.lane.b32.xlu0 %v1713, 64
    %v1715 = vpop.permute.xlu0 %1714
    %v1716 = vsel %vm282, %v1715, 0
    %1718 = vmatprep.subr.mxu0 0.0
    %1719 = vmatpush1.msra.mxu0 0.0
    %1720 = vmatprep.subr.mxu0 0.0
    %1721 = vmatpush1.msra.mxu0 0.0
    %1722 = vmatprep.subr.mxu0 0.0
    %1723 = vmatpush1.msra.mxu0 0.0
    %1724 = vmatprep.subr.mxu0 0.0
    %1725 = vmatpush1.msra.mxu0 0.0
    %1726 = vmatprep.subr.mxu0 0.0
    %1727 = vmatpush1.msra.mxu0 0.0
    %1728 = vmatprep.subr.mxu0 0.0
    %1729 = vmatpush1.msra.mxu0 0.0
    %1730 = vmatprep.subr.mxu0 0.0
    %1731 = vmatpush1.msra.mxu0 0.0
    %1732 = vmatprep.subr.mxu0 0.0
    %1733 = vmatpush1.msra.mxu0 0.0
    %1734 = vmatprep.subr.mxu0 %v103
    %1735 = vmatpush1.msra.mxu0 %v102
    %1736 = vmatprep.subr.mxu0 %v101
    %1737 = vmatpush1.msra.mxu0 %v100
    %1738 = vmatprep.subr.mxu0 %v99
    %1739 = vmatpush1.msra.mxu0 %v98
    %1740 = vmatprep.subr.mxu0 %v97
    %1741 = vmatpush1.msra.mxu0 %v96
    %1742 = vmatprep.subr.mxu0 %v95
    %1743 = vmatpush1.msra.mxu0 %v94
    %1744 = vmatprep.subr.mxu0 %v93
    %1745 = vmatpush1.msra.mxu0 %v92
    %1746 = vmatprep.subr.mxu0 %v91
    %1747 = vmatpush1.msra.mxu0 %v90
    %1748 = vmatprep.subr.mxu0 %v89
    %1749 = vmatpush1.msra.mxu0 %v88
    %1750 = vmatprep.subr.mxu0 0.0
    %1751 = vmatpush2.msra.mxu0 0.0
    %1752 = vmatprep.subr.mxu0 0.0
    %1753 = vmatpush2.msra.mxu0 0.0
    %1754 = vmatprep.subr.mxu0 0.0
    %1755 = vmatpush2.msra.mxu0 0.0
    %1756 = vmatprep.subr.mxu0 0.0
    %1757 = vmatpush2.msra.mxu0 0.0
    %1758 = vmatprep.subr.mxu0 0.0
    %1759 = vmatpush2.msra.mxu0 0.0
    %1760 = vmatprep.subr.mxu0 0.0
    %1761 = vmatpush2.msra.mxu0 0.0
    %1762 = vmatprep.subr.mxu0 0.0
    %1763 = vmatpush2.msra.mxu0 0.0
    %1764 = vmatprep.subr.mxu0 0.0
    %1765 = vmatpush2.msra.mxu0 0.0
    %1766 = vmatprep.subr.mxu0 0.0
    %1767 = vmatpush2.msra.mxu0 0.0
    %1768 = vmatprep.subr.mxu0 0.0
    %1769 = vmatpush2.msra.mxu0 0.0
    %1770 = vmatprep.subr.mxu0 0.0
    %1771 = vmatpush2.msra.mxu0 0.0
    %1772 = vmatprep.subr.mxu0 0.0
    %1773 = vmatpush2.msra.mxu0 0.0
    %1774 = vmatprep.subr.mxu0 0.0
    %1775 = vmatpush2.msra.mxu0 0.0
    %1776 = vmatprep.subr.mxu0 0.0
    %1777 = vmatpush2.msra.mxu0 0.0
    %1778 = vmatprep.subr.mxu0 0.0
    %1779 = vmatpush2.msra.mxu0 0.0
    %1780 = vmatprep.subr.mxu0 0.0
    %1781 = vmatpush2.msra.mxu0 0.0
    %1782 = vmatprep.mubr.f32.mxu0 0.0
    %1783 = vmatmul.mubr.f32.gmra.mxu0 %v1716
    %v1784 = vpop.f32.mrf.mxu0
    %v1785 = vadd.f32 0.0, %v1784
    %v1786 = vpop.f32.mrf.mxu0
    %v1787 = vadd.f32 0.0, %v1786
    %1788 = vdwg.mxu0
    %v1791 = vrot.slane %v1785, 4
    %v1792 = vrot.slane %v1787, 4
    %v1793 = vrot.slane %v1785, 5
    %v1794 = vrot.slane %v1787, 5
    %v1795 = vrot.slane %v1785, 6
    %v1796 = vrot.slane %v1787, 6
    %v1797 = vrot.slane %v1785, 7
    %v1798 = vrot.slane %v1787, 7
    %v1799 = vrot.slane %v1785, 1
    %v1800 = vrot.slane %v1787, 1
    %v1801 = vrot.slane %v1785, 2
    %v1802 = vrot.slane %v1787, 2
    %v1803 = vrot.slane %v1785, 3
    %v1804 = vrot.slane %v1787, 3
    %v1821 = vadd.f32 %v236, %v1791
    %v1822 = vadd.f32 %v238, %v1792
    %v1823 = vadd.f32 %v242, %v1793
    %v1824 = vadd.f32 %v244, %v1794
    %v1825 = vadd.f32 %v248, %v1795
    %v1826 = vadd.f32 %v250, %v1796
    %v1827 = vadd.f32 %v254, %v1797
    %v1828 = vadd.f32 %v256, %v1798
    %v1829 = vadd.f32 %v260, %v1785
    %v1830 = vadd.f32 %v262, %v1787
    %v1831 = vadd.f32 %v266, %v1799
    %v1832 = vadd.f32 %v268, %v1800
    %v1833 = vadd.f32 %v272, %v1801
    %v1834 = vadd.f32 %v274, %v1802
    %v1835 = vadd.f32 %v278, %v1803
    %v1836 = vadd.f32 %v280, %v1804
    %v1837 = vxor.u32 %v1821, 2147483648
    %v1838 = vxor.u32 %v1823, 2147483648
    %v1839 = vxor.u32 %v1825, 2147483648
    %v1840 = vxor.u32 %v1827, 2147483648
    %v1841 = vxor.u32 %v1829, 2147483648
    %v1842 = vxor.u32 %v1831, 2147483648
    %v1843 = vxor.u32 %v1833, 2147483648
    %v1844 = vxor.u32 %v1835, 2147483648
    %v1845 = vmul.f32 %v1837, 1.442695
    %v1846 = vpow.pop %v1845
    %v1847 = vmul.f32 %v1838, 1.442695
    %v1848 = vpow.pop %v1847
    %v1849 = vmul.f32 %v1839, 1.442695
    %v1850 = vpow.pop %v1849
    %v1851 = vmul.f32 %v1840, 1.442695
    %v1852 = vpow.pop %v1851
    %v1853 = vmul.f32 %v1841, 1.442695
    %v1854 = vpow.pop %v1853
    %v1855 = vmul.f32 %v1842, 1.442695
    %v1856 = vpow.pop %v1855
    %v1857 = vmul.f32 %v1843, 1.442695
    %v1858 = vpow.pop %v1857
    %v1859 = vmul.f32 %v1844, 1.442695
    %v1860 = vpow.pop %v1859
    %v1861 = vadd.f32 %v1846, 1.0
    %v1862 = vadd.f32 %v1848, 1.0
    %v1863 = vadd.f32 %v1850, 1.0
    %v1864 = vadd.f32 %v1852, 1.0
    %v1865 = vadd.f32 %v1854, 1.0
    %v1866 = vadd.f32 %v1856, 1.0
    %v1867 = vadd.f32 %v1858, 1.0
    %v1868 = vadd.f32 %v1860, 1.0
    %v1869 = vrcp.pop %v1861
    %v1870 = vmul.f32 1.0, %v1869
    %v1871 = vrcp.pop %v1862
    %v1872 = vmul.f32 1.0, %v1871
    %v1873 = vrcp.pop %v1863
    %v1874 = vmul.f32 1.0, %v1873
    %v1875 = vrcp.pop %v1864
    %v1876 = vmul.f32 1.0, %v1875
    %v1877 = vrcp.pop %v1865
    %v1878 = vmul.f32 1.0, %v1877
    %v1879 = vrcp.pop %v1866
    %v1880 = vmul.f32 1.0, %v1879
    %v1881 = vrcp.pop %v1867
    %v1882 = vmul.f32 1.0, %v1881
    %v1883 = vrcp.pop %v1868
    %v1884 = vmul.f32 1.0, %v1883
    %v1885 = vtanh.pop %v1822
    %v1886 = vtanh.pop %v1824
    %v1887 = vtanh.pop %v1826
    %v1888 = vtanh.pop %v1828
    %v1889 = vtanh.pop %v1830
    %v1890 = vtanh.pop %v1832
    %v1891 = vtanh.pop %v1834
    %v1892 = vtanh.pop %v1836
    %v1893 = vxor.u32 %v1822, 2147483648
    %v1894 = vxor.u32 %v1824, 2147483648
    %v1895 = vxor.u32 %v1826, 2147483648
    %v1896 = vxor.u32 %v1828, 2147483648
    %v1897 = vxor.u32 %v1830, 2147483648
    %v1898 = vxor.u32 %v1832, 2147483648
    %v1899 = vxor.u32 %v1834, 2147483648
    %v1900 = vxor.u32 %v1836, 2147483648
    %v1901 = vmul.f32 %v1893, 1.442695
    %v1902 = vpow.pop %v1901
    %v1903 = vmul.f32 %v1894, 1.442695
    %v1904 = vpow.pop %v1903
    %v1905 = vmul.f32 %v1895, 1.442695
    %v1906 = vpow.pop %v1905
    %v1907 = vmul.f32 %v1896, 1.442695
    %v1908 = vpow.pop %v1907
    %v1909 = vmul.f32 %v1897, 1.442695
    %v1910 = vpow.pop %v1909
    %v1911 = vmul.f32 %v1898, 1.442695
    %v1912 = vpow.pop %v1911
    %v1913 = vmul.f32 %v1899, 1.442695
    %v1914 = vpow.pop %v1913
    %v1915 = vmul.f32 %v1900, 1.442695
    %v1916 = vpow.pop %v1915
    %v1917 = vadd.f32 %v1902, 1.0
    %v1918 = vadd.f32 %v1904, 1.0
    %v1919 = vadd.f32 %v1906, 1.0
    %v1920 = vadd.f32 %v1908, 1.0
    %v1921 = vadd.f32 %v1910, 1.0
    %v1922 = vadd.f32 %v1912, 1.0
    %v1923 = vadd.f32 %v1914, 1.0
    %v1924 = vadd.f32 %v1916, 1.0
    %v1925 = vrcp.pop %v1917
    %v1926 = vmul.f32 1.0, %v1925
    %v1927 = vrcp.pop %v1918
    %v1928 = vmul.f32 1.0, %v1927
    %v1929 = vrcp.pop %v1919
    %v1930 = vmul.f32 1.0, %v1929
    %v1931 = vrcp.pop %v1920
    %v1932 = vmul.f32 1.0, %v1931
    %v1933 = vrcp.pop %v1921
    %v1934 = vmul.f32 1.0, %v1933
    %v1935 = vrcp.pop %v1922
    %v1936 = vmul.f32 1.0, %v1935
    %v1937 = vrcp.pop %v1923
    %v1938 = vmul.f32 1.0, %v1937
    %v1939 = vrcp.pop %v1924
    %v1940 = vmul.f32 1.0, %v1939
    %v1949 = vrot.slane %v1645, 7
    %v1950 = vrot.slane %v1646, 7
    %v1951 = vrot.slane %v1647, 7
    %v1952 = vrot.slane %v1648, 7
    %v1953 = vrot.slane %v1649, 7
    %v1954 = vrot.slane %v1650, 7
    %v1955 = vrot.slane %v1651, 7
    %v1956 = vrot.slane %v1652, 7
    %v1965 = vmul.f32 %v1870, %v1949
    %v1966 = vmul.f32 %v1872, %v1950
    %v1967 = vmul.f32 %v1874, %v1951
    %v1968 = vmul.f32 %v1876, %v1952
    %v1969 = vmul.f32 %v1878, %v1953
    %v1970 = vmul.f32 %v1880, %v1954
    %v1971 = vmul.f32 %v1882, %v1955
    %v1972 = vmul.f32 %v1884, %v1956
    %v1973 = vmul.f32 %v1870, %v1885
    %v1974 = vmul.f32 %v1872, %v1886
    %v1975 = vmul.f32 %v1874, %v1887
    %v1976 = vmul.f32 %v1876, %v1888
    %v1977 = vmul.f32 %v1878, %v1889
    %v1978 = vmul.f32 %v1880, %v1890
    %v1979 = vmul.f32 %v1882, %v1891
    %v1980 = vmul.f32 %v1884, %v1892
    %1989 = vrot.lane.b32.xlu0 %v1973, 64
    %v1990 = vpop.permute.xlu0 %1989
    %1991 = vrot.lane.b32.xlu0 %v1974, 64
    %v1992 = vpop.permute.xlu0 %1991
    %1993 = vrot.lane.b32.xlu0 %v1975, 64
    %v1994 = vpop.permute.xlu0 %1993
    %1995 = vrot.lane.b32.xlu0 %v1976, 64
    %v1996 = vpop.permute.xlu0 %1995
    %1997 = vrot.lane.b32.xlu0 %v1977, 64
    %v1998 = vpop.permute.xlu0 %1997
    %1999 = vrot.lane.b32.xlu0 %v1978, 64
    %v2000 = vpop.permute.xlu0 %1999
    %2001 = vrot.lane.b32.xlu0 %v1979, 64
    %v2002 = vpop.permute.xlu0 %2001
    %2003 = vrot.lane.b32.xlu0 %v1980, 64
    %v2004 = vpop.permute.xlu0 %2003
    %v2013 = vadd.f32 %v1965, %v1990
    %v2014 = vadd.f32 %v1966, %v1992
    %v2015 = vadd.f32 %v1967, %v1994
    %v2016 = vadd.f32 %v1968, %v1996
    %v2017 = vadd.f32 %v1969, %v1998
    %v2018 = vadd.f32 %v1970, %v2000
    %v2019 = vadd.f32 %v1971, %v2002
    %v2020 = vadd.f32 %v1972, %v2004
    %v2021 = vtanh.pop %v2013
    %v2022 = vtanh.pop %v2014
    %v2023 = vtanh.pop %v2015
    %v2024 = vtanh.pop %v2016
    %v2025 = vtanh.pop %v2017
    %v2026 = vtanh.pop %v2018
    %v2027 = vtanh.pop %v2019
    %v2028 = vtanh.pop %v2020
    %v2029 = vmul.f32 %v1926, %v2021
    %v2030 = vmul.f32 %v1928, %v2022
    %v2031 = vmul.f32 %v1930, %v2023
    %v2032 = vmul.f32 %v1932, %v2024
    %v2033 = vmul.f32 %v1934, %v2025
    %v2034 = vmul.f32 %v1936, %v2026
    %v2035 = vmul.f32 %v1938, %v2027
    %v2036 = vmul.f32 %v1940, %v2028
    %v2045 = vrot.slane %v2029, 4
    %v2046 = vrot.slane %v2030, 4
    %v2047 = vrot.slane %v2031, 4
    %v2048 = vrot.slane %v2032, 4
    %v2049 = vrot.slane %v2033, 4
    %v2050 = vrot.slane %v2034, 4
    %v2051 = vrot.slane %v2035, 4
    %v2052 = vrot.slane %v2036, 4
    %v2061 = vmax.f32 %v1693, %v2045
    %v2062 = vmax.f32 %v1694, %v2046
    %v2063 = vmax.f32 %v1695, %v2047
    %v2064 = vmax.f32 %v1696, %v2048
    %v2065 = vmax.f32 %v1697, %v2049
    %v2066 = vmax.f32 %v1698, %v2050
    %v2067 = vmax.f32 %v1699, %v2051
    %v2068 = vmax.f32 %v1700, %v2052
    %v2069 = vrot.slane %v2030, 3
    %v2070 = vsel %vm590, %v2069, %v2045
    %v2071 = vrot.slane %v2031, 2
    %v2072 = vsel %vm593, %v2071, %v2070
    %v2073 = vrot.slane %v2032, 1
    %v2074 = vsel %vm596, %v2073, %v2072
    %v2075 = vsel %vm599, %v2033, %v2074
    %v2076 = vrot.slane %v2034, 7
    %v2077 = vsel %vm602, %v2076, %v2075
    %v2078 = vrot.slane %v2035, 6
    %v2079 = vsel %vm605, %v2078, %v2077
    %v2080 = vrot.slane %v2036, 5
    %v2081 = vsel %vm608, %v2080, %v2079
    %2082 = vrot.lane.b32.xlu0 %v2081, 64
    %v2083 = vpop.permute.xlu0 %2082
    %v2084 = vsel %vm282, %v2083, 0
    %2086 = vmatprep.subr.mxu0 0.0
    %2087 = vmatpush1.msra.mxu0 0.0
    %2088 = vmatprep.subr.mxu0 0.0
    %2089 = vmatpush1.msra.mxu0 0.0
    %2090 = vmatprep.subr.mxu0 0.0
    %2091 = vmatpush1.msra.mxu0 0.0
    %2092 = vmatprep.subr.mxu0 0.0
    %2093 = vmatpush1.msra.mxu0 0.0
    %2094 = vmatprep.subr.mxu0 0.0
    %2095 = vmatpush1.msra.mxu0 0.0
    %2096 = vmatprep.subr.mxu0 0.0
    %2097 = vmatpush1.msra.mxu0 0.0
    %2098 = vmatprep.subr.mxu0 0.0
    %2099 = vmatpush1.msra.mxu0 0.0
    %2100 = vmatprep.subr.mxu0 0.0
    %2101 = vmatpush1.msra.mxu0 0.0
    %2102 = vmatprep.subr.mxu0 %v103
    %2103 = vmatpush1.msra.mxu0 %v102
    %2104 = vmatprep.subr.mxu0 %v101
    %2105 = vmatpush1.msra.mxu0 %v100
    %2106 = vmatprep.subr.mxu0 %v99
    %2107 = vmatpush1.msra.mxu0 %v98
    %2108 = vmatprep.subr.mxu0 %v97
    %2109 = vmatpush1.msra.mxu0 %v96
    %2110 = vmatprep.subr.mxu0 %v95
    %2111 = vmatpush1.msra.mxu0 %v94
    %2112 = vmatprep.subr.mxu0 %v93
    %2113 = vmatpush1.msra.mxu0 %v92
    %2114 = vmatprep.subr.mxu0 %v91
    %2115 = vmatpush1.msra.mxu0 %v90
    %2116 = vmatprep.subr.mxu0 %v89
    %2117 = vmatpush1.msra.mxu0 %v88
    %2118 = vmatprep.subr.mxu0 0.0
    %2119 = vmatpush2.msra.mxu0 0.0
    %2120 = vmatprep.subr.mxu0 0.0
    %2121 = vmatpush2.msra.mxu0 0.0
    %2122 = vmatprep.subr.mxu0 0.0
    %2123 = vmatpush2.msra.mxu0 0.0
    %2124 = vmatprep.subr.mxu0 0.0
    %2125 = vmatpush2.msra.mxu0 0.0
    %2126 = vmatprep.subr.mxu0 0.0
    %2127 = vmatpush2.msra.mxu0 0.0
    %2128 = vmatprep.subr.mxu0 0.0
    %2129 = vmatpush2.msra.mxu0 0.0
    %2130 = vmatprep.subr.mxu0 0.0
    %2131 = vmatpush2.msra.mxu0 0.0
    %2132 = vmatprep.subr.mxu0 0.0
    %2133 = vmatpush2.msra.mxu0 0.0
    %2134 = vmatprep.subr.mxu0 0.0
    %2135 = vmatpush2.msra.mxu0 0.0
    %2136 = vmatprep.subr.mxu0 0.0
    %2137 = vmatpush2.msra.mxu0 0.0
    %2138 = vmatprep.subr.mxu0 0.0
    %2139 = vmatpush2.msra.mxu0 0.0
    %2140 = vmatprep.subr.mxu0 0.0
    %2141 = vmatpush2.msra.mxu0 0.0
    %2142 = vmatprep.subr.mxu0 0.0
    %2143 = vmatpush2.msra.mxu0 0.0
    %2144 = vmatprep.subr.mxu0 0.0
    %2145 = vmatpush2.msra.mxu0 0.0
    %2146 = vmatprep.subr.mxu0 0.0
    %2147 = vmatpush2.msra.mxu0 0.0
    %2148 = vmatprep.subr.mxu0 0.0
    %2149 = vmatpush2.msra.mxu0 0.0
    %2150 = vmatprep.mubr.f32.mxu0 0.0
    %2151 = vmatmul.mubr.f32.gmra.mxu0 %v2084
    %v2152 = vpop.f32.mrf.mxu0
    %v2153 = vadd.f32 0.0, %v2152
    %v2154 = vpop.f32.mrf.mxu0
    %v2155 = vadd.f32 0.0, %v2154
    %2156 = vdwg.mxu0
    %v2159 = vrot.slane %v2153, 3
    %v2160 = vrot.slane %v2155, 3
    %v2161 = vrot.slane %v2153, 4
    %v2162 = vrot.slane %v2155, 4
    %v2163 = vrot.slane %v2153, 5
    %v2164 = vrot.slane %v2155, 5
    %v2165 = vrot.slane %v2153, 6
    %v2166 = vrot.slane %v2155, 6
    %v2167 = vrot.slane %v2153, 7
    %v2168 = vrot.slane %v2155, 7
    %v2169 = vrot.slane %v2153, 1
    %v2170 = vrot.slane %v2155, 1
    %v2171 = vrot.slane %v2153, 2
    %v2172 = vrot.slane %v2155, 2
    %v2189 = vadd.f32 %v236, %v2159
    %v2190 = vadd.f32 %v238, %v2160
    %v2191 = vadd.f32 %v242, %v2161
    %v2192 = vadd.f32 %v244, %v2162
    %v2193 = vadd.f32 %v248, %v2163
    %v2194 = vadd.f32 %v250, %v2164
    %v2195 = vadd.f32 %v254, %v2165
    %v2196 = vadd.f32 %v256, %v2166
    %v2197 = vadd.f32 %v260, %v2167
    %v2198 = vadd.f32 %v262, %v2168
    %v2199 = vadd.f32 %v266, %v2153
    %v2200 = vadd.f32 %v268, %v2155
    %v2201 = vadd.f32 %v272, %v2169
    %v2202 = vadd.f32 %v274, %v2170
    %v2203 = vadd.f32 %v278, %v2171
    %v2204 = vadd.f32 %v280, %v2172
    %v2205 = vxor.u32 %v2189, 2147483648
    %v2206 = vxor.u32 %v2191, 2147483648
    %v2207 = vxor.u32 %v2193, 2147483648
    %v2208 = vxor.u32 %v2195, 2147483648
    %v2209 = vxor.u32 %v2197, 2147483648
    %v2210 = vxor.u32 %v2199, 2147483648
    %v2211 = vxor.u32 %v2201, 2147483648
    %v2212 = vxor.u32 %v2203, 2147483648
    %v2213 = vmul.f32 %v2205, 1.442695
    %v2214 = vpow.pop %v2213
    %v2215 = vmul.f32 %v2206, 1.442695
    %v2216 = vpow.pop %v2215
    %v2217 = vmul.f32 %v2207, 1.442695
    %v2218 = vpow.pop %v2217
    %v2219 = vmul.f32 %v2208, 1.442695
    %v2220 = vpow.pop %v2219
    %v2221 = vmul.f32 %v2209, 1.442695
    %v2222 = vpow.pop %v2221
    %v2223 = vmul.f32 %v2210, 1.442695
    %v2224 = vpow.pop %v2223
    %v2225 = vmul.f32 %v2211, 1.442695
    %v2226 = vpow.pop %v2225
    %v2227 = vmul.f32 %v2212, 1.442695
    %v2228 = vpow.pop %v2227
    %v2229 = vadd.f32 %v2214, 1.0
    %v2230 = vadd.f32 %v2216, 1.0
    %v2231 = vadd.f32 %v2218, 1.0
    %v2232 = vadd.f32 %v2220, 1.0
    %v2233 = vadd.f32 %v2222, 1.0
    %v2234 = vadd.f32 %v2224, 1.0
    %v2235 = vadd.f32 %v2226, 1.0
    %v2236 = vadd.f32 %v2228, 1.0
    %v2237 = vrcp.pop %v2229
    %v2238 = vmul.f32 1.0, %v2237
    %v2239 = vrcp.pop %v2230
    %v2240 = vmul.f32 1.0, %v2239
    %v2241 = vrcp.pop %v2231
    %v2242 = vmul.f32 1.0, %v2241
    %v2243 = vrcp.pop %v2232
    %v2244 = vmul.f32 1.0, %v2243
    %v2245 = vrcp.pop %v2233
    %v2246 = vmul.f32 1.0, %v2245
    %v2247 = vrcp.pop %v2234
    %v2248 = vmul.f32 1.0, %v2247
    %v2249 = vrcp.pop %v2235
    %v2250 = vmul.f32 1.0, %v2249
    %v2251 = vrcp.pop %v2236
    %v2252 = vmul.f32 1.0, %v2251
    %v2253 = vtanh.pop %v2190
    %v2254 = vtanh.pop %v2192
    %v2255 = vtanh.pop %v2194
    %v2256 = vtanh.pop %v2196
    %v2257 = vtanh.pop %v2198
    %v2258 = vtanh.pop %v2200
    %v2259 = vtanh.pop %v2202
    %v2260 = vtanh.pop %v2204
    %v2261 = vxor.u32 %v2190, 2147483648
    %v2262 = vxor.u32 %v2192, 2147483648
    %v2263 = vxor.u32 %v2194, 2147483648
    %v2264 = vxor.u32 %v2196, 2147483648
    %v2265 = vxor.u32 %v2198, 2147483648
    %v2266 = vxor.u32 %v2200, 2147483648
    %v2267 = vxor.u32 %v2202, 2147483648
    %v2268 = vxor.u32 %v2204, 2147483648
    %v2269 = vmul.f32 %v2261, 1.442695
    %v2270 = vpow.pop %v2269
    %v2271 = vmul.f32 %v2262, 1.442695
    %v2272 = vpow.pop %v2271
    %v2273 = vmul.f32 %v2263, 1.442695
    %v2274 = vpow.pop %v2273
    %v2275 = vmul.f32 %v2264, 1.442695
    %v2276 = vpow.pop %v2275
    %v2277 = vmul.f32 %v2265, 1.442695
    %v2278 = vpow.pop %v2277
    %v2279 = vmul.f32 %v2266, 1.442695
    %v2280 = vpow.pop %v2279
    %v2281 = vmul.f32 %v2267, 1.442695
    %v2282 = vpow.pop %v2281
    %v2283 = vmul.f32 %v2268, 1.442695
    %v2284 = vpow.pop %v2283
    %v2285 = vadd.f32 %v2270, 1.0
    %v2286 = vadd.f32 %v2272, 1.0
    %v2287 = vadd.f32 %v2274, 1.0
    %v2288 = vadd.f32 %v2276, 1.0
    %v2289 = vadd.f32 %v2278, 1.0
    %v2290 = vadd.f32 %v2280, 1.0
    %v2291 = vadd.f32 %v2282, 1.0
    %v2292 = vadd.f32 %v2284, 1.0
    %v2293 = vrcp.pop %v2285
    %v2294 = vmul.f32 1.0, %v2293
    %v2295 = vrcp.pop %v2286
    %v2296 = vmul.f32 1.0, %v2295
    %v2297 = vrcp.pop %v2287
    %v2298 = vmul.f32 1.0, %v2297
    %v2299 = vrcp.pop %v2288
    %v2300 = vmul.f32 1.0, %v2299
    %v2301 = vrcp.pop %v2289
    %v2302 = vmul.f32 1.0, %v2301
    %v2303 = vrcp.pop %v2290
    %v2304 = vmul.f32 1.0, %v2303
    %v2305 = vrcp.pop %v2291
    %v2306 = vmul.f32 1.0, %v2305
    %v2307 = vrcp.pop %v2292
    %v2308 = vmul.f32 1.0, %v2307
    %v2317 = vrot.slane %v2013, 7
    %v2318 = vrot.slane %v2014, 7
    %v2319 = vrot.slane %v2015, 7
    %v2320 = vrot.slane %v2016, 7
    %v2321 = vrot.slane %v2017, 7
    %v2322 = vrot.slane %v2018, 7
    %v2323 = vrot.slane %v2019, 7
    %v2324 = vrot.slane %v2020, 7
    %v2333 = vmul.f32 %v2238, %v2317
    %v2334 = vmul.f32 %v2240, %v2318
    %v2335 = vmul.f32 %v2242, %v2319
    %v2336 = vmul.f32 %v2244, %v2320
    %v2337 = vmul.f32 %v2246, %v2321
    %v2338 = vmul.f32 %v2248, %v2322
    %v2339 = vmul.f32 %v2250, %v2323
    %v2340 = vmul.f32 %v2252, %v2324
    %v2341 = vmul.f32 %v2238, %v2253
    %v2342 = vmul.f32 %v2240, %v2254
    %v2343 = vmul.f32 %v2242, %v2255
    %v2344 = vmul.f32 %v2244, %v2256
    %v2345 = vmul.f32 %v2246, %v2257
    %v2346 = vmul.f32 %v2248, %v2258
    %v2347 = vmul.f32 %v2250, %v2259
    %v2348 = vmul.f32 %v2252, %v2260
    %2357 = vrot.lane.b32.xlu0 %v2341, 64
    %v2358 = vpop.permute.xlu0 %2357
    %2359 = vrot.lane.b32.xlu0 %v2342, 64
    %v2360 = vpop.permute.xlu0 %2359
    %2361 = vrot.lane.b32.xlu0 %v2343, 64
    %v2362 = vpop.permute.xlu0 %2361
    %2363 = vrot.lane.b32.xlu0 %v2344, 64
    %v2364 = vpop.permute.xlu0 %2363
    %2365 = vrot.lane.b32.xlu0 %v2345, 64
    %v2366 = vpop.permute.xlu0 %2365
    %2367 = vrot.lane.b32.xlu0 %v2346, 64
    %v2368 = vpop.permute.xlu0 %2367
    %2369 = vrot.lane.b32.xlu0 %v2347, 64
    %v2370 = vpop.permute.xlu0 %2369
    %2371 = vrot.lane.b32.xlu0 %v2348, 64
    %v2372 = vpop.permute.xlu0 %2371
    %v2381 = vadd.f32 %v2333, %v2358
    %v2382 = vadd.f32 %v2334, %v2360
    %v2383 = vadd.f32 %v2335, %v2362
    %v2384 = vadd.f32 %v2336, %v2364
    %v2385 = vadd.f32 %v2337, %v2366
    %v2386 = vadd.f32 %v2338, %v2368
    %v2387 = vadd.f32 %v2339, %v2370
    %v2388 = vadd.f32 %v2340, %v2372
    %v2389 = vtanh.pop %v2381
    %v2390 = vtanh.pop %v2382
    %v2391 = vtanh.pop %v2383
    %v2392 = vtanh.pop %v2384
    %v2393 = vtanh.pop %v2385
    %v2394 = vtanh.pop %v2386
    %v2395 = vtanh.pop %v2387
    %v2396 = vtanh.pop %v2388
    %v2397 = vmul.f32 %v2294, %v2389
    %v2398 = vmul.f32 %v2296, %v2390
    %v2399 = vmul.f32 %v2298, %v2391
    %v2400 = vmul.f32 %v2300, %v2392
    %v2401 = vmul.f32 %v2302, %v2393
    %v2402 = vmul.f32 %v2304, %v2394
    %v2403 = vmul.f32 %v2306, %v2395
    %v2404 = vmul.f32 %v2308, %v2396
    %v2413 = vrot.slane %v2397, 5
    %v2414 = vrot.slane %v2398, 5
    %v2415 = vrot.slane %v2399, 5
    %v2416 = vrot.slane %v2400, 5
    %v2417 = vrot.slane %v2401, 5
    %v2418 = vrot.slane %v2402, 5
    %v2419 = vrot.slane %v2403, 5
    %v2420 = vrot.slane %v2404, 5
    %v2429 = vmax.f32 %v2061, %v2413
    %v2430 = vmax.f32 %v2062, %v2414
    %v2431 = vmax.f32 %v2063, %v2415
    %v2432 = vmax.f32 %v2064, %v2416
    %v2433 = vmax.f32 %v2065, %v2417
    %v2434 = vmax.f32 %v2066, %v2418
    %v2435 = vmax.f32 %v2067, %v2419
    %v2436 = vmax.f32 %v2068, %v2420
    %v2437 = vrot.slane %v2398, 4
    %v2438 = vsel %vm590, %v2437, %v2413
    %v2439 = vrot.slane %v2399, 3
    %v2440 = vsel %vm593, %v2439, %v2438
    %v2441 = vrot.slane %v2400, 2
    %v2442 = vsel %vm596, %v2441, %v2440
    %v2443 = vrot.slane %v2401, 1
    %v2444 = vsel %vm599, %v2443, %v2442
    %v2445 = vsel %vm602, %v2402, %v2444
    %v2446 = vrot.slane %v2403, 7
    %v2447 = vsel %vm605, %v2446, %v2445
    %v2448 = vrot.slane %v2404, 6
    %v2449 = vsel %vm608, %v2448, %v2447
    %2450 = vrot.lane.b32.xlu0 %v2449, 64
    %v2451 = vpop.permute.xlu0 %2450
    %v2452 = vsel %vm282, %v2451, 0
    %2454 = vmatprep.subr.mxu0 0.0
    %2455 = vmatpush1.msra.mxu0 0.0
    %2456 = vmatprep.subr.mxu0 0.0
    %2457 = vmatpush1.msra.mxu0 0.0
    %2458 = vmatprep.subr.mxu0 0.0
    %2459 = vmatpush1.msra.mxu0 0.0
    %2460 = vmatprep.subr.mxu0 0.0
    %2461 = vmatpush1.msra.mxu0 0.0
    %2462 = vmatprep.subr.mxu0 0.0
    %2463 = vmatpush1.msra.mxu0 0.0
    %2464 = vmatprep.subr.mxu0 0.0
    %2465 = vmatpush1.msra.mxu0 0.0
    %2466 = vmatprep.subr.mxu0 0.0
    %2467 = vmatpush1.msra.mxu0 0.0
    %2468 = vmatprep.subr.mxu0 0.0
    %2469 = vmatpush1.msra.mxu0 0.0
    %2470 = vmatprep.subr.mxu0 %v103
    %2471 = vmatpush1.msra.mxu0 %v102
    %2472 = vmatprep.subr.mxu0 %v101
    %2473 = vmatpush1.msra.mxu0 %v100
    %2474 = vmatprep.subr.mxu0 %v99
    %2475 = vmatpush1.msra.mxu0 %v98
    %2476 = vmatprep.subr.mxu0 %v97
    %2477 = vmatpush1.msra.mxu0 %v96
    %2478 = vmatprep.subr.mxu0 %v95
    %2479 = vmatpush1.msra.mxu0 %v94
    %2480 = vmatprep.subr.mxu0 %v93
    %2481 = vmatpush1.msra.mxu0 %v92
    %2482 = vmatprep.subr.mxu0 %v91
    %2483 = vmatpush1.msra.mxu0 %v90
    %2484 = vmatprep.subr.mxu0 %v89
    %2485 = vmatpush1.msra.mxu0 %v88
    %2486 = vmatprep.subr.mxu0 0.0
    %2487 = vmatpush2.msra.mxu0 0.0
    %2488 = vmatprep.subr.mxu0 0.0
    %2489 = vmatpush2.msra.mxu0 0.0
    %2490 = vmatprep.subr.mxu0 0.0
    %2491 = vmatpush2.msra.mxu0 0.0
    %2492 = vmatprep.subr.mxu0 0.0
    %2493 = vmatpush2.msra.mxu0 0.0
    %2494 = vmatprep.subr.mxu0 0.0
    %2495 = vmatpush2.msra.mxu0 0.0
    %2496 = vmatprep.subr.mxu0 0.0
    %2497 = vmatpush2.msra.mxu0 0.0
    %2498 = vmatprep.subr.mxu0 0.0
    %2499 = vmatpush2.msra.mxu0 0.0
    %2500 = vmatprep.subr.mxu0 0.0
    %2501 = vmatpush2.msra.mxu0 0.0
    %2502 = vmatprep.subr.mxu0 0.0
    %2503 = vmatpush2.msra.mxu0 0.0
    %2504 = vmatprep.subr.mxu0 0.0
    %2505 = vmatpush2.msra.mxu0 0.0
    %2506 = vmatprep.subr.mxu0 0.0
    %2507 = vmatpush2.msra.mxu0 0.0
    %2508 = vmatprep.subr.mxu0 0.0
    %2509 = vmatpush2.msra.mxu0 0.0
    %2510 = vmatprep.subr.mxu0 0.0
    %2511 = vmatpush2.msra.mxu0 0.0
    %2512 = vmatprep.subr.mxu0 0.0
    %2513 = vmatpush2.msra.mxu0 0.0
    %2514 = vmatprep.subr.mxu0 0.0
    %2515 = vmatpush2.msra.mxu0 0.0
    %2516 = vmatprep.subr.mxu0 0.0
    %2517 = vmatpush2.msra.mxu0 0.0
    %2518 = vmatprep.mubr.f32.mxu0 0.0
    %2519 = vmatmul.mubr.f32.gmra.mxu0 %v2452
    %v2520 = vpop.f32.mrf.mxu0
    %v2521 = vadd.f32 0.0, %v2520
    %v2522 = vpop.f32.mrf.mxu0
    %v2523 = vadd.f32 0.0, %v2522
    %2524 = vdwg.mxu0
    %v2527 = vrot.slane %v2521, 2
    %v2528 = vrot.slane %v2523, 2
    %v2529 = vrot.slane %v2521, 3
    %v2530 = vrot.slane %v2523, 3
    %v2531 = vrot.slane %v2521, 4
    %v2532 = vrot.slane %v2523, 4
    %v2533 = vrot.slane %v2521, 5
    %v2534 = vrot.slane %v2523, 5
    %v2535 = vrot.slane %v2521, 6
    %v2536 = vrot.slane %v2523, 6
    %v2537 = vrot.slane %v2521, 7
    %v2538 = vrot.slane %v2523, 7
    %v2539 = vrot.slane %v2521, 1
    %v2540 = vrot.slane %v2523, 1
    %v2557 = vadd.f32 %v236, %v2527
    %v2558 = vadd.f32 %v238, %v2528
    %v2559 = vadd.f32 %v242, %v2529
    %v2560 = vadd.f32 %v244, %v2530
    %v2561 = vadd.f32 %v248, %v2531
    %v2562 = vadd.f32 %v250, %v2532
    %v2563 = vadd.f32 %v254, %v2533
    %v2564 = vadd.f32 %v256, %v2534
    %v2565 = vadd.f32 %v260, %v2535
    %v2566 = vadd.f32 %v262, %v2536
    %v2567 = vadd.f32 %v266, %v2537
    %v2568 = vadd.f32 %v268, %v2538
    %v2569 = vadd.f32 %v272, %v2521
    %v2570 = vadd.f32 %v274, %v2523
    %v2571 = vadd.f32 %v278, %v2539
    %v2572 = vadd.f32 %v280, %v2540
    %v2573 = vxor.u32 %v2557, 2147483648
    %v2574 = vxor.u32 %v2559, 2147483648
    %v2575 = vxor.u32 %v2561, 2147483648
    %v2576 = vxor.u32 %v2563, 2147483648
    %v2577 = vxor.u32 %v2565, 2147483648
    %v2578 = vxor.u32 %v2567, 2147483648
    %v2579 = vxor.u32 %v2569, 2147483648
    %v2580 = vxor.u32 %v2571, 2147483648
    %v2581 = vmul.f32 %v2573, 1.442695
    %v2582 = vpow.pop %v2581
    %v2583 = vmul.f32 %v2574, 1.442695
    %v2584 = vpow.pop %v2583
    %v2585 = vmul.f32 %v2575, 1.442695
    %v2586 = vpow.pop %v2585
    %v2587 = vmul.f32 %v2576, 1.442695
    %v2588 = vpow.pop %v2587
    %v2589 = vmul.f32 %v2577, 1.442695
    %v2590 = vpow.pop %v2589
    %v2591 = vmul.f32 %v2578, 1.442695
    %v2592 = vpow.pop %v2591
    %v2593 = vmul.f32 %v2579, 1.442695
    %v2594 = vpow.pop %v2593
    %v2595 = vmul.f32 %v2580, 1.442695
    %v2596 = vpow.pop %v2595
    %v2597 = vadd.f32 %v2582, 1.0
    %v2598 = vadd.f32 %v2584, 1.0
    %v2599 = vadd.f32 %v2586, 1.0
    %v2600 = vadd.f32 %v2588, 1.0
    %v2601 = vadd.f32 %v2590, 1.0
    %v2602 = vadd.f32 %v2592, 1.0
    %v2603 = vadd.f32 %v2594, 1.0
    %v2604 = vadd.f32 %v2596, 1.0
    %v2605 = vrcp.pop %v2597
    %v2606 = vmul.f32 1.0, %v2605
    %v2607 = vrcp.pop %v2598
    %v2608 = vmul.f32 1.0, %v2607
    %v2609 = vrcp.pop %v2599
    %v2610 = vmul.f32 1.0, %v2609
    %v2611 = vrcp.pop %v2600
    %v2612 = vmul.f32 1.0, %v2611
    %v2613 = vrcp.pop %v2601
    %v2614 = vmul.f32 1.0, %v2613
    %v2615 = vrcp.pop %v2602
    %v2616 = vmul.f32 1.0, %v2615
    %v2617 = vrcp.pop %v2603
    %v2618 = vmul.f32 1.0, %v2617
    %v2619 = vrcp.pop %v2604
    %v2620 = vmul.f32 1.0, %v2619
    %v2621 = vtanh.pop %v2558
    %v2622 = vtanh.pop %v2560
    %v2623 = vtanh.pop %v2562
    %v2624 = vtanh.pop %v2564
    %v2625 = vtanh.pop %v2566
    %v2626 = vtanh.pop %v2568
    %v2627 = vtanh.pop %v2570
    %v2628 = vtanh.pop %v2572
    %v2629 = vxor.u32 %v2558, 2147483648
    %v2630 = vxor.u32 %v2560, 2147483648
    %v2631 = vxor.u32 %v2562, 2147483648
    %v2632 = vxor.u32 %v2564, 2147483648
    %v2633 = vxor.u32 %v2566, 2147483648
    %v2634 = vxor.u32 %v2568, 2147483648
    %v2635 = vxor.u32 %v2570, 2147483648
    %v2636 = vxor.u32 %v2572, 2147483648
    %v2637 = vmul.f32 %v2629, 1.442695
    %v2638 = vpow.pop %v2637
    %v2639 = vmul.f32 %v2630, 1.442695
    %v2640 = vpow.pop %v2639
    %v2641 = vmul.f32 %v2631, 1.442695
    %v2642 = vpow.pop %v2641
    %v2643 = vmul.f32 %v2632, 1.442695
    %v2644 = vpow.pop %v2643
    %v2645 = vmul.f32 %v2633, 1.442695
    %v2646 = vpow.pop %v2645
    %v2647 = vmul.f32 %v2634, 1.442695
    %v2648 = vpow.pop %v2647
    %v2649 = vmul.f32 %v2635, 1.442695
    %v2650 = vpow.pop %v2649
    %v2651 = vmul.f32 %v2636, 1.442695
    %v2652 = vpow.pop %v2651
    %v2653 = vadd.f32 %v2638, 1.0
    %v2654 = vadd.f32 %v2640, 1.0
    %v2655 = vadd.f32 %v2642, 1.0
    %v2656 = vadd.f32 %v2644, 1.0
    %v2657 = vadd.f32 %v2646, 1.0
    %v2658 = vadd.f32 %v2648, 1.0
    %v2659 = vadd.f32 %v2650, 1.0
    %v2660 = vadd.f32 %v2652, 1.0
    %v2661 = vrcp.pop %v2653
    %v2662 = vmul.f32 1.0, %v2661
    %v2663 = vrcp.pop %v2654
    %v2664 = vmul.f32 1.0, %v2663
    %v2665 = vrcp.pop %v2655
    %v2666 = vmul.f32 1.0, %v2665
    %v2667 = vrcp.pop %v2656
    %v2668 = vmul.f32 1.0, %v2667
    %v2669 = vrcp.pop %v2657
    %v2670 = vmul.f32 1.0, %v2669
    %v2671 = vrcp.pop %v2658
    %v2672 = vmul.f32 1.0, %v2671
    %v2673 = vrcp.pop %v2659
    %v2674 = vmul.f32 1.0, %v2673
    %v2675 = vrcp.pop %v2660
    %v2676 = vmul.f32 1.0, %v2675
    %v2685 = vrot.slane %v2381, 7
    %v2686 = vrot.slane %v2382, 7
    %v2687 = vrot.slane %v2383, 7
    %v2688 = vrot.slane %v2384, 7
    %v2689 = vrot.slane %v2385, 7
    %v2690 = vrot.slane %v2386, 7
    %v2691 = vrot.slane %v2387, 7
    %v2692 = vrot.slane %v2388, 7
    %v2701 = vmul.f32 %v2606, %v2685
    %v2702 = vmul.f32 %v2608, %v2686
    %v2703 = vmul.f32 %v2610, %v2687
    %v2704 = vmul.f32 %v2612, %v2688
    %v2705 = vmul.f32 %v2614, %v2689
    %v2706 = vmul.f32 %v2616, %v2690
    %v2707 = vmul.f32 %v2618, %v2691
    %v2708 = vmul.f32 %v2620, %v2692
    %v2709 = vmul.f32 %v2606, %v2621
    %v2710 = vmul.f32 %v2608, %v2622
    %v2711 = vmul.f32 %v2610, %v2623
    %v2712 = vmul.f32 %v2612, %v2624
    %v2713 = vmul.f32 %v2614, %v2625
    %v2714 = vmul.f32 %v2616, %v2626
    %v2715 = vmul.f32 %v2618, %v2627
    %v2716 = vmul.f32 %v2620, %v2628
    %2725 = vrot.lane.b32.xlu0 %v2709, 64
    %v2726 = vpop.permute.xlu0 %2725
    %2727 = vrot.lane.b32.xlu0 %v2710, 64
    %v2728 = vpop.permute.xlu0 %2727
    %2729 = vrot.lane.b32.xlu0 %v2711, 64
    %v2730 = vpop.permute.xlu0 %2729
    %2731 = vrot.lane.b32.xlu0 %v2712, 64
    %v2732 = vpop.permute.xlu0 %2731
    %2733 = vrot.lane.b32.xlu0 %v2713, 64
    %v2734 = vpop.permute.xlu0 %2733
    %2735 = vrot.lane.b32.xlu0 %v2714, 64
    %v2736 = vpop.permute.xlu0 %2735
    %2737 = vrot.lane.b32.xlu0 %v2715, 64
    %v2738 = vpop.permute.xlu0 %2737
    %2739 = vrot.lane.b32.xlu0 %v2716, 64
    %v2740 = vpop.permute.xlu0 %2739
    %v2749 = vadd.f32 %v2701, %v2726
    %v2750 = vadd.f32 %v2702, %v2728
    %v2751 = vadd.f32 %v2703, %v2730
    %v2752 = vadd.f32 %v2704, %v2732
    %v2753 = vadd.f32 %v2705, %v2734
    %v2754 = vadd.f32 %v2706, %v2736
    %v2755 = vadd.f32 %v2707, %v2738
    %v2756 = vadd.f32 %v2708, %v2740
    %v2757 = vtanh.pop %v2749
    %v2758 = vtanh.pop %v2750
    %v2759 = vtanh.pop %v2751
    %v2760 = vtanh.pop %v2752
    %v2761 = vtanh.pop %v2753
    %v2762 = vtanh.pop %v2754
    %v2763 = vtanh.pop %v2755
    %v2764 = vtanh.pop %v2756
    %v2765 = vmul.f32 %v2662, %v2757
    %v2766 = vmul.f32 %v2664, %v2758
    %v2767 = vmul.f32 %v2666, %v2759
    %v2768 = vmul.f32 %v2668, %v2760
    %v2769 = vmul.f32 %v2670, %v2761
    %v2770 = vmul.f32 %v2672, %v2762
    %v2771 = vmul.f32 %v2674, %v2763
    %v2772 = vmul.f32 %v2676, %v2764
    %v2781 = vrot.slane %v2765, 6
    %v2782 = vrot.slane %v2766, 6
    %v2783 = vrot.slane %v2767, 6
    %v2784 = vrot.slane %v2768, 6
    %v2785 = vrot.slane %v2769, 6
    %v2786 = vrot.slane %v2770, 6
    %v2787 = vrot.slane %v2771, 6
    %v2788 = vrot.slane %v2772, 6
    %v2797 = vmax.f32 %v2429, %v2781
    %v2798 = vmax.f32 %v2430, %v2782
    %v2799 = vmax.f32 %v2431, %v2783
    %v2800 = vmax.f32 %v2432, %v2784
    %v2801 = vmax.f32 %v2433, %v2785
    %v2802 = vmax.f32 %v2434, %v2786
    %v2803 = vmax.f32 %v2435, %v2787
    %v2804 = vmax.f32 %v2436, %v2788
    %v2805 = vrot.slane %v2766, 5
    %v2806 = vsel %vm590, %v2805, %v2781
    %v2807 = vrot.slane %v2767, 4
    %v2808 = vsel %vm593, %v2807, %v2806
    %v2809 = vrot.slane %v2768, 3
    %v2810 = vsel %vm596, %v2809, %v2808
    %v2811 = vrot.slane %v2769, 2
    %v2812 = vsel %vm599, %v2811, %v2810
    %v2813 = vrot.slane %v2770, 1
    %v2814 = vsel %vm602, %v2813, %v2812
    %v2815 = vsel %vm605, %v2771, %v2814
    %v2816 = vrot.slane %v2772, 7
    %v2817 = vsel %vm608, %v2816, %v2815
    %2818 = vrot.lane.b32.xlu0 %v2817, 64
    %v2819 = vpop.permute.xlu0 %2818
    %v2820 = vsel %vm282, %v2819, 0
    %2822 = vmatprep.subr.mxu0 0.0
    %2823 = vmatpush1.msra.mxu0 0.0
    %2824 = vmatprep.subr.mxu0 0.0
    %2825 = vmatpush1.msra.mxu0 0.0
    %2826 = vmatprep.subr.mxu0 0.0
    %2827 = vmatpush1.msra.mxu0 0.0
    %2828 = vmatprep.subr.mxu0 0.0
    %2829 = vmatpush1.msra.mxu0 0.0
    %2830 = vmatprep.subr.mxu0 0.0
    %2831 = vmatpush1.msra.mxu0 0.0
    %2832 = vmatprep.subr.mxu0 0.0
    %2833 = vmatpush1.msra.mxu0 0.0
    %2834 = vmatprep.subr.mxu0 0.0
    %2835 = vmatpush1.msra.mxu0 0.0
    %2836 = vmatprep.subr.mxu0 0.0
    %2837 = vmatpush1.msra.mxu0 0.0
    %2838 = vmatprep.subr.mxu0 %v103
    %2839 = vmatpush1.msra.mxu0 %v102
    %2840 = vmatprep.subr.mxu0 %v101
    %2841 = vmatpush1.msra.mxu0 %v100
    %2842 = vmatprep.subr.mxu0 %v99
    %2843 = vmatpush1.msra.mxu0 %v98
    %2844 = vmatprep.subr.mxu0 %v97
    %2845 = vmatpush1.msra.mxu0 %v96
    %2846 = vmatprep.subr.mxu0 %v95
    %2847 = vmatpush1.msra.mxu0 %v94
    %2848 = vmatprep.subr.mxu0 %v93
    %2849 = vmatpush1.msra.mxu0 %v92
    %2850 = vmatprep.subr.mxu0 %v91
    %2851 = vmatpush1.msra.mxu0 %v90
    %2852 = vmatprep.subr.mxu0 %v89
    %2853 = vmatpush1.msra.mxu0 %v88
    %2854 = vmatprep.subr.mxu0 0.0
    %2855 = vmatpush2.msra.mxu0 0.0
    %2856 = vmatprep.subr.mxu0 0.0
    %2857 = vmatpush2.msra.mxu0 0.0
    %2858 = vmatprep.subr.mxu0 0.0
    %2859 = vmatpush2.msra.mxu0 0.0
    %2860 = vmatprep.subr.mxu0 0.0
    %2861 = vmatpush2.msra.mxu0 0.0
    %2862 = vmatprep.subr.mxu0 0.0
    %2863 = vmatpush2.msra.mxu0 0.0
    %2864 = vmatprep.subr.mxu0 0.0
    %2865 = vmatpush2.msra.mxu0 0.0
    %2866 = vmatprep.subr.mxu0 0.0
    %2867 = vmatpush2.msra.mxu0 0.0
    %2868 = vmatprep.subr.mxu0 0.0
    %2869 = vmatpush2.msra.mxu0 0.0
    %2870 = vmatprep.subr.mxu0 0.0
    %2871 = vmatpush2.msra.mxu0 0.0
    %2872 = vmatprep.subr.mxu0 0.0
    %2873 = vmatpush2.msra.mxu0 0.0
    %2874 = vmatprep.subr.mxu0 0.0
    %2875 = vmatpush2.msra.mxu0 0.0
    %2876 = vmatprep.subr.mxu0 0.0
    %2877 = vmatpush2.msra.mxu0 0.0
    %2878 = vmatprep.subr.mxu0 0.0
    %2879 = vmatpush2.msra.mxu0 0.0
    %2880 = vmatprep.subr.mxu0 0.0
    %2881 = vmatpush2.msra.mxu0 0.0
    %2882 = vmatprep.subr.mxu0 0.0
    %2883 = vmatpush2.msra.mxu0 0.0
    %2884 = vmatprep.subr.mxu0 0.0
    %2885 = vmatpush2.msra.mxu0 0.0
    %2886 = vmatprep.mubr.f32.mxu0 0.0
    %2887 = vmatmul.mubr.f32.gmra.mxu0 %v2820
    %v2888 = vpop.f32.mrf.mxu0
    %v2889 = vadd.f32 0.0, %v2888
    %v2890 = vpop.f32.mrf.mxu0
    %v2891 = vadd.f32 0.0, %v2890
    %2892 = vdwg.mxu0
    %v2895 = vrot.slane %v2889, 1
    %v2896 = vrot.slane %v2891, 1
    %v2897 = vrot.slane %v2889, 2
    %v2898 = vrot.slane %v2891, 2
    %v2899 = vrot.slane %v2889, 3
    %v2900 = vrot.slane %v2891, 3
    %v2901 = vrot.slane %v2889, 4
    %v2902 = vrot.slane %v2891, 4
    %v2903 = vrot.slane %v2889, 5
    %v2904 = vrot.slane %v2891, 5
    %v2905 = vrot.slane %v2889, 6
    %v2906 = vrot.slane %v2891, 6
    %v2907 = vrot.slane %v2889, 7
    %v2908 = vrot.slane %v2891, 7
    %v2925 = vadd.f32 %v236, %v2895
    %v2926 = vadd.f32 %v238, %v2896
    %v2927 = vadd.f32 %v242, %v2897
    %v2928 = vadd.f32 %v244, %v2898
    %v2929 = vadd.f32 %v248, %v2899
    %v2930 = vadd.f32 %v250, %v2900
    %v2931 = vadd.f32 %v254, %v2901
    %v2932 = vadd.f32 %v256, %v2902
    %v2933 = vadd.f32 %v260, %v2903
    %v2934 = vadd.f32 %v262, %v2904
    %v2935 = vadd.f32 %v266, %v2905
    %v2936 = vadd.f32 %v268, %v2906
    %v2937 = vadd.f32 %v272, %v2907
    %v2938 = vadd.f32 %v274, %v2908
    %v2939 = vadd.f32 %v278, %v2889
    %v2940 = vadd.f32 %v280, %v2891
    %v2941 = vxor.u32 %v2925, 2147483648
    %v2942 = vxor.u32 %v2927, 2147483648
    %v2943 = vxor.u32 %v2929, 2147483648
    %v2944 = vxor.u32 %v2931, 2147483648
    %v2945 = vxor.u32 %v2933, 2147483648
    %v2946 = vxor.u32 %v2935, 2147483648
    %v2947 = vxor.u32 %v2937, 2147483648
    %v2948 = vxor.u32 %v2939, 2147483648
    %v2949 = vmul.f32 %v2941, 1.442695
    %v2950 = vpow.pop %v2949
    %v2951 = vmul.f32 %v2942, 1.442695
    %v2952 = vpow.pop %v2951
    %v2953 = vmul.f32 %v2943, 1.442695
    %v2954 = vpow.pop %v2953
    %v2955 = vmul.f32 %v2944, 1.442695
    %v2956 = vpow.pop %v2955
    %v2957 = vmul.f32 %v2945, 1.442695
    %v2958 = vpow.pop %v2957
    %v2959 = vmul.f32 %v2946, 1.442695
    %v2960 = vpow.pop %v2959
    %v2961 = vmul.f32 %v2947, 1.442695
    %v2962 = vpow.pop %v2961
    %v2963 = vmul.f32 %v2948, 1.442695
    %v2964 = vpow.pop %v2963
    %v2965 = vadd.f32 %v2950, 1.0
    %v2966 = vadd.f32 %v2952, 1.0
    %v2967 = vadd.f32 %v2954, 1.0
    %v2968 = vadd.f32 %v2956, 1.0
    %v2969 = vadd.f32 %v2958, 1.0
    %v2970 = vadd.f32 %v2960, 1.0
    %v2971 = vadd.f32 %v2962, 1.0
    %v2972 = vadd.f32 %v2964, 1.0
    %v2973 = vrcp.pop %v2965
    %v2974 = vmul.f32 1.0, %v2973
    %v2975 = vrcp.pop %v2966
    %v2976 = vmul.f32 1.0, %v2975
    %v2977 = vrcp.pop %v2967
    %v2978 = vmul.f32 1.0, %v2977
    %v2979 = vrcp.pop %v2968
    %v2980 = vmul.f32 1.0, %v2979
    %v2981 = vrcp.pop %v2969
    %v2982 = vmul.f32 1.0, %v2981
    %v2983 = vrcp.pop %v2970
    %v2984 = vmul.f32 1.0, %v2983
    %v2985 = vrcp.pop %v2971
    %v2986 = vmul.f32 1.0, %v2985
    %v2987 = vrcp.pop %v2972
    %v2988 = vmul.f32 1.0, %v2987
    %v2989 = vtanh.pop %v2926
    %v2990 = vtanh.pop %v2928
    %v2991 = vtanh.pop %v2930
    %v2992 = vtanh.pop %v2932
    %v2993 = vtanh.pop %v2934
    %v2994 = vtanh.pop %v2936
    %v2995 = vtanh.pop %v2938
    %v2996 = vtanh.pop %v2940
    %v2997 = vxor.u32 %v2926, 2147483648
    %v2998 = vxor.u32 %v2928, 2147483648
    %v2999 = vxor.u32 %v2930, 2147483648
    %v3000 = vxor.u32 %v2932, 2147483648
    %v3001 = vxor.u32 %v2934, 2147483648
    %v3002 = vxor.u32 %v2936, 2147483648
    %v3003 = vxor.u32 %v2938, 2147483648
    %v3004 = vxor.u32 %v2940, 2147483648
    %v3005 = vmul.f32 %v2997, 1.442695
    %v3006 = vpow.pop %v3005
    %v3007 = vmul.f32 %v2998, 1.442695
    %v3008 = vpow.pop %v3007
    %v3009 = vmul.f32 %v2999, 1.442695
    %v3010 = vpow.pop %v3009
    %v3011 = vmul.f32 %v3000, 1.442695
    %v3012 = vpow.pop %v3011
    %v3013 = vmul.f32 %v3001, 1.442695
    %v3014 = vpow.pop %v3013
    %v3015 = vmul.f32 %v3002, 1.442695
    %v3016 = vpow.pop %v3015
    %v3017 = vmul.f32 %v3003, 1.442695
    %v3018 = vpow.pop %v3017
    %v3019 = vmul.f32 %v3004, 1.442695
    %v3020 = vpow.pop %v3019
    %v3021 = vadd.f32 %v3006, 1.0
    %v3022 = vadd.f32 %v3008, 1.0
    %v3023 = vadd.f32 %v3010, 1.0
    %v3024 = vadd.f32 %v3012, 1.0
    %v3025 = vadd.f32 %v3014, 1.0
    %v3026 = vadd.f32 %v3016, 1.0
    %v3027 = vadd.f32 %v3018, 1.0
    %v3028 = vadd.f32 %v3020, 1.0
    %v3029 = vrcp.pop %v3021
    %v3030 = vmul.f32 1.0, %v3029
    %v3031 = vrcp.pop %v3022
    %v3032 = vmul.f32 1.0, %v3031
    %v3033 = vrcp.pop %v3023
    %v3034 = vmul.f32 1.0, %v3033
    %v3035 = vrcp.pop %v3024
    %v3036 = vmul.f32 1.0, %v3035
    %v3037 = vrcp.pop %v3025
    %v3038 = vmul.f32 1.0, %v3037
    %v3039 = vrcp.pop %v3026
    %v3040 = vmul.f32 1.0, %v3039
    %v3041 = vrcp.pop %v3027
    %v3042 = vmul.f32 1.0, %v3041
    %v3043 = vrcp.pop %v3028
    %v3044 = vmul.f32 1.0, %v3043
    %v3053 = vrot.slane %v2749, 7
    %v3054 = vrot.slane %v2750, 7
    %v3055 = vrot.slane %v2751, 7
    %v3056 = vrot.slane %v2752, 7
    %v3057 = vrot.slane %v2753, 7
    %v3058 = vrot.slane %v2754, 7
    %v3059 = vrot.slane %v2755, 7
    %v3060 = vrot.slane %v2756, 7
    %v3069 = vmul.f32 %v2974, %v3053
    %v3070 = vmul.f32 %v2976, %v3054
    %v3071 = vmul.f32 %v2978, %v3055
    %v3072 = vmul.f32 %v2980, %v3056
    %v3073 = vmul.f32 %v2982, %v3057
    %v3074 = vmul.f32 %v2984, %v3058
    %v3075 = vmul.f32 %v2986, %v3059
    %v3076 = vmul.f32 %v2988, %v3060
    %v3077 = vmul.f32 %v2974, %v2989
    %v3078 = vmul.f32 %v2976, %v2990
    %v3079 = vmul.f32 %v2978, %v2991
    %v3080 = vmul.f32 %v2980, %v2992
    %v3081 = vmul.f32 %v2982, %v2993
    %v3082 = vmul.f32 %v2984, %v2994
    %v3083 = vmul.f32 %v2986, %v2995
    %v3084 = vmul.f32 %v2988, %v2996
    %3093 = vrot.lane.b32.xlu0 %v3077, 64
    %v3094 = vpop.permute.xlu0 %3093
    %3095 = vrot.lane.b32.xlu0 %v3078, 64
    %v3096 = vpop.permute.xlu0 %3095
    %3097 = vrot.lane.b32.xlu0 %v3079, 64
    %v3098 = vpop.permute.xlu0 %3097
    %3099 = vrot.lane.b32.xlu0 %v3080, 64
    %v3100 = vpop.permute.xlu0 %3099
    %3101 = vrot.lane.b32.xlu0 %v3081, 64
    %v3102 = vpop.permute.xlu0 %3101
    %3103 = vrot.lane.b32.xlu0 %v3082, 64
    %v3104 = vpop.permute.xlu0 %3103
    %3105 = vrot.lane.b32.xlu0 %v3083, 64
    %v3106 = vpop.permute.xlu0 %3105
    %3107 = vrot.lane.b32.xlu0 %v3084, 64
    %v3108 = vpop.permute.xlu0 %3107
    %v3117 = vadd.f32 %v3069, %v3094
    %v3118 = vadd.f32 %v3070, %v3096
    %v3119 = vadd.f32 %v3071, %v3098
    %v3120 = vadd.f32 %v3072, %v3100
    %v3121 = vadd.f32 %v3073, %v3102
    %v3122 = vadd.f32 %v3074, %v3104
    %v3123 = vadd.f32 %v3075, %v3106
    %v3124 = vadd.f32 %v3076, %v3108
    %v3125 = vtanh.pop %v3117
    %v3126 = vtanh.pop %v3118
    %v3127 = vtanh.pop %v3119
    %v3128 = vtanh.pop %v3120
    %v3129 = vtanh.pop %v3121
    %v3130 = vtanh.pop %v3122
    %v3131 = vtanh.pop %v3123
    %v3132 = vtanh.pop %v3124
    %v3133 = vmul.f32 %v3030, %v3125
    %v3134 = vmul.f32 %v3032, %v3126
    %v3135 = vmul.f32 %v3034, %v3127
    %v3136 = vmul.f32 %v3036, %v3128
    %v3137 = vmul.f32 %v3038, %v3129
    %v3138 = vmul.f32 %v3040, %v3130
    %v3139 = vmul.f32 %v3042, %v3131
    %v3140 = vmul.f32 %v3044, %v3132
    %v3149 = vrot.slane %v3133, 7
    %v3150 = vrot.slane %v3134, 7
    %v3151 = vrot.slane %v3135, 7
    %v3152 = vrot.slane %v3136, 7
    %v3153 = vrot.slane %v3137, 7
    %v3154 = vrot.slane %v3138, 7
    %v3155 = vrot.slane %v3139, 7
    %v3156 = vrot.slane %v3140, 7
    %v3165 = vmax.f32 %v2797, %v3149
    %v3166 = vmax.f32 %v2798, %v3150
    %v3167 = vmax.f32 %v2799, %v3151
    %v3168 = vmax.f32 %v2800, %v3152
    %v3169 = vmax.f32 %v2801, %v3153
    %v3170 = vmax.f32 %v2802, %v3154
    %v3171 = vmax.f32 %v2803, %v3155
    %v3172 = vmax.f32 %v2804, %v3156
    %v3173 = vld [vmem:[#allocation7] sm:$0xff]
    %v3174 = vld [vmem:[#allocation7 + $0x8] sm:$0xff]
    %v3175 = vld [vmem:[#allocation7 + $0x10] sm:$0xff]
    %v3176 = vld [vmem:[#allocation7 + $0x18] sm:$0xff]
    %v3177 = vld [vmem:[#allocation7 + $0x20] sm:$0xff]
    %v3178 = vld [vmem:[#allocation7 + $0x28] sm:$0xff]
    %v3179 = vld [vmem:[#allocation7 + $0x30] sm:$0xff]
    %v3180 = vld [vmem:[#allocation7 + $0x38] sm:$0xff]
    %v3181 = vld [vmem:[#allocation7 + $0x40] sm:$0xff]
    %v3182 = vld [vmem:[#allocation7 + $0x48] sm:$0xff]
    %v3183 = vld [vmem:[#allocation7 + $0x50] sm:$0xff]
    %v3184 = vld [vmem:[#allocation7 + $0x58] sm:$0xff]
    %v3185 = vld [vmem:[#allocation7 + $0x60] sm:$0xff]
    %v3186 = vld [vmem:[#allocation7 + $0x68] sm:$0xff]
    %v3187 = vld [vmem:[#allocation7 + $0x70] sm:$0xff]
    %v3188 = vld [vmem:[#allocation7 + $0x78] sm:$0xff]
    %v3189 = vld [vmem:[%s6] sm:$0x3]
    %v3191 = vlaneseq
    %v3192 = vshrl.u32 %v3191, 7
    %v3193 = vsub.s32 0, %v3192
    %v3194 = vrot.slane %v3189, %v3193
    %v3195 = vlaneseq
    %v3196 = vshrl.u32 %v3195, 7
    %v3197 = vsub.s32 1, %v3196
    %v3198 = vrot.slane %v3189, %v3197
    %v3209 = vrot.slane %v3166, 7
    %v3210 = vsel %vm590, %v3209, %v3165
    %v3211 = vrot.slane %v3167, 6
    %v3212 = vsel %vm593, %v3211, %v3210
    %v3213 = vrot.slane %v3168, 5
    %v3214 = vsel %vm596, %v3213, %v3212
    %v3215 = vrot.slane %v3169, 4
    %v3216 = vsel %vm599, %v3215, %v3214
    %v3217 = vrot.slane %v3170, 3
    %v3218 = vsel %vm602, %v3217, %v3216
    %v3219 = vrot.slane %v3171, 2
    %v3220 = vsel %vm605, %v3219, %v3218
    %v3221 = vrot.slane %v3172, 1
    %v3222 = vsel %vm608, %v3221, %v3220
    %3223 = vrot.lane.b32.xlu0 %v3222, 64
    %v3224 = vpop.permute.xlu0 %3223
    %v3225 = vsel %vm282, %v3224, 0
    %3227 = vmatprep.subr.mxu0 0.0
    %3228 = vmatpush1.msra.mxu0 0.0
    %3229 = vmatprep.subr.mxu0 0.0
    %3230 = vmatpush1.msra.mxu0 0.0
    %3231 = vmatprep.subr.mxu0 0.0
    %3232 = vmatpush1.msra.mxu0 0.0
    %3233 = vmatprep.subr.mxu0 0.0
    %3234 = vmatpush1.msra.mxu0 0.0
    %3235 = vmatprep.subr.mxu0 0.0
    %3236 = vmatpush1.msra.mxu0 0.0
    %3237 = vmatprep.subr.mxu0 0.0
    %3238 = vmatpush1.msra.mxu0 0.0
    %3239 = vmatprep.subr.mxu0 0.0
    %3240 = vmatpush1.msra.mxu0 0.0
    %3241 = vmatprep.subr.mxu0 0.0
    %3242 = vmatpush1.msra.mxu0 0.0
    %3243 = vmatprep.subr.mxu0 %v3188
    %3244 = vmatpush1.msra.mxu0 %v3187
    %3245 = vmatprep.subr.mxu0 %v3186
    %3246 = vmatpush1.msra.mxu0 %v3185
    %3247 = vmatprep.subr.mxu0 %v3184
    %3248 = vmatpush1.msra.mxu0 %v3183
    %3249 = vmatprep.subr.mxu0 %v3182
    %3250 = vmatpush1.msra.mxu0 %v3181
    %3251 = vmatprep.subr.mxu0 %v3180
    %3252 = vmatpush1.msra.mxu0 %v3179
    %3253 = vmatprep.subr.mxu0 %v3178
    %3254 = vmatpush1.msra.mxu0 %v3177
    %3255 = vmatprep.subr.mxu0 %v3176
    %3256 = vmatpush1.msra.mxu0 %v3175
    %3257 = vmatprep.subr.mxu0 %v3174
    %3258 = vmatpush1.msra.mxu0 %v3173
    %3259 = vmatprep.subr.mxu0 0.0
    %3260 = vmatpush2.msra.mxu0 0.0
    %3261 = vmatprep.subr.mxu0 0.0
    %3262 = vmatpush2.msra.mxu0 0.0
    %3263 = vmatprep.subr.mxu0 0.0
    %3264 = vmatpush2.msra.mxu0 0.0
    %3265 = vmatprep.subr.mxu0 0.0
    %3266 = vmatpush2.msra.mxu0 0.0
    %3267 = vmatprep.subr.mxu0 0.0
    %3268 = vmatpush2.msra.mxu0 0.0
    %3269 = vmatprep.subr.mxu0 0.0
    %3270 = vmatpush2.msra.mxu0 0.0
    %3271 = vmatprep.subr.mxu0 0.0
    %3272 = vmatpush2.msra.mxu0 0.0
    %3273 = vmatprep.subr.mxu0 0.0
    %3274 = vmatpush2.msra.mxu0 0.0
    %3275 = vmatprep.subr.mxu0 0.0
    %3276 = vmatpush2.msra.mxu0 0.0
    %3277 = vmatprep.subr.mxu0 0.0
    %3278 = vmatpush2.msra.mxu0 0.0
    %3279 = vmatprep.subr.mxu0 0.0
    %3280 = vmatpush2.msra.mxu0 0.0
    %3281 = vmatprep.subr.mxu0 0.0
    %3282 = vmatpush2.msra.mxu0 0.0
    %3283 = vmatprep.subr.mxu0 0.0
    %3284 = vmatpush2.msra.mxu0 0.0
    %3285 = vmatprep.subr.mxu0 0.0
    %3286 = vmatpush2.msra.mxu0 0.0
    %3287 = vmatprep.subr.mxu0 0.0
    %3288 = vmatpush2.msra.mxu0 0.0
    %3289 = vmatprep.subr.mxu0 0.0
    %3290 = vmatpush2.msra.mxu0 0.0
    %3291 = vmatprep.mubr.f32.mxu0 0.0
    %3292 = vmatmul.mubr.f32.gmra.mxu0 %v3225
    %v3293 = vpop.f32.mrf.mxu0
    %v3294 = vadd.f32 %v3194, %v3293
    %v3295 = vpop.f32.mrf.mxu0
    %v3296 = vadd.f32 %v3198, %v3295
    %3297 = vdwg.mxu0
    %3298 = vmatprep.subr.mxu0 0.0
    %3299 = vmatpush1.msra.mxu0 0.0
    %3300 = vmatprep.subr.mxu0 0.0
    %3301 = vmatpush1.msra.mxu0 0.0
    %3302 = vmatprep.subr.mxu0 0.0
    %3303 = vmatpush1.msra.mxu0 0.0
    %3304 = vmatprep.subr.mxu0 0.0
    %3305 = vmatpush1.msra.mxu0 0.0
    %3306 = vmatprep.subr.mxu0 0.0
    %3307 = vmatpush1.msra.mxu0 0.0
    %3308 = vmatprep.subr.mxu0 0.0
    %3309 = vmatpush1.msra.mxu0 0.0
    %3310 = vmatprep.subr.mxu0 0.0
    %3311 = vmatpush1.msra.mxu0 0.0
    %3312 = vmatprep.subr.mxu0 0.0
    %3313 = vmatpush1.msra.mxu0 0.0
    %3314 = vmatprep.subr.mxu0 %v119
    %3315 = vmatpush1.msra.mxu0 %v118
    %3316 = vmatprep.subr.mxu0 %v117
    %3317 = vmatpush1.msra.mxu0 %v116
    %3318 = vmatprep.subr.mxu0 %v115
    %3319 = vmatpush1.msra.mxu0 %v114
    %3320 = vmatprep.subr.mxu0 %v113
    %3321 = vmatpush1.msra.mxu0 %v112
    %3322 = vmatprep.subr.mxu0 %v111
    %3323 = vmatpush1.msra.mxu0 %v110
    %3324 = vmatprep.subr.mxu0 %v109
    %3325 = vmatpush1.msra.mxu0 %v108
    %3326 = vmatprep.subr.mxu0 %v107
    %3327 = vmatpush1.msra.mxu0 %v106
    %3328 = vmatprep.subr.mxu0 %v105
    %3329 = vmatpush1.msra.mxu0 %v104
    %3330 = vmatprep.subr.mxu0 0.0
    %3331 = vmatpush2.msra.mxu0 0.0
    %3332 = vmatprep.subr.mxu0 0.0
    %3333 = vmatpush2.msra.mxu0 0.0
    %3334 = vmatprep.subr.mxu0 0.0
    %3335 = vmatpush2.msra.mxu0 0.0
    %3336 = vmatprep.subr.mxu0 0.0
    %3337 = vmatpush2.msra.mxu0 0.0
    %3338 = vmatprep.subr.mxu0 0.0
    %3339 = vmatpush2.msra.mxu0 0.0
    %3340 = vmatprep.subr.mxu0 0.0
    %3341 = vmatpush2.msra.mxu0 0.0
    %3342 = vmatprep.subr.mxu0 0.0
    %3343 = vmatpush2.msra.mxu0 0.0
    %3344 = vmatprep.subr.mxu0 0.0
    %3345 = vmatpush2.msra.mxu0 0.0
    %3346 = vmatprep.subr.mxu0 0.0
    %3347 = vmatpush2.msra.mxu0 0.0
    %3348 = vmatprep.subr.mxu0 0.0
    %3349 = vmatpush2.msra.mxu0 0.0
    %3350 = vmatprep.subr.mxu0 0.0
    %3351 = vmatpush2.msra.mxu0 0.0
    %3352 = vmatprep.subr.mxu0 0.0
    %3353 = vmatpush2.msra.mxu0 0.0
    %3354 = vmatprep.subr.mxu0 0.0
    %3355 = vmatpush2.msra.mxu0 0.0
    %3356 = vmatprep.subr.mxu0 0.0
    %3357 = vmatpush2.msra.mxu0 0.0
    %3358 = vmatprep.subr.mxu0 0.0
    %3359 = vmatpush2.msra.mxu0 0.0
    %3360 = vmatprep.subr.mxu0 0.0
    %3361 = vmatpush2.msra.mxu0 0.0
    %3362 = vmatprep.mubr.f32.mxu0 0.0
    %3363 = vmatmul.mubr.f32.gmra.mxu0 %v284
    %v3364 = vpop.f32.mrf.mxu0
    %v3365 = vadd.f32 0.0, %v3364
    %v3366 = vpop.f32.mrf.mxu0
    %v3367 = vadd.f32 0.0, %v3366
    %3368 = vdwg.mxu0
    %v3369 = vadd.f32 %v3294, %v3365
    %v3370 = vadd.f32 %v3296, %v3367
    %v3371 = vxor.u32 %v3369, 2147483648
    %v3372 = vmul.f32 %v3371, 1.442695
    %v3373 = vpow.pop %v3372
    %v3374 = vadd.f32 %v3373, 1.0
    %v3375 = vrcp.pop %v3374
    %v3376 = vmul.f32 1.0, %v3375
    %v3377 = vtanh.pop %v3370
    %v3378 = vxor.u32 %v3370, 2147483648
    %v3379 = vmul.f32 %v3378, 1.442695
    %v3380 = vpow.pop %v3379
    %v3381 = vadd.f32 %v3380, 1.0
    %v3382 = vrcp.pop %v3381
    %v3383 = vmul.f32 1.0, %v3382
    %v3384 = vmul.f32 %v3376, 0.0
    %v3385 = vmul.f32 %v3376, %v3377
    %3387 = vrot.lane.b32.xlu0 %v3385, 64
    %v3388 = vpop.permute.xlu0 %3387
    %v3390 = vadd.f32 %v3384, %v3388
    %v3391 = vtanh.pop %v3390
    %v3392 = vmul.f32 %v3383, %v3391
    %3394 = vrot.lane.b32.xlu0 %v3392, 64
    %v3395 = vpop.permute.xlu0 %3394
    %v3396 = vsel %vm282, %v3395, 0
    %3398 = vmatprep.subr.mxu0 0.0
    %3399 = vmatpush1.msra.mxu0 0.0
    %3400 = vmatprep.subr.mxu0 0.0
    %3401 = vmatpush1.msra.mxu0 0.0
    %3402 = vmatprep.subr.mxu0 0.0
    %3403 = vmatpush1.msra.mxu0 0.0
    %3404 = vmatprep.subr.mxu0 0.0
    %3405 = vmatpush1.msra.mxu0 0.0
    %3406 = vmatprep.subr.mxu0 0.0
    %3407 = vmatpush1.msra.mxu0 0.0
    %3408 = vmatprep.subr.mxu0 0.0
    %3409 = vmatpush1.msra.mxu0 0.0
    %3410 = vmatprep.subr.mxu0 0.0
    %3411 = vmatpush1.msra.mxu0 0.0
    %3412 = vmatprep.subr.mxu0 0.0
    %3413 = vmatpush1.msra.mxu0 0.0
    %3414 = vmatprep.subr.mxu0 %v119
    %3415 = vmatpush1.msra.mxu0 %v118
    %3416 = vmatprep.subr.mxu0 %v117
    %3417 = vmatpush1.msra.mxu0 %v116
    %3418 = vmatprep.subr.mxu0 %v115
    %3419 = vmatpush1.msra.mxu0 %v114
    %3420 = vmatprep.subr.mxu0 %v113
    %3421 = vmatpush1.msra.mxu0 %v112
    %3422 = vmatprep.subr.mxu0 %v111
    %3423 = vmatpush1.msra.mxu0 %v110
    %3424 = vmatprep.subr.mxu0 %v109
    %3425 = vmatpush1.msra.mxu0 %v108
    %3426 = vmatprep.subr.mxu0 %v107
    %3427 = vmatpush1.msra.mxu0 %v106
    %3428 = vmatprep.subr.mxu0 %v105
    %3429 = vmatpush1.msra.mxu0 %v104
    %3430 = vmatprep.subr.mxu0 0.0
    %3431 = vmatpush2.msra.mxu0 0.0
    %3432 = vmatprep.subr.mxu0 0.0
    %3433 = vmatpush2.msra.mxu0 0.0
    %3434 = vmatprep.subr.mxu0 0.0
    %3435 = vmatpush2.msra.mxu0 0.0
    %3436 = vmatprep.subr.mxu0 0.0
    %3437 = vmatpush2.msra.mxu0 0.0
    %3438 = vmatprep.subr.mxu0 0.0
    %3439 = vmatpush2.msra.mxu0 0.0
    %3440 = vmatprep.subr.mxu0 0.0
    %3441 = vmatpush2.msra.mxu0 0.0
    %3442 = vmatprep.subr.mxu0 0.0
    %3443 = vmatpush2.msra.mxu0 0.0
    %3444 = vmatprep.subr.mxu0 0.0
    %3445 = vmatpush2.msra.mxu0 0.0
    %3446 = vmatprep.subr.mxu0 0.0
    %3447 = vmatpush2.msra.mxu0 0.0
    %3448 = vmatprep.subr.mxu0 0.0
    %3449 = vmatpush2.msra.mxu0 0.0
    %3450 = vmatprep.subr.mxu0 0.0
    %3451 = vmatpush2.msra.mxu0 0.0
    %3452 = vmatprep.subr.mxu0 0.0
    %3453 = vmatpush2.msra.mxu0 0.0
    %3454 = vmatprep.subr.mxu0 0.0
    %3455 = vmatpush2.msra.mxu0 0.0
    %3456 = vmatprep.subr.mxu0 0.0
    %3457 = vmatpush2.msra.mxu0 0.0
    %3458 = vmatprep.subr.mxu0 0.0
    %3459 = vmatpush2.msra.mxu0 0.0
    %3460 = vmatprep.subr.mxu0 0.0
    %3461 = vmatpush2.msra.mxu0 0.0
    %3462 = vmatprep.mubr.f32.mxu0 0.0
    %3463 = vmatmul.mubr.f32.gmra.mxu0 %v3396
    %v3464 = vpop.f32.mrf.mxu0
    %v3465 = vadd.f32 0.0, %v3464
    %v3466 = vpop.f32.mrf.mxu0
    %v3467 = vadd.f32 0.0, %v3466
    %3468 = vdwg.mxu0
    %v3469 = vadd.f32 %v3294, %v3465
    %v3470 = vadd.f32 %v3296, %v3467
    %v3471 = vxor.u32 %v3469, 2147483648
    %v3472 = vmul.f32 %v3471, 1.442695
    %v3473 = vpow.pop %v3472
    %v3474 = vadd.f32 %v3473, 1.0
    %v3475 = vrcp.pop %v3474
    %v3476 = vmul.f32 1.0, %v3475
    %v3477 = vtanh.pop %v3470
    %v3478 = vxor.u32 %v3470, 2147483648
    %v3479 = vmul.f32 %v3478, 1.442695
    %v3480 = vpow.pop %v3479
    %v3481 = vadd.f32 %v3480, 1.0
    %v3482 = vrcp.pop %v3481
    %v3483 = vmul.f32 1.0, %v3482
    %v3484 = vmul.f32 %v3476, %v3390
    %v3485 = vmul.f32 %v3476, %v3477
    %3487 = vrot.lane.b32.xlu0 %v3485, 64
    %v3488 = vpop.permute.xlu0 %3487
    %v3490 = vadd.f32 %v3484, %v3488
    %v3491 = vtanh.pop %v3490
    %v3492 = vmul.f32 %v3483, %v3491
    %3494 = vrot.lane.b32.xlu0 %v3492, 64
    %v3495 = vpop.permute.xlu0 %3494
    %v3496 = vsel %vm282, %v3495, 0
    %3498 = vmatprep.subr.mxu0 0.0
    %3499 = vmatpush1.msra.mxu0 0.0
    %3500 = vmatprep.subr.mxu0 0.0
    %3501 = vmatpush1.msra.mxu0 0.0
    %3502 = vmatprep.subr.mxu0 0.0
    %3503 = vmatpush1.msra.mxu0 0.0
    %3504 = vmatprep.subr.mxu0 0.0
    %3505 = vmatpush1.msra.mxu0 0.0
    %3506 = vmatprep.subr.mxu0 0.0
    %3507 = vmatpush1.msra.mxu0 0.0
    %3508 = vmatprep.subr.mxu0 0.0
    %3509 = vmatpush1.msra.mxu0 0.0
    %3510 = vmatprep.subr.mxu0 0.0
    %3511 = vmatpush1.msra.mxu0 0.0
    %3512 = vmatprep.subr.mxu0 0.0
    %3513 = vmatpush1.msra.mxu0 0.0
    %3514 = vmatprep.subr.mxu0 %v119
    %3515 = vmatpush1.msra.mxu0 %v118
    %3516 = vmatprep.subr.mxu0 %v117
    %3517 = vmatpush1.msra.mxu0 %v116
    %3518 = vmatprep.subr.mxu0 %v115
    %3519 = vmatpush1.msra.mxu0 %v114
    %3520 = vmatprep.subr.mxu0 %v113
    %3521 = vmatpush1.msra.mxu0 %v112
    %3522 = vmatprep.subr.mxu0 %v111
    %3523 = vmatpush1.msra.mxu0 %v110
    %3524 = vmatprep.subr.mxu0 %v109
    %3525 = vmatpush1.msra.mxu0 %v108
    %3526 = vmatprep.subr.mxu0 %v107
    %3527 = vmatpush1.msra.mxu0 %v106
    %3528 = vmatprep.subr.mxu0 %v105
    %3529 = vmatpush1.msra.mxu0 %v104
    %3530 = vmatprep.subr.mxu0 0.0
    %3531 = vmatpush2.msra.mxu0 0.0
    %3532 = vmatprep.subr.mxu0 0.0
    %3533 = vmatpush2.msra.mxu0 0.0
    %3534 = vmatprep.subr.mxu0 0.0
    %3535 = vmatpush2.msra.mxu0 0.0
    %3536 = vmatprep.subr.mxu0 0.0
    %3537 = vmatpush2.msra.mxu0 0.0
    %3538 = vmatprep.subr.mxu0 0.0
    %3539 = vmatpush2.msra.mxu0 0.0
    %3540 = vmatprep.subr.mxu0 0.0
    %3541 = vmatpush2.msra.mxu0 0.0
    %3542 = vmatprep.subr.mxu0 0.0
    %3543 = vmatpush2.msra.mxu0 0.0
    %3544 = vmatprep.subr.mxu0 0.0
    %3545 = vmatpush2.msra.mxu0 0.0
    %3546 = vmatprep.subr.mxu0 0.0
    %3547 = vmatpush2.msra.mxu0 0.0
    %3548 = vmatprep.subr.mxu0 0.0
    %3549 = vmatpush2.msra.mxu0 0.0
    %3550 = vmatprep.subr.mxu0 0.0
    %3551 = vmatpush2.msra.mxu0 0.0
    %3552 = vmatprep.subr.mxu0 0.0
    %3553 = vmatpush2.msra.mxu0 0.0
    %3554 = vmatprep.subr.mxu0 0.0
    %3555 = vmatpush2.msra.mxu0 0.0
    %3556 = vmatprep.subr.mxu0 0.0
    %3557 = vmatpush2.msra.mxu0 0.0
    %3558 = vmatprep.subr.mxu0 0.0
    %3559 = vmatpush2.msra.mxu0 0.0
    %3560 = vmatprep.subr.mxu0 0.0
    %3561 = vmatpush2.msra.mxu0 0.0
    %3562 = vmatprep.mubr.f32.mxu0 0.0
    %3563 = vmatmul.mubr.f32.gmra.mxu0 %v3496
    %v3564 = vpop.f32.mrf.mxu0
    %v3565 = vadd.f32 0.0, %v3564
    %v3566 = vpop.f32.mrf.mxu0
    %v3567 = vadd.f32 0.0, %v3566
    %3568 = vdwg.mxu0
    %v3569 = vadd.f32 %v3294, %v3565
    %v3570 = vadd.f32 %v3296, %v3567
    %v3571 = vxor.u32 %v3569, 2147483648
    %v3572 = vmul.f32 %v3571, 1.442695
    %v3573 = vpow.pop %v3572
    %v3574 = vadd.f32 %v3573, 1.0
    %v3575 = vrcp.pop %v3574
    %v3576 = vmul.f32 1.0, %v3575
    %v3577 = vtanh.pop %v3570
    %v3578 = vxor.u32 %v3570, 2147483648
    %v3579 = vmul.f32 %v3578, 1.442695
    %v3580 = vpow.pop %v3579
    %v3581 = vadd.f32 %v3580, 1.0
    %v3582 = vrcp.pop %v3581
    %v3583 = vmul.f32 1.0, %v3582
    %v3584 = vmul.f32 %v3576, %v3490
    %v3585 = vmul.f32 %v3576, %v3577
    %3587 = vrot.lane.b32.xlu0 %v3585, 64
    %v3588 = vpop.permute.xlu0 %3587
    %v3590 = vadd.f32 %v3584, %v3588
    %v3591 = vtanh.pop %v3590
    %v3592 = vmul.f32 %v3583, %v3591
    %3594 = vrot.lane.b32.xlu0 %v3592, 64
    %v3595 = vpop.permute.xlu0 %3594
    %v3596 = vsel %vm282, %v3595, 0
    %3598 = vmatprep.subr.mxu0 0.0
    %3599 = vmatpush1.msra.mxu0 0.0
    %3600 = vmatprep.subr.mxu0 0.0
    %3601 = vmatpush1.msra.mxu0 0.0
    %3602 = vmatprep.subr.mxu0 0.0
    %3603 = vmatpush1.msra.mxu0 0.0
    %3604 = vmatprep.subr.mxu0 0.0
    %3605 = vmatpush1.msra.mxu0 0.0
    %3606 = vmatprep.subr.mxu0 0.0
    %3607 = vmatpush1.msra.mxu0 0.0
    %3608 = vmatprep.subr.mxu0 0.0
    %3609 = vmatpush1.msra.mxu0 0.0
    %3610 = vmatprep.subr.mxu0 0.0
    %3611 = vmatpush1.msra.mxu0 0.0
    %3612 = vmatprep.subr.mxu0 0.0
    %3613 = vmatpush1.msra.mxu0 0.0
    %3614 = vmatprep.subr.mxu0 %v119
    %3615 = vmatpush1.msra.mxu0 %v118
    %3616 = vmatprep.subr.mxu0 %v117
    %3617 = vmatpush1.msra.mxu0 %v116
    %3618 = vmatprep.subr.mxu0 %v115
    %3619 = vmatpush1.msra.mxu0 %v114
    %3620 = vmatprep.subr.mxu0 %v113
    %3621 = vmatpush1.msra.mxu0 %v112
    %3622 = vmatprep.subr.mxu0 %v111
    %3623 = vmatpush1.msra.mxu0 %v110
    %3624 = vmatprep.subr.mxu0 %v109
    %3625 = vmatpush1.msra.mxu0 %v108
    %3626 = vmatprep.subr.mxu0 %v107
    %3627 = vmatpush1.msra.mxu0 %v106
    %3628 = vmatprep.subr.mxu0 %v105
    %3629 = vmatpush1.msra.mxu0 %v104
    %3630 = vmatprep.subr.mxu0 0.0
    %3631 = vmatpush2.msra.mxu0 0.0
    %3632 = vmatprep.subr.mxu0 0.0
    %3633 = vmatpush2.msra.mxu0 0.0
    %3634 = vmatprep.subr.mxu0 0.0
    %3635 = vmatpush2.msra.mxu0 0.0
    %3636 = vmatprep.subr.mxu0 0.0
    %3637 = vmatpush2.msra.mxu0 0.0
    %3638 = vmatprep.subr.mxu0 0.0
    %3639 = vmatpush2.msra.mxu0 0.0
    %3640 = vmatprep.subr.mxu0 0.0
    %3641 = vmatpush2.msra.mxu0 0.0
    %3642 = vmatprep.subr.mxu0 0.0
    %3643 = vmatpush2.msra.mxu0 0.0
    %3644 = vmatprep.subr.mxu0 0.0
    %3645 = vmatpush2.msra.mxu0 0.0
    %3646 = vmatprep.subr.mxu0 0.0
    %3647 = vmatpush2.msra.mxu0 0.0
    %3648 = vmatprep.subr.mxu0 0.0
    %3649 = vmatpush2.msra.mxu0 0.0
    %3650 = vmatprep.subr.mxu0 0.0
    %3651 = vmatpush2.msra.mxu0 0.0
    %3652 = vmatprep.subr.mxu0 0.0
    %3653 = vmatpush2.msra.mxu0 0.0
    %3654 = vmatprep.subr.mxu0 0.0
    %3655 = vmatpush2.msra.mxu0 0.0
    %3656 = vmatprep.subr.mxu0 0.0
    %3657 = vmatpush2.msra.mxu0 0.0
    %3658 = vmatprep.subr.mxu0 0.0
    %3659 = vmatpush2.msra.mxu0 0.0
    %3660 = vmatprep.subr.mxu0 0.0
    %3661 = vmatpush2.msra.mxu0 0.0
    %3662 = vmatprep.mubr.f32.mxu0 0.0
    %3663 = vmatmul.mubr.f32.gmra.mxu0 %v3596
    %v3664 = vpop.f32.mrf.mxu0
    %v3665 = vadd.f32 0.0, %v3664
    %v3666 = vpop.f32.mrf.mxu0
    %v3667 = vadd.f32 0.0, %v3666
    %3668 = vdwg.mxu0
    %v3669 = vadd.f32 %v3294, %v3665
    %v3670 = vadd.f32 %v3296, %v3667
    %v3671 = vxor.u32 %v3669, 2147483648
    %v3672 = vmul.f32 %v3671, 1.442695
    %v3673 = vpow.pop %v3672
    %v3674 = vadd.f32 %v3673, 1.0
    %v3675 = vrcp.pop %v3674
    %v3676 = vmul.f32 1.0, %v3675
    %v3677 = vtanh.pop %v3670
    %v3678 = vxor.u32 %v3670, 2147483648
    %v3679 = vmul.f32 %v3678, 1.442695
    %v3680 = vpow.pop %v3679
    %v3681 = vadd.f32 %v3680, 1.0
    %v3682 = vrcp.pop %v3681
    %v3683 = vmul.f32 1.0, %v3682
    %v3684 = vmul.f32 %v3676, %v3590
    %v3685 = vmul.f32 %v3676, %v3677
    %3687 = vrot.lane.b32.xlu0 %v3685, 64
    %v3688 = vpop.permute.xlu0 %3687
    %v3690 = vadd.f32 %v3684, %v3688
    %v3691 = vtanh.pop %v3690
    %v3692 = vmul.f32 %v3683, %v3691
    %3694 = vrot.lane.b32.xlu0 %v3692, 64
    %v3695 = vpop.permute.xlu0 %3694
    %v3696 = vsel %vm282, %v3695, 0
    %3698 = vmatprep.subr.mxu0 0.0
    %3699 = vmatpush1.msra.mxu0 0.0
    %3700 = vmatprep.subr.mxu0 0.0
    %3701 = vmatpush1.msra.mxu0 0.0
    %3702 = vmatprep.subr.mxu0 0.0
    %3703 = vmatpush1.msra.mxu0 0.0
    %3704 = vmatprep.subr.mxu0 0.0
    %3705 = vmatpush1.msra.mxu0 0.0
    %3706 = vmatprep.subr.mxu0 0.0
    %3707 = vmatpush1.msra.mxu0 0.0
    %3708 = vmatprep.subr.mxu0 0.0
    %3709 = vmatpush1.msra.mxu0 0.0
    %3710 = vmatprep.subr.mxu0 0.0
    %3711 = vmatpush1.msra.mxu0 0.0
    %3712 = vmatprep.subr.mxu0 0.0
    %3713 = vmatpush1.msra.mxu0 0.0
    %3714 = vmatprep.subr.mxu0 %v119
    %3715 = vmatpush1.msra.mxu0 %v118
    %3716 = vmatprep.subr.mxu0 %v117
    %3717 = vmatpush1.msra.mxu0 %v116
    %3718 = vmatprep.subr.mxu0 %v115
    %3719 = vmatpush1.msra.mxu0 %v114
    %3720 = vmatprep.subr.mxu0 %v113
    %3721 = vmatpush1.msra.mxu0 %v112
    %3722 = vmatprep.subr.mxu0 %v111
    %3723 = vmatpush1.msra.mxu0 %v110
    %3724 = vmatprep.subr.mxu0 %v109
    %3725 = vmatpush1.msra.mxu0 %v108
    %3726 = vmatprep.subr.mxu0 %v107
    %3727 = vmatpush1.msra.mxu0 %v106
    %3728 = vmatprep.subr.mxu0 %v105
    %3729 = vmatpush1.msra.mxu0 %v104
    %3730 = vmatprep.subr.mxu0 0.0
    %3731 = vmatpush2.msra.mxu0 0.0
    %3732 = vmatprep.subr.mxu0 0.0
    %3733 = vmatpush2.msra.mxu0 0.0
    %3734 = vmatprep.subr.mxu0 0.0
    %3735 = vmatpush2.msra.mxu0 0.0
    %3736 = vmatprep.subr.mxu0 0.0
    %3737 = vmatpush2.msra.mxu0 0.0
    %3738 = vmatprep.subr.mxu0 0.0
    %3739 = vmatpush2.msra.mxu0 0.0
    %3740 = vmatprep.subr.mxu0 0.0
    %3741 = vmatpush2.msra.mxu0 0.0
    %3742 = vmatprep.subr.mxu0 0.0
    %3743 = vmatpush2.msra.mxu0 0.0
    %3744 = vmatprep.subr.mxu0 0.0
    %3745 = vmatpush2.msra.mxu0 0.0
    %3746 = vmatprep.subr.mxu0 0.0
    %3747 = vmatpush2.msra.mxu0 0.0
    %3748 = vmatprep.subr.mxu0 0.0
    %3749 = vmatpush2.msra.mxu0 0.0
    %3750 = vmatprep.subr.mxu0 0.0
    %3751 = vmatpush2.msra.mxu0 0.0
    %3752 = vmatprep.subr.mxu0 0.0
    %3753 = vmatpush2.msra.mxu0 0.0
    %3754 = vmatprep.subr.mxu0 0.0
    %3755 = vmatpush2.msra.mxu0 0.0
    %3756 = vmatprep.subr.mxu0 0.0
    %3757 = vmatpush2.msra.mxu0 0.0
    %3758 = vmatprep.subr.mxu0 0.0
    %3759 = vmatpush2.msra.mxu0 0.0
    %3760 = vmatprep.subr.mxu0 0.0
    %3761 = vmatpush2.msra.mxu0 0.0
    %3762 = vmatprep.mubr.f32.mxu0 0.0
    %3763 = vmatmul.mubr.f32.gmra.mxu0 %v3696
    %v3764 = vpop.f32.mrf.mxu0
    %v3765 = vadd.f32 0.0, %v3764
    %v3766 = vpop.f32.mrf.mxu0
    %v3767 = vadd.f32 0.0, %v3766
    %3768 = vdwg.mxu0
    %v3769 = vadd.f32 %v3294, %v3765
    %v3770 = vadd.f32 %v3296, %v3767
    %v3771 = vxor.u32 %v3769, 2147483648
    %v3772 = vmul.f32 %v3771, 1.442695
    %v3773 = vpow.pop %v3772
    %v3774 = vadd.f32 %v3773, 1.0
    %v3775 = vrcp.pop %v3774
    %v3776 = vmul.f32 1.0, %v3775
    %v3777 = vtanh.pop %v3770
    %v3778 = vxor.u32 %v3770, 2147483648
    %v3779 = vmul.f32 %v3778, 1.442695
    %v3780 = vpow.pop %v3779
    %v3781 = vadd.f32 %v3780, 1.0
    %v3782 = vrcp.pop %v3781
    %v3783 = vmul.f32 1.0, %v3782
    %v3784 = vmul.f32 %v3776, %v3690
    %v3785 = vmul.f32 %v3776, %v3777
    %3787 = vrot.lane.b32.xlu0 %v3785, 64
    %v3788 = vpop.permute.xlu0 %3787
    %v3790 = vadd.f32 %v3784, %v3788
    %v3791 = vtanh.pop %v3790
    %v3792 = vmul.f32 %v3783, %v3791
    %3794 = vrot.lane.b32.xlu0 %v3792, 64
    %v3795 = vpop.permute.xlu0 %3794
    %v3796 = vsel %vm282, %v3795, 0
    %3798 = vmatprep.subr.mxu0 0.0
    %3799 = vmatpush1.msra.mxu0 0.0
    %3800 = vmatprep.subr.mxu0 0.0
    %3801 = vmatpush1.msra.mxu0 0.0
    %3802 = vmatprep.subr.mxu0 0.0
    %3803 = vmatpush1.msra.mxu0 0.0
    %3804 = vmatprep.subr.mxu0 0.0
    %3805 = vmatpush1.msra.mxu0 0.0
    %3806 = vmatprep.subr.mxu0 0.0
    %3807 = vmatpush1.msra.mxu0 0.0
    %3808 = vmatprep.subr.mxu0 0.0
    %3809 = vmatpush1.msra.mxu0 0.0
    %3810 = vmatprep.subr.mxu0 0.0
    %3811 = vmatpush1.msra.mxu0 0.0
    %3812 = vmatprep.subr.mxu0 0.0
    %3813 = vmatpush1.msra.mxu0 0.0
    %3814 = vmatprep.subr.mxu0 %v119
    %3815 = vmatpush1.msra.mxu0 %v118
    %3816 = vmatprep.subr.mxu0 %v117
    %3817 = vmatpush1.msra.mxu0 %v116
    %3818 = vmatprep.subr.mxu0 %v115
    %3819 = vmatpush1.msra.mxu0 %v114
    %3820 = vmatprep.subr.mxu0 %v113
    %3821 = vmatpush1.msra.mxu0 %v112
    %3822 = vmatprep.subr.mxu0 %v111
    %3823 = vmatpush1.msra.mxu0 %v110
    %3824 = vmatprep.subr.mxu0 %v109
    %3825 = vmatpush1.msra.mxu0 %v108
    %3826 = vmatprep.subr.mxu0 %v107
    %3827 = vmatpush1.msra.mxu0 %v106
    %3828 = vmatprep.subr.mxu0 %v105
    %3829 = vmatpush1.msra.mxu0 %v104
    %3830 = vmatprep.subr.mxu0 0.0
    %3831 = vmatpush2.msra.mxu0 0.0
    %3832 = vmatprep.subr.mxu0 0.0
    %3833 = vmatpush2.msra.mxu0 0.0
    %3834 = vmatprep.subr.mxu0 0.0
    %3835 = vmatpush2.msra.mxu0 0.0
    %3836 = vmatprep.subr.mxu0 0.0
    %3837 = vmatpush2.msra.mxu0 0.0
    %3838 = vmatprep.subr.mxu0 0.0
    %3839 = vmatpush2.msra.mxu0 0.0
    %3840 = vmatprep.subr.mxu0 0.0
    %3841 = vmatpush2.msra.mxu0 0.0
    %3842 = vmatprep.subr.mxu0 0.0
    %3843 = vmatpush2.msra.mxu0 0.0
    %3844 = vmatprep.subr.mxu0 0.0
    %3845 = vmatpush2.msra.mxu0 0.0
    %3846 = vmatprep.subr.mxu0 0.0
    %3847 = vmatpush2.msra.mxu0 0.0
    %3848 = vmatprep.subr.mxu0 0.0
    %3849 = vmatpush2.msra.mxu0 0.0
    %3850 = vmatprep.subr.mxu0 0.0
    %3851 = vmatpush2.msra.mxu0 0.0
    %3852 = vmatprep.subr.mxu0 0.0
    %3853 = vmatpush2.msra.mxu0 0.0
    %3854 = vmatprep.subr.mxu0 0.0
    %3855 = vmatpush2.msra.mxu0 0.0
    %3856 = vmatprep.subr.mxu0 0.0
    %3857 = vmatpush2.msra.mxu0 0.0
    %3858 = vmatprep.subr.mxu0 0.0
    %3859 = vmatpush2.msra.mxu0 0.0
    %3860 = vmatprep.subr.mxu0 0.0
    %3861 = vmatpush2.msra.mxu0 0.0
    %3862 = vmatprep.mubr.f32.mxu0 0.0
    %3863 = vmatmul.mubr.f32.gmra.mxu0 %v3796
    %v3864 = vpop.f32.mrf.mxu0
    %v3865 = vadd.f32 0.0, %v3864
    %v3866 = vpop.f32.mrf.mxu0
    %v3867 = vadd.f32 0.0, %v3866
    %3868 = vdwg.mxu0
    %v3869 = vadd.f32 %v3294, %v3865
    %v3870 = vadd.f32 %v3296, %v3867
    %v3871 = vxor.u32 %v3869, 2147483648
    %v3872 = vmul.f32 %v3871, 1.442695
    %v3873 = vpow.pop %v3872
    %v3874 = vadd.f32 %v3873, 1.0
    %v3875 = vrcp.pop %v3874
    %v3876 = vmul.f32 1.0, %v3875
    %v3877 = vtanh.pop %v3870
    %v3878 = vxor.u32 %v3870, 2147483648
    %v3879 = vmul.f32 %v3878, 1.442695
    %v3880 = vpow.pop %v3879
    %v3881 = vadd.f32 %v3880, 1.0
    %v3882 = vrcp.pop %v3881
    %v3883 = vmul.f32 1.0, %v3882
    %v3884 = vmul.f32 %v3876, %v3790
    %v3885 = vmul.f32 %v3876, %v3877
    %3887 = vrot.lane.b32.xlu0 %v3885, 64
    %v3888 = vpop.permute.xlu0 %3887
    %v3890 = vadd.f32 %v3884, %v3888
    %v3891 = vtanh.pop %v3890
    %v3892 = vmul.f32 %v3883, %v3891
    %3894 = vrot.lane.b32.xlu0 %v3892, 64
    %v3895 = vpop.permute.xlu0 %3894
    %v3896 = vsel %vm282, %v3895, 0
    %3898 = vmatprep.subr.mxu0 0.0
    %3899 = vmatpush1.msra.mxu0 0.0
    %3900 = vmatprep.subr.mxu0 0.0
    %3901 = vmatpush1.msra.mxu0 0.0
    %3902 = vmatprep.subr.mxu0 0.0
    %3903 = vmatpush1.msra.mxu0 0.0
    %3904 = vmatprep.subr.mxu0 0.0
    %3905 = vmatpush1.msra.mxu0 0.0
    %3906 = vmatprep.subr.mxu0 0.0
    %3907 = vmatpush1.msra.mxu0 0.0
    %3908 = vmatprep.subr.mxu0 0.0
    %3909 = vmatpush1.msra.mxu0 0.0
    %3910 = vmatprep.subr.mxu0 0.0
    %3911 = vmatpush1.msra.mxu0 0.0
    %3912 = vmatprep.subr.mxu0 0.0
    %3913 = vmatpush1.msra.mxu0 0.0
    %3914 = vmatprep.subr.mxu0 %v119
    %3915 = vmatpush1.msra.mxu0 %v118
    %3916 = vmatprep.subr.mxu0 %v117
    %3917 = vmatpush1.msra.mxu0 %v116
    %3918 = vmatprep.subr.mxu0 %v115
    %3919 = vmatpush1.msra.mxu0 %v114
    %3920 = vmatprep.subr.mxu0 %v113
    %3921 = vmatpush1.msra.mxu0 %v112
    %3922 = vmatprep.subr.mxu0 %v111
    %3923 = vmatpush1.msra.mxu0 %v110
    %3924 = vmatprep.subr.mxu0 %v109
    %3925 = vmatpush1.msra.mxu0 %v108
    %3926 = vmatprep.subr.mxu0 %v107
    %3927 = vmatpush1.msra.mxu0 %v106
    %3928 = vmatprep.subr.mxu0 %v105
    %3929 = vmatpush1.msra.mxu0 %v104
    %3930 = vmatprep.subr.mxu0 0.0
    %3931 = vmatpush2.msra.mxu0 0.0
    %3932 = vmatprep.subr.mxu0 0.0
    %3933 = vmatpush2.msra.mxu0 0.0
    %3934 = vmatprep.subr.mxu0 0.0
    %3935 = vmatpush2.msra.mxu0 0.0
    %3936 = vmatprep.subr.mxu0 0.0
    %3937 = vmatpush2.msra.mxu0 0.0
    %3938 = vmatprep.subr.mxu0 0.0
    %3939 = vmatpush2.msra.mxu0 0.0
    %3940 = vmatprep.subr.mxu0 0.0
    %3941 = vmatpush2.msra.mxu0 0.0
    %3942 = vmatprep.subr.mxu0 0.0
    %3943 = vmatpush2.msra.mxu0 0.0
    %3944 = vmatprep.subr.mxu0 0.0
    %3945 = vmatpush2.msra.mxu0 0.0
    %3946 = vmatprep.subr.mxu0 0.0
    %3947 = vmatpush2.msra.mxu0 0.0
    %3948 = vmatprep.subr.mxu0 0.0
    %3949 = vmatpush2.msra.mxu0 0.0
    %3950 = vmatprep.subr.mxu0 0.0
    %3951 = vmatpush2.msra.mxu0 0.0
    %3952 = vmatprep.subr.mxu0 0.0
    %3953 = vmatpush2.msra.mxu0 0.0
    %3954 = vmatprep.subr.mxu0 0.0
    %3955 = vmatpush2.msra.mxu0 0.0
    %3956 = vmatprep.subr.mxu0 0.0
    %3957 = vmatpush2.msra.mxu0 0.0
    %3958 = vmatprep.subr.mxu0 0.0
    %3959 = vmatpush2.msra.mxu0 0.0
    %3960 = vmatprep.subr.mxu0 0.0
    %3961 = vmatpush2.msra.mxu0 0.0
    %3962 = vmatprep.mubr.f32.mxu0 0.0
    %3963 = vmatmul.mubr.f32.gmra.mxu0 %v3896
    %v3964 = vpop.f32.mrf.mxu0
    %v3965 = vadd.f32 0.0, %v3964
    %v3966 = vpop.f32.mrf.mxu0
    %v3967 = vadd.f32 0.0, %v3966
    %3968 = vdwg.mxu0
    %v3969 = vadd.f32 %v3294, %v3965
    %v3970 = vadd.f32 %v3296, %v3967
    %v3971 = vxor.u32 %v3969, 2147483648
    %v3972 = vmul.f32 %v3971, 1.442695
    %v3973 = vpow.pop %v3972
    %v3974 = vadd.f32 %v3973, 1.0
    %v3975 = vrcp.pop %v3974
    %v3976 = vmul.f32 1.0, %v3975
    %v3977 = vtanh.pop %v3970
    %v3978 = vxor.u32 %v3970, 2147483648
    %v3979 = vmul.f32 %v3978, 1.442695
    %v3980 = vpow.pop %v3979
    %v3981 = vadd.f32 %v3980, 1.0
    %v3982 = vrcp.pop %v3981
    %v3983 = vmul.f32 1.0, %v3982
    %v3984 = vmul.f32 %v3976, %v3890
    %v3985 = vmul.f32 %v3976, %v3977
    %3987 = vrot.lane.b32.xlu0 %v3985, 64
    %v3988 = vpop.permute.xlu0 %3987
    %v3990 = vadd.f32 %v3984, %v3988
    %v3991 = vtanh.pop %v3990
    %v3992 = vmul.f32 %v3983, %v3991
    %3994 = vrot.lane.b32.xlu0 %v3992, 64
    %v3995 = vpop.permute.xlu0 %3994
    %v3996 = vsel %vm282, %v3995, 0
    %3998 = vmatprep.subr.mxu0 0.0
    %3999 = vmatpush1.msra.mxu0 0.0
    %4000 = vmatprep.subr.mxu0 0.0
    %4001 = vmatpush1.msra.mxu0 0.0
    %4002 = vmatprep.subr.mxu0 0.0
    %4003 = vmatpush1.msra.mxu0 0.0
    %4004 = vmatprep.subr.mxu0 0.0
    %4005 = vmatpush1.msra.mxu0 0.0
    %4006 = vmatprep.subr.mxu0 0.0
    %4007 = vmatpush1.msra.mxu0 0.0
    %4008 = vmatprep.subr.mxu0 0.0
    %4009 = vmatpush1.msra.mxu0 0.0
    %4010 = vmatprep.subr.mxu0 0.0
    %4011 = vmatpush1.msra.mxu0 0.0
    %4012 = vmatprep.subr.mxu0 0.0
    %4013 = vmatpush1.msra.mxu0 0.0
    %4014 = vmatprep.subr.mxu0 %v119
    %4015 = vmatpush1.msra.mxu0 %v118
    %4016 = vmatprep.subr.mxu0 %v117
    %4017 = vmatpush1.msra.mxu0 %v116
    %4018 = vmatprep.subr.mxu0 %v115
    %4019 = vmatpush1.msra.mxu0 %v114
    %4020 = vmatprep.subr.mxu0 %v113
    %4021 = vmatpush1.msra.mxu0 %v112
    %4022 = vmatprep.subr.mxu0 %v111
    %4023 = vmatpush1.msra.mxu0 %v110
    %4024 = vmatprep.subr.mxu0 %v109
    %4025 = vmatpush1.msra.mxu0 %v108
    %4026 = vmatprep.subr.mxu0 %v107
    %4027 = vmatpush1.msra.mxu0 %v106
    %4028 = vmatprep.subr.mxu0 %v105
    %4029 = vmatpush1.msra.mxu0 %v104
    %4030 = vmatprep.subr.mxu0 0.0
    %4031 = vmatpush2.msra.mxu0 0.0
    %4032 = vmatprep.subr.mxu0 0.0
    %4033 = vmatpush2.msra.mxu0 0.0
    %4034 = vmatprep.subr.mxu0 0.0
    %4035 = vmatpush2.msra.mxu0 0.0
    %4036 = vmatprep.subr.mxu0 0.0
    %4037 = vmatpush2.msra.mxu0 0.0
    %4038 = vmatprep.subr.mxu0 0.0
    %4039 = vmatpush2.msra.mxu0 0.0
    %4040 = vmatprep.subr.mxu0 0.0
    %4041 = vmatpush2.msra.mxu0 0.0
    %4042 = vmatprep.subr.mxu0 0.0
    %4043 = vmatpush2.msra.mxu0 0.0
    %4044 = vmatprep.subr.mxu0 0.0
    %4045 = vmatpush2.msra.mxu0 0.0
    %4046 = vmatprep.subr.mxu0 0.0
    %4047 = vmatpush2.msra.mxu0 0.0
    %4048 = vmatprep.subr.mxu0 0.0
    %4049 = vmatpush2.msra.mxu0 0.0
    %4050 = vmatprep.subr.mxu0 0.0
    %4051 = vmatpush2.msra.mxu0 0.0
    %4052 = vmatprep.subr.mxu0 0.0
    %4053 = vmatpush2.msra.mxu0 0.0
    %4054 = vmatprep.subr.mxu0 0.0
    %4055 = vmatpush2.msra.mxu0 0.0
    %4056 = vmatprep.subr.mxu0 0.0
    %4057 = vmatpush2.msra.mxu0 0.0
    %4058 = vmatprep.subr.mxu0 0.0
    %4059 = vmatpush2.msra.mxu0 0.0
    %4060 = vmatprep.subr.mxu0 0.0
    %4061 = vmatpush2.msra.mxu0 0.0
    %4062 = vmatprep.mubr.f32.mxu0 0.0
    %4063 = vmatmul.mubr.f32.gmra.mxu0 %v3996
    %v4064 = vpop.f32.mrf.mxu0
    %v4065 = vadd.f32 0.0, %v4064
    %v4066 = vpop.f32.mrf.mxu0
    %v4067 = vadd.f32 0.0, %v4066
    %4068 = vdwg.mxu0
    %v4069 = vadd.f32 %v3294, %v4065
    %v4070 = vadd.f32 %v3296, %v4067
    %v4071 = vxor.u32 %v4069, 2147483648
    %v4072 = vmul.f32 %v4071, 1.442695
    %v4073 = vpow.pop %v4072
    %v4074 = vadd.f32 %v4073, 1.0
    %v4075 = vrcp.pop %v4074
    %v4076 = vmul.f32 1.0, %v4075
    %v4077 = vtanh.pop %v4070
    %v4078 = vxor.u32 %v4070, 2147483648
    %v4079 = vmul.f32 %v4078, 1.442695
    %v4080 = vpow.pop %v4079
    %v4081 = vadd.f32 %v4080, 1.0
    %v4082 = vrcp.pop %v4081
    %v4083 = vmul.f32 1.0, %v4082
    %v4084 = vmul.f32 %v4076, %v3990
    %v4085 = vmul.f32 %v4076, %v4077
    %4087 = vrot.lane.b32.xlu0 %v4085, 64
    %v4088 = vpop.permute.xlu0 %4087
    %v4090 = vadd.f32 %v4084, %v4088
    %v4091 = vtanh.pop %v4090
    %v4092 = vmul.f32 %v4083, %v4091
    %v4093 = vcombine.high %v3392, %v3392
    %v4095 = vunpack.c.l.s4 1966171168
    %v4096 = vunpack.c.0.s8 %v4095
    %v4097 = vlaneseq
    %v4098 = vshrl.u32 %v4097, 7
    %v4099 = vsub.s32 %v4096, %v4098
    %v4100 = vrot.slane %v3392, %v4099
    %v4102 = vunpack.c.l.s4 1966171168
    %v4103 = vunpack.c.0.s8 %v4102
    %v4104 = vlaneseq
    %v4105 = vshrl.u32 %v4104, 7
    %v4106 = vsub.s32 %v4103, %v4105
    %v4107 = vrot.slane %v4093, %v4106
    %v4108 = vcombine.high %v4100, %v4100
    %v4109 = vcombine.high %v4107, %v4107
    %v4111 = vunpack.c.l.s4 1966171168
    %v4112 = vunpack.c.0.s8 %v4111
    %v4113 = vlaneseq
    %v4114 = vshrl.u32 %v4113, 7
    %v4115 = vsub.s32 %v4112, %v4114
    %v4116 = vrot.slane %v4100, %v4115
    %v4118 = vunpack.c.l.s4 1966171168
    %v4119 = vunpack.c.0.s8 %v4118
    %v4120 = vlaneseq
    %v4121 = vshrl.u32 %v4120, 7
    %v4122 = vsub.s32 %v4119, %v4121
    %v4123 = vrot.slane %v4107, %v4122
    %v4125 = vunpack.c.l.s4 1966171168
    %v4126 = vunpack.c.0.s8 %v4125
    %v4127 = vlaneseq
    %v4128 = vshrl.u32 %v4127, 7
    %v4129 = vsub.s32 %v4126, %v4128
    %v4130 = vrot.slane %v4108, %v4129
    %v4132 = vunpack.c.l.s4 1966171168
    %v4133 = vunpack.c.0.s8 %v4132
    %v4134 = vlaneseq
    %v4135 = vshrl.u32 %v4134, 7
    %v4136 = vsub.s32 %v4133, %v4135
    %v4137 = vrot.slane %v4109, %v4136
    %v4138 = vcombine.high %v4116, %v4116
    %v4139 = vcombine.high %v4123, %v4123
    %v4140 = vcombine.high %v4130, %v4130
    %v4141 = vcombine.high %v4137, %v4137
    %v4150 = vcombine.high %v3492, %v3492
    %v4152 = vunpack.c.l.s4 1966171168
    %v4153 = vunpack.c.0.s8 %v4152
    %v4154 = vlaneseq
    %v4155 = vshrl.u32 %v4154, 7
    %v4156 = vsub.s32 %v4153, %v4155
    %v4157 = vrot.slane %v3492, %v4156
    %v4159 = vunpack.c.l.s4 1966171168
    %v4160 = vunpack.c.0.s8 %v4159
    %v4161 = vlaneseq
    %v4162 = vshrl.u32 %v4161, 7
    %v4163 = vsub.s32 %v4160, %v4162
    %v4164 = vrot.slane %v4150, %v4163
    %v4165 = vcombine.high %v4157, %v4157
    %v4166 = vcombine.high %v4164, %v4164
    %v4168 = vunpack.c.l.s4 1966171168
    %v4169 = vunpack.c.0.s8 %v4168
    %v4170 = vlaneseq
    %v4171 = vshrl.u32 %v4170, 7
    %v4172 = vsub.s32 %v4169, %v4171
    %v4173 = vrot.slane %v4157, %v4172
    %v4175 = vunpack.c.l.s4 1966171168
    %v4176 = vunpack.c.0.s8 %v4175
    %v4177 = vlaneseq
    %v4178 = vshrl.u32 %v4177, 7
    %v4179 = vsub.s32 %v4176, %v4178
    %v4180 = vrot.slane %v4164, %v4179
    %v4182 = vunpack.c.l.s4 1966171168
    %v4183 = vunpack.c.0.s8 %v4182
    %v4184 = vlaneseq
    %v4185 = vshrl.u32 %v4184, 7
    %v4186 = vsub.s32 %v4183, %v4185
    %v4187 = vrot.slane %v4165, %v4186
    %v4189 = vunpack.c.l.s4 1966171168
    %v4190 = vunpack.c.0.s8 %v4189
    %v4191 = vlaneseq
    %v4192 = vshrl.u32 %v4191, 7
    %v4193 = vsub.s32 %v4190, %v4192
    %v4194 = vrot.slane %v4166, %v4193
    %v4195 = vcombine.high %v4173, %v4173
    %v4196 = vcombine.high %v4180, %v4180
    %v4197 = vcombine.high %v4187, %v4187
    %v4198 = vcombine.high %v4194, %v4194
    %v4199 = vcombine.high %v3592, %v3592
    %v4201 = vunpack.c.l.s4 1966171168
    %v4202 = vunpack.c.0.s8 %v4201
    %v4203 = vlaneseq
    %v4204 = vshrl.u32 %v4203, 7
    %v4205 = vsub.s32 %v4202, %v4204
    %v4206 = vrot.slane %v3592, %v4205
    %v4208 = vunpack.c.l.s4 1966171168
    %v4209 = vunpack.c.0.s8 %v4208
    %v4210 = vlaneseq
    %v4211 = vshrl.u32 %v4210, 7
    %v4212 = vsub.s32 %v4209, %v4211
    %v4213 = vrot.slane %v4199, %v4212
    %v4214 = vcombine.high %v4206, %v4206
    %v4215 = vcombine.high %v4213, %v4213
    %v4217 = vunpack.c.l.s4 1966171168
    %v4218 = vunpack.c.0.s8 %v4217
    %v4219 = vlaneseq
    %v4220 = vshrl.u32 %v4219, 7
    %v4221 = vsub.s32 %v4218, %v4220
    %v4222 = vrot.slane %v4206, %v4221
    %v4224 = vunpack.c.l.s4 1966171168
    %v4225 = vunpack.c.0.s8 %v4224
    %v4226 = vlaneseq
    %v4227 = vshrl.u32 %v4226, 7
    %v4228 = vsub.s32 %v4225, %v4227
    %v4229 = vrot.slane %v4213, %v4228
    %v4231 = vunpack.c.l.s4 1966171168
    %v4232 = vunpack.c.0.s8 %v4231
    %v4233 = vlaneseq
    %v4234 = vshrl.u32 %v4233, 7
    %v4235 = vsub.s32 %v4232, %v4234
    %v4236 = vrot.slane %v4214, %v4235
    %v4238 = vunpack.c.l.s4 1966171168
    %v4239 = vunpack.c.0.s8 %v4238
    %v4240 = vlaneseq
    %v4241 = vshrl.u32 %v4240, 7
    %v4242 = vsub.s32 %v4239, %v4241
    %v4243 = vrot.slane %v4215, %v4242
    %v4244 = vcombine.high %v4222, %v4222
    %v4245 = vcombine.high %v4229, %v4229
    %v4246 = vcombine.high %v4236, %v4236
    %v4247 = vcombine.high %v4243, %v4243
    %v4248 = vcombine.high %v3692, %v3692
    %v4250 = vunpack.c.l.s4 1966171168
    %v4251 = vunpack.c.0.s8 %v4250
    %v4252 = vlaneseq
    %v4253 = vshrl.u32 %v4252, 7
    %v4254 = vsub.s32 %v4251, %v4253
    %v4255 = vrot.slane %v3692, %v4254
    %v4257 = vunpack.c.l.s4 1966171168
    %v4258 = vunpack.c.0.s8 %v4257
    %v4259 = vlaneseq
    %v4260 = vshrl.u32 %v4259, 7
    %v4261 = vsub.s32 %v4258, %v4260
    %v4262 = vrot.slane %v4248, %v4261
    %v4263 = vcombine.high %v4255, %v4255
    %v4264 = vcombine.high %v4262, %v4262
    %v4266 = vunpack.c.l.s4 1966171168
    %v4267 = vunpack.c.0.s8 %v4266
    %v4268 = vlaneseq
    %v4269 = vshrl.u32 %v4268, 7
    %v4270 = vsub.s32 %v4267, %v4269
    %v4271 = vrot.slane %v4255, %v4270
    %v4273 = vunpack.c.l.s4 1966171168
    %v4274 = vunpack.c.0.s8 %v4273
    %v4275 = vlaneseq
    %v4276 = vshrl.u32 %v4275, 7
    %v4277 = vsub.s32 %v4274, %v4276
    %v4278 = vrot.slane %v4262, %v4277
    %v4280 = vunpack.c.l.s4 1966171168
    %v4281 = vunpack.c.0.s8 %v4280
    %v4282 = vlaneseq
    %v4283 = vshrl.u32 %v4282, 7
    %v4284 = vsub.s32 %v4281, %v4283
    %v4285 = vrot.slane %v4263, %v4284
    %v4287 = vunpack.c.l.s4 1966171168
    %v4288 = vunpack.c.0.s8 %v4287
    %v4289 = vlaneseq
    %v4290 = vshrl.u32 %v4289, 7
    %v4291 = vsub.s32 %v4288, %v4290
    %v4292 = vrot.slane %v4264, %v4291
    %v4293 = vcombine.high %v4271, %v4271
    %v4294 = vcombine.high %v4278, %v4278
    %v4295 = vcombine.high %v4285, %v4285
    %v4296 = vcombine.high %v4292, %v4292
    %v4297 = vcombine.high %v3792, %v3792
    %v4299 = vunpack.c.l.s4 1966171168
    %v4300 = vunpack.c.0.s8 %v4299
    %v4301 = vlaneseq
    %v4302 = vshrl.u32 %v4301, 7
    %v4303 = vsub.s32 %v4300, %v4302
    %v4304 = vrot.slane %v3792, %v4303
    %v4306 = vunpack.c.l.s4 1966171168
    %v4307 = vunpack.c.0.s8 %v4306
    %v4308 = vlaneseq
    %v4309 = vshrl.u32 %v4308, 7
    %v4310 = vsub.s32 %v4307, %v4309
    %v4311 = vrot.slane %v4297, %v4310
    %v4312 = vcombine.high %v4304, %v4304
    %v4313 = vcombine.high %v4311, %v4311
    %v4315 = vunpack.c.l.s4 1966171168
    %v4316 = vunpack.c.0.s8 %v4315
    %v4317 = vlaneseq
    %v4318 = vshrl.u32 %v4317, 7
    %v4319 = vsub.s32 %v4316, %v4318
    %v4320 = vrot.slane %v4304, %v4319
    %v4322 = vunpack.c.l.s4 1966171168
    %v4323 = vunpack.c.0.s8 %v4322
    %v4324 = vlaneseq
    %v4325 = vshrl.u32 %v4324, 7
    %v4326 = vsub.s32 %v4323, %v4325
    %v4327 = vrot.slane %v4311, %v4326
    %v4329 = vunpack.c.l.s4 1966171168
    %v4330 = vunpack.c.0.s8 %v4329
    %v4331 = vlaneseq
    %v4332 = vshrl.u32 %v4331, 7
    %v4333 = vsub.s32 %v4330, %v4332
    %v4334 = vrot.slane %v4312, %v4333
    %v4336 = vunpack.c.l.s4 1966171168
    %v4337 = vunpack.c.0.s8 %v4336
    %v4338 = vlaneseq
    %v4339 = vshrl.u32 %v4338, 7
    %v4340 = vsub.s32 %v4337, %v4339
    %v4341 = vrot.slane %v4313, %v4340
    %v4342 = vcombine.high %v4320, %v4320
    %v4343 = vcombine.high %v4327, %v4327
    %v4344 = vcombine.high %v4334, %v4334
    %v4345 = vcombine.high %v4341, %v4341
    %v4346 = vcombine.high %v3892, %v3892
    %v4348 = vunpack.c.l.s4 1966171168
    %v4349 = vunpack.c.0.s8 %v4348
    %v4350 = vlaneseq
    %v4351 = vshrl.u32 %v4350, 7
    %v4352 = vsub.s32 %v4349, %v4351
    %v4353 = vrot.slane %v3892, %v4352
    %v4355 = vunpack.c.l.s4 1966171168
    %v4356 = vunpack.c.0.s8 %v4355
    %v4357 = vlaneseq
    %v4358 = vshrl.u32 %v4357, 7
    %v4359 = vsub.s32 %v4356, %v4358
    %v4360 = vrot.slane %v4346, %v4359
    %v4361 = vcombine.high %v4353, %v4353
    %v4362 = vcombine.high %v4360, %v4360
    %v4364 = vunpack.c.l.s4 1966171168
    %v4365 = vunpack.c.0.s8 %v4364
    %v4366 = vlaneseq
    %v4367 = vshrl.u32 %v4366, 7
    %v4368 = vsub.s32 %v4365, %v4367
    %v4369 = vrot.slane %v4353, %v4368
    %v4371 = vunpack.c.l.s4 1966171168
    %v4372 = vunpack.c.0.s8 %v4371
    %v4373 = vlaneseq
    %v4374 = vshrl.u32 %v4373, 7
    %v4375 = vsub.s32 %v4372, %v4374
    %v4376 = vrot.slane %v4360, %v4375
    %v4378 = vunpack.c.l.s4 1966171168
    %v4379 = vunpack.c.0.s8 %v4378
    %v4380 = vlaneseq
    %v4381 = vshrl.u32 %v4380, 7
    %v4382 = vsub.s32 %v4379, %v4381
    %v4383 = vrot.slane %v4361, %v4382
    %v4385 = vunpack.c.l.s4 1966171168
    %v4386 = vunpack.c.0.s8 %v4385
    %v4387 = vlaneseq
    %v4388 = vshrl.u32 %v4387, 7
    %v4389 = vsub.s32 %v4386, %v4388
    %v4390 = vrot.slane %v4362, %v4389
    %v4391 = vcombine.high %v4369, %v4369
    %v4392 = vcombine.high %v4376, %v4376
    %v4393 = vcombine.high %v4383, %v4383
    %v4394 = vcombine.high %v4390, %v4390
    %v4395 = vcombine.high %v3992, %v3992
    %v4397 = vunpack.c.l.s4 1966171168
    %v4398 = vunpack.c.0.s8 %v4397
    %v4399 = vlaneseq
    %v4400 = vshrl.u32 %v4399, 7
    %v4401 = vsub.s32 %v4398, %v4400
    %v4402 = vrot.slane %v3992, %v4401
    %v4404 = vunpack.c.l.s4 1966171168
    %v4405 = vunpack.c.0.s8 %v4404
    %v4406 = vlaneseq
    %v4407 = vshrl.u32 %v4406, 7
    %v4408 = vsub.s32 %v4405, %v4407
    %v4409 = vrot.slane %v4395, %v4408
    %v4410 = vcombine.high %v4402, %v4402
    %v4411 = vcombine.high %v4409, %v4409
    %v4413 = vunpack.c.l.s4 1966171168
    %v4414 = vunpack.c.0.s8 %v4413
    %v4415 = vlaneseq
    %v4416 = vshrl.u32 %v4415, 7
    %v4417 = vsub.s32 %v4414, %v4416
    %v4418 = vrot.slane %v4402, %v4417
    %v4420 = vunpack.c.l.s4 1966171168
    %v4421 = vunpack.c.0.s8 %v4420
    %v4422 = vlaneseq
    %v4423 = vshrl.u32 %v4422, 7
    %v4424 = vsub.s32 %v4421, %v4423
    %v4425 = vrot.slane %v4409, %v4424
    %v4427 = vunpack.c.l.s4 1966171168
    %v4428 = vunpack.c.0.s8 %v4427
    %v4429 = vlaneseq
    %v4430 = vshrl.u32 %v4429, 7
    %v4431 = vsub.s32 %v4428, %v4430
    %v4432 = vrot.slane %v4410, %v4431
    %v4434 = vunpack.c.l.s4 1966171168
    %v4435 = vunpack.c.0.s8 %v4434
    %v4436 = vlaneseq
    %v4437 = vshrl.u32 %v4436, 7
    %v4438 = vsub.s32 %v4435, %v4437
    %v4439 = vrot.slane %v4411, %v4438
    %v4440 = vcombine.high %v4418, %v4418
    %v4441 = vcombine.high %v4425, %v4425
    %v4442 = vcombine.high %v4432, %v4432
    %v4443 = vcombine.high %v4439, %v4439
    %v4445 = vcombine.high %v4092, %v4092
    %v4447 = vunpack.c.l.s4 1966171168
    %v4448 = vunpack.c.0.s8 %v4447
    %v4449 = vlaneseq
    %v4450 = vshrl.u32 %v4449, 7
    %v4451 = vsub.s32 %v4448, %v4450
    %v4452 = vrot.slane %v4092, %v4451
    %v4454 = vunpack.c.l.s4 1966171168
    %v4455 = vunpack.c.0.s8 %v4454
    %v4456 = vlaneseq
    %v4457 = vshrl.u32 %v4456, 7
    %v4458 = vsub.s32 %v4455, %v4457
    %v4459 = vrot.slane %v4445, %v4458
    %v4460 = vcombine.high %v4452, %v4452
    %v4461 = vcombine.high %v4459, %v4459
    %v4463 = vunpack.c.l.s4 1966171168
    %v4464 = vunpack.c.0.s8 %v4463
    %v4465 = vlaneseq
    %v4466 = vshrl.u32 %v4465, 7
    %v4467 = vsub.s32 %v4464, %v4466
    %v4468 = vrot.slane %v4452, %v4467
    %v4470 = vunpack.c.l.s4 1966171168
    %v4471 = vunpack.c.0.s8 %v4470
    %v4472 = vlaneseq
    %v4473 = vshrl.u32 %v4472, 7
    %v4474 = vsub.s32 %v4471, %v4473
    %v4475 = vrot.slane %v4459, %v4474
    %v4477 = vunpack.c.l.s4 1966171168
    %v4478 = vunpack.c.0.s8 %v4477
    %v4479 = vlaneseq
    %v4480 = vshrl.u32 %v4479, 7
    %v4481 = vsub.s32 %v4478, %v4480
    %v4482 = vrot.slane %v4460, %v4481
    %v4484 = vunpack.c.l.s4 1966171168
    %v4485 = vunpack.c.0.s8 %v4484
    %v4486 = vlaneseq
    %v4487 = vshrl.u32 %v4486, 7
    %v4488 = vsub.s32 %v4485, %v4487
    %v4489 = vrot.slane %v4461, %v4488
    %v4490 = vcombine.high %v4468, %v4468
    %v4491 = vcombine.high %v4475, %v4475
    %v4492 = vcombine.high %v4482, %v4482
    %v4493 = vcombine.high %v4489, %v4489
    %v4494 = vlaneseq
    %v4495 = vshrl.u32 %v4494, 7
    %v4496 = vsub.s32 0, %v4495
    %v4497 = vrot.slane %v4173, %v4496
    %v4498 = vlaneseq
    %v4499 = vshrl.u32 %v4498, 7
    %v4500 = vsub.s32 0, %v4499
    %v4501 = vrot.slane %v4187, %v4500
    %v4502 = vlaneseq
    %v4503 = vshrl.u32 %v4502, 7
    %v4504 = vsub.s32 0, %v4503
    %v4505 = vrot.slane %v4195, %v4504
    %v4506 = vlaneseq
    %v4507 = vshrl.u32 %v4506, 7
    %v4508 = vsub.s32 0, %v4507
    %v4509 = vrot.slane %v4197, %v4508
    %v4510 = vlaneseq
    %v4511 = vshrl.u32 %v4510, 7
    %v4512 = vsub.s32 0, %v4511
    %v4513 = vrot.slane %v4180, %v4512
    %v4514 = vlaneseq
    %v4515 = vshrl.u32 %v4514, 7
    %v4516 = vsub.s32 0, %v4515
    %v4517 = vrot.slane %v4194, %v4516
    %v4518 = vlaneseq
    %v4519 = vshrl.u32 %v4518, 7
    %v4520 = vsub.s32 0, %v4519
    %v4521 = vrot.slane %v4196, %v4520
    %v4522 = vlaneseq
    %v4523 = vshrl.u32 %v4522, 7
    %v4524 = vsub.s32 0, %v4523
    %v4525 = vrot.slane %v4198, %v4524
    %v4534 = vlaneseq
    %v4535 = vshrl.u32 %v4534, 7
    %v4536 = vsub.s32 0, %v4535
    %v4537 = vrot.slane %v4222, %v4536
    %v4538 = vlaneseq
    %v4539 = vshrl.u32 %v4538, 7
    %v4540 = vsub.s32 0, %v4539
    %v4541 = vrot.slane %v4236, %v4540
    %v4542 = vlaneseq
    %v4543 = vshrl.u32 %v4542, 7
    %v4544 = vsub.s32 0, %v4543
    %v4545 = vrot.slane %v4244, %v4544
    %v4546 = vlaneseq
    %v4547 = vshrl.u32 %v4546, 7
    %v4548 = vsub.s32 0, %v4547
    %v4549 = vrot.slane %v4246, %v4548
    %v4550 = vlaneseq
    %v4551 = vshrl.u32 %v4550, 7
    %v4552 = vsub.s32 0, %v4551
    %v4553 = vrot.slane %v4229, %v4552
    %v4554 = vlaneseq
    %v4555 = vshrl.u32 %v4554, 7
    %v4556 = vsub.s32 0, %v4555
    %v4557 = vrot.slane %v4243, %v4556
    %v4558 = vlaneseq
    %v4559 = vshrl.u32 %v4558, 7
    %v4560 = vsub.s32 0, %v4559
    %v4561 = vrot.slane %v4245, %v4560
    %v4562 = vlaneseq
    %v4563 = vshrl.u32 %v4562, 7
    %v4564 = vsub.s32 0, %v4563
    %v4565 = vrot.slane %v4247, %v4564
    %v4574 = vlaneseq
    %v4575 = vshrl.u32 %v4574, 7
    %v4576 = vsub.s32 0, %v4575
    %v4577 = vrot.slane %v4271, %v4576
    %v4578 = vlaneseq
    %v4579 = vshrl.u32 %v4578, 7
    %v4580 = vsub.s32 0, %v4579
    %v4581 = vrot.slane %v4285, %v4580
    %v4582 = vlaneseq
    %v4583 = vshrl.u32 %v4582, 7
    %v4584 = vsub.s32 0, %v4583
    %v4585 = vrot.slane %v4293, %v4584
    %v4586 = vlaneseq
    %v4587 = vshrl.u32 %v4586, 7
    %v4588 = vsub.s32 0, %v4587
    %v4589 = vrot.slane %v4295, %v4588
    %v4590 = vlaneseq
    %v4591 = vshrl.u32 %v4590, 7
    %v4592 = vsub.s32 0, %v4591
    %v4593 = vrot.slane %v4278, %v4592
    %v4594 = vlaneseq
    %v4595 = vshrl.u32 %v4594, 7
    %v4596 = vsub.s32 0, %v4595
    %v4597 = vrot.slane %v4292, %v4596
    %v4598 = vlaneseq
    %v4599 = vshrl.u32 %v4598, 7
    %v4600 = vsub.s32 0, %v4599
    %v4601 = vrot.slane %v4294, %v4600
    %v4602 = vlaneseq
    %v4603 = vshrl.u32 %v4602, 7
    %v4604 = vsub.s32 0, %v4603
    %v4605 = vrot.slane %v4296, %v4604
    %v4614 = vlaneseq
    %v4615 = vshrl.u32 %v4614, 7
    %v4616 = vsub.s32 0, %v4615
    %v4617 = vrot.slane %v4320, %v4616
    %v4618 = vlaneseq
    %v4619 = vshrl.u32 %v4618, 7
    %v4620 = vsub.s32 0, %v4619
    %v4621 = vrot.slane %v4334, %v4620
    %v4622 = vlaneseq
    %v4623 = vshrl.u32 %v4622, 7
    %v4624 = vsub.s32 0, %v4623
    %v4625 = vrot.slane %v4342, %v4624
    %v4626 = vlaneseq
    %v4627 = vshrl.u32 %v4626, 7
    %v4628 = vsub.s32 0, %v4627
    %v4629 = vrot.slane %v4344, %v4628
    %v4630 = vlaneseq
    %v4631 = vshrl.u32 %v4630, 7
    %v4632 = vsub.s32 0, %v4631
    %v4633 = vrot.slane %v4327, %v4632
    %v4634 = vlaneseq
    %v4635 = vshrl.u32 %v4634, 7
    %v4636 = vsub.s32 0, %v4635
    %v4637 = vrot.slane %v4341, %v4636
    %v4638 = vlaneseq
    %v4639 = vshrl.u32 %v4638, 7
    %v4640 = vsub.s32 0, %v4639
    %v4641 = vrot.slane %v4343, %v4640
    %v4642 = vlaneseq
    %v4643 = vshrl.u32 %v4642, 7
    %v4644 = vsub.s32 0, %v4643
    %v4645 = vrot.slane %v4345, %v4644
    %v4654 = vlaneseq
    %v4655 = vshrl.u32 %v4654, 7
    %v4656 = vsub.s32 0, %v4655
    %v4657 = vrot.slane %v4369, %v4656
    %v4658 = vlaneseq
    %v4659 = vshrl.u32 %v4658, 7
    %v4660 = vsub.s32 0, %v4659
    %v4661 = vrot.slane %v4383, %v4660
    %v4662 = vlaneseq
    %v4663 = vshrl.u32 %v4662, 7
    %v4664 = vsub.s32 0, %v4663
    %v4665 = vrot.slane %v4391, %v4664
    %v4666 = vlaneseq
    %v4667 = vshrl.u32 %v4666, 7
    %v4668 = vsub.s32 0, %v4667
    %v4669 = vrot.slane %v4393, %v4668
    %v4670 = vlaneseq
    %v4671 = vshrl.u32 %v4670, 7
    %v4672 = vsub.s32 0, %v4671
    %v4673 = vrot.slane %v4376, %v4672
    %v4674 = vlaneseq
    %v4675 = vshrl.u32 %v4674, 7
    %v4676 = vsub.s32 0, %v4675
    %v4677 = vrot.slane %v4390, %v4676
    %v4678 = vlaneseq
    %v4679 = vshrl.u32 %v4678, 7
    %v4680 = vsub.s32 0, %v4679
    %v4681 = vrot.slane %v4392, %v4680
    %v4682 = vlaneseq
    %v4683 = vshrl.u32 %v4682, 7
    %v4684 = vsub.s32 0, %v4683
    %v4685 = vrot.slane %v4394, %v4684
    %v4694 = vlaneseq
    %v4695 = vshrl.u32 %v4694, 7
    %v4696 = vsub.s32 0, %v4695
    %v4697 = vrot.slane %v4418, %v4696
    %v4698 = vlaneseq
    %v4699 = vshrl.u32 %v4698, 7
    %v4700 = vsub.s32 0, %v4699
    %v4701 = vrot.slane %v4432, %v4700
    %v4702 = vlaneseq
    %v4703 = vshrl.u32 %v4702, 7
    %v4704 = vsub.s32 0, %v4703
    %v4705 = vrot.slane %v4440, %v4704
    %v4706 = vlaneseq
    %v4707 = vshrl.u32 %v4706, 7
    %v4708 = vsub.s32 0, %v4707
    %v4709 = vrot.slane %v4442, %v4708
    %v4710 = vlaneseq
    %v4711 = vshrl.u32 %v4710, 7
    %v4712 = vsub.s32 0, %v4711
    %v4713 = vrot.slane %v4425, %v4712
    %v4714 = vlaneseq
    %v4715 = vshrl.u32 %v4714, 7
    %v4716 = vsub.s32 0, %v4715
    %v4717 = vrot.slane %v4439, %v4716
    %v4718 = vlaneseq
    %v4719 = vshrl.u32 %v4718, 7
    %v4720 = vsub.s32 0, %v4719
    %v4721 = vrot.slane %v4441, %v4720
    %v4722 = vlaneseq
    %v4723 = vshrl.u32 %v4722, 7
    %v4724 = vsub.s32 0, %v4723
    %v4725 = vrot.slane %v4443, %v4724
    %v4734 = vlaneseq
    %v4735 = vshrl.u32 %v4734, 7
    %v4736 = vsub.s32 0, %v4735
    %v4737 = vrot.slane %v4468, %v4736
    %v4738 = vlaneseq
    %v4739 = vshrl.u32 %v4738, 7
    %v4740 = vsub.s32 0, %v4739
    %v4741 = vrot.slane %v4482, %v4740
    %v4742 = vlaneseq
    %v4743 = vshrl.u32 %v4742, 7
    %v4744 = vsub.s32 0, %v4743
    %v4745 = vrot.slane %v4490, %v4744
    %v4746 = vlaneseq
    %v4747 = vshrl.u32 %v4746, 7
    %v4748 = vsub.s32 0, %v4747
    %v4749 = vrot.slane %v4492, %v4748
    %v4750 = vlaneseq
    %v4751 = vshrl.u32 %v4750, 7
    %v4752 = vsub.s32 0, %v4751
    %v4753 = vrot.slane %v4475, %v4752
    %v4754 = vlaneseq
    %v4755 = vshrl.u32 %v4754, 7
    %v4756 = vsub.s32 0, %v4755
    %v4757 = vrot.slane %v4489, %v4756
    %v4758 = vlaneseq
    %v4759 = vshrl.u32 %v4758, 7
    %v4760 = vsub.s32 0, %v4759
    %v4761 = vrot.slane %v4491, %v4760
    %v4762 = vlaneseq
    %v4763 = vshrl.u32 %v4762, 7
    %v4764 = vsub.s32 0, %v4763
    %v4765 = vrot.slane %v4493, %v4764
    %vm4774 = vcmask 1040384
    %v4775 = vsel %vm4774, %v4116, %v4497
    %v4776 = vsel %vm4774, %v4130, %v4501
    %v4777 = vsel %vm4774, %v4138, %v4505
    %v4778 = vsel %vm4774, %v4140, %v4509
    %v4779 = vsel %vm4774, %v4123, %v4513
    %v4780 = vsel %vm4774, %v4137, %v4517
    %v4781 = vsel %vm4774, %v4139, %v4521
    %v4782 = vsel %vm4774, %v4141, %v4525
    %vm4783 = vcmask 1041408
    %v4784 = vsel %vm4783, %v4775, %v4537
    %v4785 = vsel %vm4783, %v4776, %v4541
    %v4786 = vsel %vm4783, %v4777, %v4545
    %v4787 = vsel %vm4783, %v4778, %v4549
    %v4788 = vsel %vm4783, %v4779, %v4553
    %v4789 = vsel %vm4783, %v4780, %v4557
    %v4790 = vsel %vm4783, %v4781, %v4561
    %v4791 = vsel %vm4783, %v4782, %v4565
    %vm4792 = vcmask 1042432
    %v4793 = vsel %vm4792, %v4784, %v4577
    %v4794 = vsel %vm4792, %v4785, %v4581
    %v4795 = vsel %vm4792, %v4786, %v4585
    %v4796 = vsel %vm4792, %v4787, %v4589
    %v4797 = vsel %vm4792, %v4788, %v4593
    %v4798 = vsel %vm4792, %v4789, %v4597
    %v4799 = vsel %vm4792, %v4790, %v4601
    %v4800 = vsel %vm4792, %v4791, %v4605
    %vm4801 = vcmask 1043456
    %v4802 = vsel %vm4801, %v4793, %v4617
    %v4803 = vsel %vm4801, %v4794, %v4621
    %v4804 = vsel %vm4801, %v4795, %v4625
    %v4805 = vsel %vm4801, %v4796, %v4629
    %v4806 = vsel %vm4801, %v4797, %v4633
    %v4807 = vsel %vm4801, %v4798, %v4637
    %v4808 = vsel %vm4801, %v4799, %v4641
    %v4809 = vsel %vm4801, %v4800, %v4645
    %vm4810 = vcmask 1044480
    %v4811 = vsel %vm4810, %v4802, %v4657
    %v4812 = vsel %vm4810, %v4803, %v4661
    %v4813 = vsel %vm4810, %v4804, %v4665
    %v4814 = vsel %vm4810, %v4805, %v4669
    %v4815 = vsel %vm4810, %v4806, %v4673
    %v4816 = vsel %vm4810, %v4807, %v4677
    %v4817 = vsel %vm4810, %v4808, %v4681
    %v4818 = vsel %vm4810, %v4809, %v4685
    %vm4819 = vcmask 1045504
    %v4820 = vsel %vm4819, %v4811, %v4697
    %v4821 = vsel %vm4819, %v4812, %v4701
    %v4822 = vsel %vm4819, %v4813, %v4705
    %v4823 = vsel %vm4819, %v4814, %v4709
    %v4824 = vsel %vm4819, %v4815, %v4713
    %v4825 = vsel %vm4819, %v4816, %v4717
    %v4826 = vsel %vm4819, %v4817, %v4721
    %v4827 = vsel %vm4819, %v4818, %v4725
    %vm4828 = vcmask 1046528
    %v4829 = vsel %vm4828, %v4820, %v4737
    %v4830 = vsel %vm4828, %v4821, %v4741
    %v4831 = vsel %vm4828, %v4822, %v4745
    %v4832 = vsel %vm4828, %v4823, %v4749
    %v4833 = vsel %vm4828, %v4824, %v4753
    %v4834 = vsel %vm4828, %v4825, %v4757
    %v4835 = vsel %vm4828, %v4826, %v4761
    %v4836 = vsel %vm4828, %v4827, %v4765
    %v4837 = vld [vmem:[%s7] sm:$0xff]
    %v4838 = vld [vmem:[%s7 + $0x8] sm:$0xff]
    %v4839 = vld [vmem:[%s7 + $0x10] sm:$0xff]
    %v4840 = vld [vmem:[%s7 + $0x18] sm:$0xff]
    %v4841 = vld [vmem:[%s7 + $0x20] sm:$0xff]
    %v4842 = vld [vmem:[%s7 + $0x28] sm:$0xff]
    %v4843 = vld [vmem:[%s7 + $0x30] sm:$0xff]
    %v4844 = vld [vmem:[%s7 + $0x38] sm:$0xff]
    %v4845 = vld [vmem:[%s8] sm:$0x1]
    %v4847 = vlaneseq
    %v4848 = vshrl.u32 %v4847, 7
    %v4849 = vsub.s32 0, %v4848
    %v4850 = vrot.slane %v4845, %v4849
    %4860 = vrot.lane.b32.xlu0 %v4829, 64
    %v4861 = vpop.permute.xlu0 %4860
    %4862 = vrot.lane.b32.xlu0 %v4830, 64
    %v4863 = vpop.permute.xlu0 %4862
    %4864 = vrot.lane.b32.xlu0 %v4831, 64
    %v4865 = vpop.permute.xlu0 %4864
    %4866 = vrot.lane.b32.xlu0 %v4832, 64
    %v4867 = vpop.permute.xlu0 %4866
    %4868 = vrot.lane.b32.xlu0 %v4833, 64
    %v4869 = vpop.permute.xlu0 %4868
    %4870 = vrot.lane.b32.xlu0 %v4834, 64
    %v4871 = vpop.permute.xlu0 %4870
    %4872 = vrot.lane.b32.xlu0 %v4835, 64
    %v4873 = vpop.permute.xlu0 %4872
    %4874 = vrot.lane.b32.xlu0 %v4836, 64
    %v4875 = vpop.permute.xlu0 %4874
    %v4876 = vsel %vm282, %v4861, 0
    %v4878 = vsel %vm282, %v4863, 0
    %v4880 = vsel %vm282, %v4865, 0
    %v4882 = vsel %vm282, %v4867, 0
    %v4884 = vsel %vm282, %v4869, 0
    %v4886 = vsel %vm282, %v4871, 0
    %v4888 = vsel %vm282, %v4873, 0
    %v4890 = vsel %vm282, %v4875, 0
    %4892 = vmatprep.subr.mxu0 0.0
    %4893 = vmatpush1.msra.mxu0 0.0
    %4894 = vmatprep.subr.mxu0 0.0
    %4895 = vmatpush1.msra.mxu0 0.0
    %4896 = vmatprep.subr.mxu0 0.0
    %4897 = vmatpush1.msra.mxu0 0.0
    %4898 = vmatprep.subr.mxu0 0.0
    %4899 = vmatpush1.msra.mxu0 0.0
    %4900 = vmatprep.subr.mxu0 0.0
    %4901 = vmatpush1.msra.mxu0 0.0
    %4902 = vmatprep.subr.mxu0 0.0
    %4903 = vmatpush1.msra.mxu0 0.0
    %4904 = vmatprep.subr.mxu0 0.0
    %4905 = vmatpush1.msra.mxu0 0.0
    %4906 = vmatprep.subr.mxu0 0.0
    %4907 = vmatpush1.msra.mxu0 0.0
    %4908 = vmatprep.subr.mxu0 0.0
    %4909 = vmatpush1.msra.mxu0 %v4844
    %4910 = vmatprep.subr.mxu0 0.0
    %4911 = vmatpush1.msra.mxu0 %v4843
    %4912 = vmatprep.subr.mxu0 0.0
    %4913 = vmatpush1.msra.mxu0 %v4842
    %4914 = vmatprep.subr.mxu0 0.0
    %4915 = vmatpush1.msra.mxu0 %v4841
    %4916 = vmatprep.subr.mxu0 0.0
    %4917 = vmatpush1.msra.mxu0 %v4840
    %4918 = vmatprep.subr.mxu0 0.0
    %4919 = vmatpush1.msra.mxu0 %v4839
    %4920 = vmatprep.subr.mxu0 0.0
    %4921 = vmatpush1.msra.mxu0 %v4838
    %4922 = vmatprep.subr.mxu0 0.0
    %4923 = vmatpush1.msra.mxu0 %v4837
    %4924 = vmatprep.subr.mxu0 0.0
    %4925 = vmatpush2.msra.mxu0 0.0
    %4926 = vmatprep.subr.mxu0 0.0
    %4927 = vmatpush2.msra.mxu0 0.0
    %4928 = vmatprep.subr.mxu0 0.0
    %4929 = vmatpush2.msra.mxu0 0.0
    %4930 = vmatprep.subr.mxu0 0.0
    %4931 = vmatpush2.msra.mxu0 0.0
    %4932 = vmatprep.subr.mxu0 0.0
    %4933 = vmatpush2.msra.mxu0 0.0
    %4934 = vmatprep.subr.mxu0 0.0
    %4935 = vmatpush2.msra.mxu0 0.0
    %4936 = vmatprep.subr.mxu0 0.0
    %4937 = vmatpush2.msra.mxu0 0.0
    %4938 = vmatprep.subr.mxu0 0.0
    %4939 = vmatpush2.msra.mxu0 0.0
    %4940 = vmatprep.subr.mxu0 0.0
    %4941 = vmatpush2.msra.mxu0 0.0
    %4942 = vmatprep.subr.mxu0 0.0
    %4943 = vmatpush2.msra.mxu0 0.0
    %4944 = vmatprep.subr.mxu0 0.0
    %4945 = vmatpush2.msra.mxu0 0.0
    %4946 = vmatprep.subr.mxu0 0.0
    %4947 = vmatpush2.msra.mxu0 0.0
    %4948 = vmatprep.subr.mxu0 0.0
    %4949 = vmatpush2.msra.mxu0 0.0
    %4950 = vmatprep.subr.mxu0 0.0
    %4951 = vmatpush2.msra.mxu0 0.0
    %4952 = vmatprep.subr.mxu0 0.0
    %4953 = vmatpush2.msra.mxu0 0.0
    %4954 = vmatprep.subr.mxu0 0.0
    %4955 = vmatpush2.msra.mxu0 0.0
    %4956 = vmatprep.mubr.f32.mxu0 0.0
    %4957 = vmatmul.mubr.f32.gmra.mxu0 %v4876
    %v4958 = vpop.f32.mrf.mxu0
    %v4959 = vadd.f32 %v4850, %v4958
    %v4960 = vpop.f32.mrf.mxu0
    %4961 = vmatprep.mubr.f32.mxu0 0.0
    %4962 = vmatmul.mubr.f32.gmra.mxu0 %v4878
    %v4963 = vpop.f32.mrf.mxu0
    %v4964 = vadd.f32 %v4850, %v4963
    %v4965 = vpop.f32.mrf.mxu0
    %4966 = vmatprep.mubr.f32.mxu0 0.0
    %4967 = vmatmul.mubr.f32.gmra.mxu0 %v4880
    %v4968 = vpop.f32.mrf.mxu0
    %v4969 = vadd.f32 %v4850, %v4968
    %v4970 = vpop.f32.mrf.mxu0
    %4971 = vmatprep.mubr.f32.mxu0 0.0
    %4972 = vmatmul.mubr.f32.gmra.mxu0 %v4882
    %v4973 = vpop.f32.mrf.mxu0
    %v4974 = vadd.f32 %v4850, %v4973
    %v4975 = vpop.f32.mrf.mxu0
    %4976 = vmatprep.mubr.f32.mxu0 0.0
    %4977 = vmatmul.mubr.f32.gmra.mxu0 %v4884
    %v4978 = vpop.f32.mrf.mxu0
    %v4979 = vadd.f32 %v4850, %v4978
    %v4980 = vpop.f32.mrf.mxu0
    %4981 = vmatprep.mubr.f32.mxu0 0.0
    %4982 = vmatmul.mubr.f32.gmra.mxu0 %v4886
    %v4983 = vpop.f32.mrf.mxu0
    %v4984 = vadd.f32 %v4850, %v4983
    %v4985 = vpop.f32.mrf.mxu0
    %4986 = vmatprep.mubr.f32.mxu0 0.0
    %4987 = vmatmul.mubr.f32.gmra.mxu0 %v4888
    %v4988 = vpop.f32.mrf.mxu0
    %v4989 = vadd.f32 %v4850, %v4988
    %v4990 = vpop.f32.mrf.mxu0
    %4991 = vmatprep.mubr.f32.mxu0 0.0
    %4992 = vmatmul.mubr.f32.gmra.mxu0 %v4890
    %v4993 = vpop.f32.mrf.mxu0
    %v4994 = vadd.f32 %v4850, %v4993
    %v4995 = vpop.f32.mrf.mxu0
    %4996 = vdwg.mxu0
    %4997 = vst.msk [vmem:[#allocation10] sm:$0xff] %vm144, %v4959
    %4998 = vst.msk [vmem:[#allocation10 + $0x8] sm:$0xff] %vm144, %v4964
    %4999 = vst.msk [vmem:[#allocation10 + $0x10] sm:$0xff] %vm144, %v4969
    %5000 = vst.msk [vmem:[#allocation10 + $0x18] sm:$0xff] %vm144, %v4974
    %5001 = vst.msk [vmem:[#allocation10 + $0x20] sm:$0xff] %vm144, %v4979
    %5002 = vst.msk [vmem:[#allocation10 + $0x28] sm:$0xff] %vm144, %v4984
    %5003 = vst.msk [vmem:[#allocation10 + $0x30] sm:$0xff] %vm144, %v4989
    %5004 = vst.msk [vmem:[#allocation10 + $0x38] sm:$0xff] %vm144, %v4994
    // Predicated region
    $region54: #{tpu_custom_call.1} parent=1 // pred_check
      _
    $region55: #{tpu_custom_call.1} parent=1 // pred_check_branch
      %5006 = sbr.rel (0) target = $region57
    $region56: #{tpu_custom_call.1} parent=1 // pred_region
      %s5008 = ssub.s32 1024, 1024
      %5009 = vsyncadd [#allocation4], %s5008
      %s5010 = sshll.u32 [#allocation10], 4
      %s5011 = int_to_ptr.vmem [resolvable:$true] %s5010
      %5016 = dma.vmem_to_hbm [thread:$0]  %s5011, 1024, %s9, [#allocation4], 128, 128, 8
    $region57: #{tpu_custom_call.1} parent=1 // pred_fallthru
      _
    // Predicated region
    $region58: #{tpu_custom_call.1} parent=1 // pred_check
      _
    $region59: #{tpu_custom_call.1} parent=1 // pred_check_branch
      %5018 = sbr.rel (0) target = $region61
    $region60: #{tpu_custom_call.1} parent=1 // pred_region
      %5019 = dma.done [#allocation4], 1024
    $region61: #{tpu_custom_call.1} parent=1 // pred_fallthru
      _
    %5020 = vsyncpa [#allocation3], 1
    %5021 = vsyncpa [#allocation6], 1
    %5022 = vsyncpa [#allocation9], 1
    %5023 = vsyncpa [#allocation4], 1

</llo_original>
